<compile_context>
chip_gen: v7x
topology: tpu7x:2x2x1
jax: 0.10.0
libtpu: 0.0.40
codegen_flags: <defaults>
</compile_context>

<pallas_src>
import functools

import jax
import jax.numpy as jnp
from jax.experimental import pallas as pl
from jax.experimental.pallas import tpu as pltpu


def _coattention_kernel(
    tf_ref,         # (TB, L, Dt)  text features, compute dtype
    af_ref,         # (TB, N, Di)  addi features, compute dtype
    src_mask_ref,   # (TB, L)      f32 0/1
    addi_mask_ref,  # (TB, N)      f32 0/1
    w_i2t_ref,      # (Di, Dt)   img2text_project.weight^T
    w_tp_ref,       # (Dt, Dt)   text_project.weight^T
    b_tp_ref,       # (1, Dt)    f32
    v_text_ref,     # (1, Dt) f32   [or (Dt, 1) cd when text_score_on_mxu]
    w_t2i_ref,      # (Dt, Di)   text2img_project.weight^T
    w_ip_ref,       # (Di, Di)   img_project.weight^T
    b_ip_ref,       # (1, Di)    f32
    v_img_ref,      # (1, Di) f32   [or (Di, 1) cd when addi_score_on_mxu]
    w_lin_a_ref,    # (Di, DtP)  linear.weight^T rows for addi_context (0-padded)
    w_lin_t_ref,    # (Dt, DtP)  linear.weight^T rows for text_context (0-padded)
    b_lin_ref,      # (1, DtP)   f32
    out_ref,        # (TB, DtP)  f32
    *,
    text_score_on_mxu: bool,
    addi_score_on_mxu: bool,
):
    TB, L, Dt = tf_ref.shape
    _, N, Di = af_ref.shape
    cd = tf_ref.dtype
    f32 = jnp.float32

    tf = tf_ref[...]                                    # (TB, L, Dt)
    af = af_ref[...]                                    # (TB, N, Di)
    sm = src_mask_ref[...]                              # (TB, L) f32
    am = addi_mask_ref[...]                             # (TB, N) f32

    # Additive masked-max biases computed in-kernel from the resident masks
    # (no dedicated HBM streams). In the bf16 path the add/max run in bf16.
    src_bias = ((sm - 1.0) * 1e30).astype(cd)[:, :, None]    # (TB, L, 1)
    addi_bias = ((am - 1.0) * 1e30).astype(cd)[:, :, None]   # (TB, N, 1)

    # ---- text_feat = masked_max(text_feats, src_mask, dim=1) -> (TB, Dt) ----
    text_feat = jnp.max(tf + src_bias, axis=1)                # cd, feeds MXU directly

    # ---- text_att_scores(text_feat, addi_feats) ------------------------------
    img_feature = jnp.dot(af.reshape(TB * N, Di), w_i2t_ref[...],
                          preferred_element_type=f32).reshape(TB, N, Dt)
    text_feature = (jnp.dot(text_feat, w_tp_ref[...],
                            preferred_element_type=f32) + b_tp_ref[...])      # (TB, Dt)
    e = jnp.tanh((img_feature + text_feature[:, None, :]).astype(cd))         # (TB, N, Dt)
    if text_score_on_mxu:
        # Production dims: fold v_text into an MXU dot.
        text_scores = jnp.dot(e.reshape(TB * N, Dt), v_text_ref[...],
                              preferred_element_type=f32).reshape(TB, N)
    else:
        # Lane-sparse demo dims: VPU multiply + lane reduce (promotes to f32).
        text_scores = jnp.sum(e * v_text_ref[...], axis=-1)                   # (TB, N)

    # softmax over N * addi_mask / renorm, folded into one normalisation (f32).
    ts_max = jnp.max(text_scores, axis=-1, keepdims=True)
    p = jnp.exp(text_scores - ts_max) * am
    text_att = p * pl.reciprocal(jnp.sum(p, axis=-1, keepdims=True), approx=True)

    # addi_context = sum_n text_att[:, n] * addi_feats[:, n, :]   (VPU, not MXU)
    addi_context = jnp.sum(text_att[:, :, None] * af, axis=1)                 # (TB, Di) f32

    # ---- addi_feat = masked_max(addi_feats, addi_mask, dim=1) -> (TB, Di) ----
    addi_feat = jnp.max(af + addi_bias, axis=1)                               # cd

    # ---- addi_att_scores(addi_feat, text_feats) ------------------------------
    text_feature2 = jnp.dot(tf.reshape(TB * L, Dt), w_t2i_ref[...],
                            preferred_element_type=f32).reshape(TB, L, Di)
    img_feature2 = (jnp.dot(addi_feat, w_ip_ref[...],
                            preferred_element_type=f32) + b_ip_ref[...])      # (TB, Di)
    e2 = jnp.tanh((text_feature2 + img_feature2[:, None, :]).astype(cd))      # (TB, L, Di)
    if addi_score_on_mxu:
        addi_scores = jnp.dot(e2.reshape(TB * L, Di), v_img_ref[...],
                              preferred_element_type=f32).reshape(TB, L)
    else:
        addi_scores = jnp.sum(e2 * v_img_ref[...], axis=-1)                   # (TB, L)

    as_max = jnp.max(addi_scores, axis=-1, keepdims=True)
    p2 = jnp.exp(addi_scores - as_max) * sm
    addi_att = p2 * pl.reciprocal(jnp.sum(p2, axis=-1, keepdims=True), approx=True)

    # text_context = sum_l addi_att[:, l] * text_feats[:, l, :]   (VPU, not MXU)
    text_context = jnp.sum(addi_att[:, :, None] * tf, axis=1)                 # (TB, Dt) f32

    # ---- combined = cat([addi_context, text_context]) @ W_lin^T + b  (DtP lanes)
    # .astype(cd) is a no-op in the f32 path; in the bf16 path it gives the MXU
    # bf16 inputs (accumulation stays f32).
    out = (jnp.dot(addi_context.astype(cd), w_lin_a_ref[...], preferred_element_type=f32)
           + jnp.dot(text_context.astype(cd), w_lin_t_ref[...], preferred_element_type=f32)
           + b_lin_ref[...])                                                  # (TB, DtP)
    out_ref[...] = out.astype(out_ref.dtype)


def _round_up(x, m):
    return (x + m - 1) // m * m


def coattention_forward(text_feats, addi_feats, src_mask, addi_mask, params,
                        *, tb=None, compute_dtype=jnp.float32,
                        mxu_score_dim_threshold=128):
    B, L, Dt = text_feats.shape
    _, N, Di = addi_feats.shape
    cd = jnp.dtype(compute_dtype)
    f32 = jnp.float32
    cd_bytes = cd.itemsize
    Dt_pad = _round_up(Dt, 128)           # lane-dense output slab (full-lane vst)

    # ---- batch tile selection -------------------------------------------------
    # Per-batch-row working set: double-buffered feature blocks + masks +
    # f32 e/e2 temporaries (+ headroom for the small per-row vectors).
    per_row = (2 * (L * Dt + N * Di) * cd_bytes
               + 2 * (L + N) * 4
               + (N * Dt + L * Di) * 4 * 3
               + (Dt_pad + Dt + Di) * 4 * 4)
    if tb is None:
        budget = 12 << 20                 # conservative per-step VMEM target
        tb = max(8, (budget // max(per_row, 1)) // 8 * 8)
    tb = max(8, min(_round_up(int(tb), 8), _round_up(B, 8)))
    # NOTE: on v5e/v6e (one TensorCore) prefer tb large enough for 1-2 grid steps;
    # on v7x prefer an even number of tiles so both cores get work ("parallel").
    n_tiles = pl.cdiv(B, tb)
    B_pad = n_tiles * tb

    tf = text_feats.astype(cd)
    af = addi_feats.astype(cd)
    sm = src_mask.astype(f32).reshape(B, L)
    am = addi_mask.astype(f32).reshape(B, N)
    if B_pad != B:
        pad = B_pad - B
        tf = jnp.pad(tf, ((0, pad), (0, 0), (0, 0)))
        af = jnp.pad(af, ((0, pad), (0, 0), (0, 0)))
        # padded rows keep mask=1 so their (discarded) softmax stays finite
        sm = jnp.pad(sm, ((0, pad), (0, 0)), constant_values=1.0)
        am = jnp.pad(am, ((0, pad), (0, 0)), constant_values=1.0)

    # Score reductions hit the MXU only at production-size Dt/Di.
    text_score_on_mxu = Dt >= mxu_score_dim_threshold
    addi_score_on_mxu = Di >= mxu_score_dim_threshold
    v_text = (params["v_text"].reshape(Dt, 1).astype(cd) if text_score_on_mxu
              else params["v_text"].reshape(1, Dt).astype(f32))
    v_img = (params["v_img"].reshape(Di, 1).astype(cd) if addi_score_on_mxu
             else params["v_img"].reshape(1, Di).astype(f32))

    pad_out = Dt_pad - Dt
    weights = [
        params["w_i2t_t"].astype(cd),                       # (Di, Dt)
        params["w_tp_t"].astype(cd),                        # (Dt, Dt)
        params["b_tp"].reshape(1, Dt).astype(f32),          # (1, Dt)
        v_text,
        params["w_t2i_t"].astype(cd),                       # (Dt, Di)
        params["w_ip_t"].astype(cd),                        # (Di, Di)
        params["b_ip"].reshape(1, Di).astype(f32),          # (1, Di)
        v_img,
        jnp.pad(params["w_lin_t_full"][:Di], ((0, 0), (0, pad_out))).astype(cd),   # (Di, DtP)
        jnp.pad(params["w_lin_t_full"][Di:], ((0, 0), (0, pad_out))).astype(cd),   # (Dt, DtP)
        jnp.pad(params["b_lin"], ((0, pad_out),)).reshape(1, Dt_pad).astype(f32),  # (1, DtP)
    ]
    weight_bytes = sum(int(w.size) * w.dtype.itemsize for w in weights)

    kernel = functools.partial(_coattention_kernel,
                               text_score_on_mxu=text_score_on_mxu,
                               addi_score_on_mxu=addi_score_on_mxu)

    data_specs = [
        pl.BlockSpec((tb, L, Dt), lambda b: (b, 0, 0)),
        pl.BlockSpec((tb, N, Di), lambda b: (b, 0, 0)),
        pl.BlockSpec((tb, L), lambda b: (b, 0)),
        pl.BlockSpec((tb, N), lambda b: (b, 0)),
    ]

    def run(single_buffer_weights):
        if single_buffer_weights:
            # Grid-invariant weights: single-buffer them (index_map is constant),
            # halving their VMEM footprint vs default double-buffering.
            w_specs = [pl.BlockSpec(w.shape, lambda b: (0, 0),
                                    pipeline_mode=pl.Buffered(1)) for w in weights]
            w_bufs = 1
        else:
            w_specs = [pl.BlockSpec(w.shape, lambda b: (0, 0)) for w in weights]
            w_bufs = 2
        vmem_est = per_row * tb + weight_bytes * w_bufs + 2 * tb * Dt_pad * 4
        # Explicit limit (v5e scoped default is only 16 MiB); capped under v7x's
        # 64 MiB physical per-core VMEM.
        vmem_limit = int(min(64 << 20, max(32 << 20, 2 * vmem_est)))
        return pl.pallas_call(
            kernel,
            out_shape=jax.ShapeDtypeStruct((B_pad, Dt_pad), f32),
            grid=(n_tiles,),
            in_specs=data_specs + w_specs,
            out_specs=pl.BlockSpec((tb, Dt_pad), lambda b: (b, 0)),
            compiler_params=pltpu.CompilerParams(
                dimension_semantics=("parallel",),
                vmem_limit_bytes=vmem_limit),
        )(tf, af, sm, am, *weights)

    try:
        out = run(True)
    except Exception:
        # TODO(synk): pl.Buffered(1) on grid-invariant weight BlockSpecs not accepted
        # by this jax/Mosaic version; falling back to default double-buffering.
        out = run(False)
    return out[:B, :Dt]


def coattention_reference(text_feats, addi_feats, src_mask, addi_mask, params):
    """Pure-JAX mirror of the PyTorch forward (input_type='text_img')."""
    sm = src_mask.astype(jnp.float32)
    am = addi_mask.astype(jnp.float32)
    Di = addi_feats.shape[-1]

    neg_inf = -jnp.inf
    text_feat = jnp.max(jnp.where(sm[:, :, None] == 0.0, neg_inf, text_feats), axis=1)

    img_feature = addi_feats @ params["w_i2t_t"]
    text_feature = text_feat @ params["w_tp_t"] + params["b_tp"]
    e = jnp.tanh(img_feature + text_feature[:, None, :])
    text_scores = jnp.sum(e * params["v_text"][None, None, :], axis=-1)
    text_att = jax.nn.softmax(text_scores, axis=1) * am
    text_att = text_att / jnp.sum(text_att, axis=1, keepdims=True)
    addi_context = jnp.einsum("bn,bnd->bd", text_att, addi_feats)

    addi_feat = jnp.max(jnp.where(am[:, :, None] == 0.0, neg_inf, addi_feats), axis=1)
    text_feature2 = text_feats @ params["w_t2i_t"]
    img_feature2 = addi_feat @ params["w_ip_t"] + params["b_ip"]
    e2 = jnp.tanh(text_feature2 + img_feature2[:, None, :])
    addi_scores = jnp.sum(e2 * params["v_img"][None, None, :], axis=-1)
    addi_att = jax.nn.softmax(addi_scores, axis=1) * sm
    addi_att = addi_att / jnp.sum(addi_att, axis=1, keepdims=True)
    text_context = jnp.einsum("bl,bld->bd", addi_att, text_feats)

    combined = jnp.concatenate([addi_context, text_context], axis=1)
    return combined @ params["w_lin_t_full"] + params["b_lin"]


def make_params(key, Dt, Di):
    ks = jax.random.split(key, 11)
    s = 0.1
    return {
        "v_text": s * jax.random.normal(ks[0], (Dt,), jnp.float32),
        "v_img": s * jax.random.normal(ks[1], (Di,), jnp.float32),
        "w_t2i_t": s * jax.random.normal(ks[2], (Dt, Di), jnp.float32),   # text2img_project
        "w_i2t_t": s * jax.random.normal(ks[3], (Di, Dt), jnp.float32),   # img2text_project
        "w_ip_t": s * jax.random.normal(ks[4], (Di, Di), jnp.float32),    # img_project
        "b_ip": s * jax.random.normal(ks[5], (Di,), jnp.float32),
        "w_tp_t": s * jax.random.normal(ks[6], (Dt, Dt), jnp.float32),    # text_project
        "b_tp": s * jax.random.normal(ks[7], (Dt,), jnp.float32),
        "w_lin_t_full": s * jax.random.normal(ks[8], (Dt + Di, Dt), jnp.float32),  # linear
        "b_lin": s * jax.random.normal(ks[9], (Dt,), jnp.float32),
    }


if __name__ == "__main__":
    B, L, N, Dt, Di = 16, 8, 8, 32, 16
    key = jax.random.PRNGKey(0)
    k_text, k_addi, k_params = jax.random.split(key, 3)

    text_feats = jax.random.normal(k_text, (B, L, Dt), jnp.float32)
    addi_feats = jax.random.normal(k_addi, (B, N, Di), jnp.float32)

    # deterministic 0/1 masks with at least one valid position per row
    src_lens = (jnp.arange(B) % L) + 1
    addi_lens = ((jnp.arange(B) * 3) % N) + 1
    src_mask = (jnp.arange(L)[None, :] < src_lens[:, None]).astype(jnp.float32)
    addi_mask = (jnp.arange(N)[None, :] < addi_lens[:, None]).astype(jnp.float32)

    params = make_params(k_params, Dt, Di)
    ref = coattention_reference(text_feats, addi_feats, src_mask, addi_mask, params)

    # f32 path (tb=8 -> 2 batch tiles: even count so both v7x TensorCores get work)
    out = coattention_forward(text_feats, addi_feats, src_mask, addi_mask, params, tb=8)
    out = jax.block_until_ready(out)
    assert out.shape == (B, Dt)
    assert jnp.allclose(out, ref, atol=5e-3, rtol=5e-3), (
        f"f32 max abs err {jnp.max(jnp.abs(out - ref))}")

    # bf16 feature/weight/elementwise path (f32 accumulation + f32 softmax math)
    out_bf16 = coattention_forward(text_feats, addi_feats, src_mask, addi_mask,
                                   params, tb=8, compute_dtype=jnp.bfloat16)
    out_bf16 = jax.block_until_ready(out_bf16)
    assert jnp.allclose(out_bf16, ref, atol=5e-2, rtol=5e-2), (
        f"bf16 max abs err {jnp.max(jnp.abs(out_bf16 - ref))}")

    print("KERNEL_OK")
</pallas_src>

<mosaic_0001>
module attributes {stable_mosaic.version = 11 : i64} {
  func.func @_coattention_kernel(%arg0: i32, %arg1: memref<8x8x32xf32, #tpu.memory_space<vmem>>, %arg2: memref<8x8x16xf32, #tpu.memory_space<vmem>>, %arg3: memref<8x8xf32, #tpu.memory_space<vmem>>, %arg4: memref<8x8xf32, #tpu.memory_space<vmem>>, %arg5: memref<16x32xf32, #tpu.memory_space<vmem>>, %arg6: memref<32x32xf32, #tpu.memory_space<vmem>>, %arg7: memref<1x32xf32, #tpu.memory_space<vmem>>, %arg8: memref<1x32xf32, #tpu.memory_space<vmem>>, %arg9: memref<32x16xf32, #tpu.memory_space<vmem>>, %arg10: memref<16x16xf32, #tpu.memory_space<vmem>>, %arg11: memref<1x16xf32, #tpu.memory_space<vmem>>, %arg12: memref<1x16xf32, #tpu.memory_space<vmem>>, %arg13: memref<16x128xf32, #tpu.memory_space<vmem>>, %arg14: memref<32x128xf32, #tpu.memory_space<vmem>>, %arg15: memref<1x128xf32, #tpu.memory_space<vmem>>, %arg16: memref<8x128xf32, #tpu.memory_space<vmem>>) attributes {dimension_semantics = [#tpu.dimension_semantics<parallel>], iteration_bounds = array<i64: 2>, scalar_prefetch = 0 : i64, scratch_operands = 0 : i64, tpu.core_type = #tpu.core_type<tc>, window_params = [{transform_indices = @transform_0, window_bounds = array<i64: 8, 8, 32>}, {transform_indices = @transform_1, window_bounds = array<i64: 8, 8, 16>}, {transform_indices = @transform_2, window_bounds = array<i64: 8, 8>}, {transform_indices = @transform_3, window_bounds = array<i64: 8, 8>}, {pipeline_mode = #tpu.pipeline_mode<synchronous>, transform_indices = @transform_4, window_bounds = array<i64: 16, 32>}, {pipeline_mode = #tpu.pipeline_mode<synchronous>, transform_indices = @transform_5, window_bounds = array<i64: 32, 32>}, {pipeline_mode = #tpu.pipeline_mode<synchronous>, transform_indices = @transform_6, window_bounds = array<i64: 1, 32>}, {pipeline_mode = #tpu.pipeline_mode<synchronous>, transform_indices = @transform_7, window_bounds = array<i64: 1, 32>}, {pipeline_mode = #tpu.pipeline_mode<synchronous>, transform_indices = @transform_8, window_bounds = array<i64: 32, 16>}, {pipeline_mode = #tpu.pipeline_mode<synchronous>, transform_indices = @transform_9, window_bounds = array<i64: 16, 16>}, {pipeline_mode = #tpu.pipeline_mode<synchronous>, transform_indices = @transform_10, window_bounds = array<i64: 1, 16>}, {pipeline_mode = #tpu.pipeline_mode<synchronous>, transform_indices = @transform_11, window_bounds = array<i64: 1, 16>}, {pipeline_mode = #tpu.pipeline_mode<synchronous>, transform_indices = @transform_12, window_bounds = array<i64: 16, 128>}, {pipeline_mode = #tpu.pipeline_mode<synchronous>, transform_indices = @transform_13, window_bounds = array<i64: 32, 128>}, {pipeline_mode = #tpu.pipeline_mode<synchronous>, transform_indices = @transform_14, window_bounds = array<i64: 1, 128>}, {transform_indices = @transform_15, window_bounds = array<i64: 8, 128>}]} {
    %c0 = arith.constant 0 : index
    %c0_0 = arith.constant 0 : index
    %c0_1 = arith.constant 0 : index
    %0 = vector.load %arg1[%c0, %c0_0, %c0_1] : memref<8x8x32xf32, #tpu.memory_space<vmem>>, vector<8x8x32xf32>
    %c0_2 = arith.constant 0 : index
    %c0_3 = arith.constant 0 : index
    %c0_4 = arith.constant 0 : index
    %1 = vector.load %arg2[%c0_2, %c0_3, %c0_4] : memref<8x8x16xf32, #tpu.memory_space<vmem>>, vector<8x8x16xf32>
    %c0_5 = arith.constant 0 : index
    %c0_6 = arith.constant 0 : index
    %2 = vector.load %arg3[%c0_5, %c0_6] : memref<8x8xf32, #tpu.memory_space<vmem>>, vector<8x8xf32>
    %c0_7 = arith.constant 0 : index
    %c0_8 = arith.constant 0 : index
    %3 = vector.load %arg4[%c0_7, %c0_8] : memref<8x8xf32, #tpu.memory_space<vmem>>, vector<8x8xf32>
    %cst = arith.constant 1.000000e+00 : f32
    %4 = vector.broadcast %cst : f32 to vector<8x8xf32>
    %5 = arith.subf %2, %4 : vector<8x8xf32>
    %cst_9 = arith.constant 1.000000e+30 : f32
    %6 = vector.broadcast %cst_9 : f32 to vector<8x8xf32>
    %7 = arith.mulf %5, %6 : vector<8x8xf32>
    %8 = vector.shape_cast %7 : vector<8x8xf32> to vector<8x8x1xf32>
    %cst_10 = arith.constant 1.000000e+00 : f32
    %9 = vector.broadcast %cst_10 : f32 to vector<8x8xf32>
    %10 = arith.subf %3, %9 : vector<8x8xf32>
    %cst_11 = arith.constant 1.000000e+30 : f32
    %11 = vector.broadcast %cst_11 : f32 to vector<8x8xf32>
    %12 = arith.mulf %10, %11 : vector<8x8xf32>
    %13 = vector.shape_cast %12 : vector<8x8xf32> to vector<8x8x1xf32>
    %14 = vector.broadcast %8 : vector<8x8x1xf32> to vector<8x8x32xf32>
    %15 = arith.addf %0, %14 : vector<8x8x32xf32>
    %cst_12 = arith.constant dense<0xFF800000> : vector<8x32xf32>
    %16 = vector.multi_reduction <maximumf>, %15, %cst_12 [1] : vector<8x8x32xf32> to vector<8x32xf32>
    %17 = vector.shape_cast %1 : vector<8x8x16xf32> to vector<64x16xf32>
    %c0_13 = arith.constant 0 : index
    %c0_14 = arith.constant 0 : index
    %18 = vector.load %arg5[%c0_13, %c0_14] : memref<16x32xf32, #tpu.memory_space<vmem>>, vector<16x32xf32>
    %cst_15 = arith.constant dense<0.000000e+00> : vector<64x32xf32>
    %19 = tpu.matmul %17, %18, %cst_15 {dimension_numbers = #tpu.dot_dimension_numbers<[1], [0], [0], [1], [0, 0, 1, 1], [], []>} : vector<64x16xf32>, vector<16x32xf32>, vector<64x32xf32> -> vector<64x32xf32>
    %20 = vector.shape_cast %19 : vector<64x32xf32> to vector<8x8x32xf32>
    %c0_16 = arith.constant 0 : index
    %c0_17 = arith.constant 0 : index
    %21 = vector.load %arg6[%c0_16, %c0_17] : memref<32x32xf32, #tpu.memory_space<vmem>>, vector<32x32xf32>
    %cst_18 = arith.constant dense<0.000000e+00> : vector<8x32xf32>
    %22 = tpu.matmul %16, %21, %cst_18 {dimension_numbers = #tpu.dot_dimension_numbers<[1], [0], [0], [1], [0, 0, 1, 1], [], []>} : vector<8x32xf32>, vector<32x32xf32>, vector<8x32xf32> -> vector<8x32xf32>
    %c0_19 = arith.constant 0 : index
    %c0_20 = arith.constant 0 : index
    %23 = vector.load %arg7[%c0_19, %c0_20] : memref<1x32xf32, #tpu.memory_space<vmem>>, vector<1x32xf32>
    %24 = vector.broadcast %23 : vector<1x32xf32> to vector<8x32xf32>
    %25 = arith.addf %22, %24 : vector<8x32xf32>
    %26 = vector.shape_cast %25 : vector<8x32xf32> to vector<8x1x32xf32>
    %27 = vector.broadcast %26 : vector<8x1x32xf32> to vector<8x8x32xf32>
    %28 = arith.addf %20, %27 : vector<8x8x32xf32>
    %29 = math.tanh %28 : vector<8x8x32xf32>
    %c0_21 = arith.constant 0 : index
    %c0_22 = arith.constant 0 : index
    %30 = vector.load %arg8[%c0_21, %c0_22] : memref<1x32xf32, #tpu.memory_space<vmem>>, vector<1x32xf32>
    %31 = vector.shape_cast %30 : vector<1x32xf32> to vector<1x1x32xf32>
    %32 = vector.broadcast %31 : vector<1x1x32xf32> to vector<8x8x32xf32>
    %33 = arith.mulf %29, %32 : vector<8x8x32xf32>
    %cst_23 = arith.constant dense<0.000000e+00> : vector<8x8xf32>
    %34 = vector.multi_reduction <add>, %33, %cst_23 [2] : vector<8x8x32xf32> to vector<8x8xf32>
    %cst_24 = arith.constant dense<0xFF800000> : vector<8xf32>
    %35 = vector.multi_reduction <maximumf>, %34, %cst_24 [1] : vector<8x8xf32> to vector<8xf32>
    %36 = vector.shape_cast %35 : vector<8xf32> to vector<8x1xf32>
    %37 = vector.broadcast %36 : vector<8x1xf32> to vector<8x8xf32>
    %38 = arith.subf %34, %37 : vector<8x8xf32>
    %39 = math.exp %38 : vector<8x8xf32>
    %40 = arith.mulf %39, %3 : vector<8x8xf32>
    %cst_25 = arith.constant dense<0.000000e+00> : vector<8xf32>
    %41 = vector.multi_reduction <add>, %40, %cst_25 [1] : vector<8x8xf32> to vector<8xf32>
    %42 = vector.shape_cast %41 : vector<8xf32> to vector<8x1xf32>
    %43 = tpu.reciprocal %42 {approx = true} : vector<8x1xf32> -> vector<8x1xf32>
    %44 = vector.broadcast %43 : vector<8x1xf32> to vector<8x8xf32>
    %45 = arith.mulf %40, %44 : vector<8x8xf32>
    %46 = vector.shape_cast %45 : vector<8x8xf32> to vector<8x8x1xf32>
    %47 = vector.broadcast %46 : vector<8x8x1xf32> to vector<8x8x16xf32>
    %48 = arith.mulf %47, %1 : vector<8x8x16xf32>
    %cst_26 = arith.constant dense<0.000000e+00> : vector<8x16xf32>
    %49 = vector.multi_reduction <add>, %48, %cst_26 [1] : vector<8x8x16xf32> to vector<8x16xf32>
    %50 = vector.broadcast %13 : vector<8x8x1xf32> to vector<8x8x16xf32>
    %51 = arith.addf %1, %50 : vector<8x8x16xf32>
    %cst_27 = arith.constant dense<0xFF800000> : vector<8x16xf32>
    %52 = vector.multi_reduction <maximumf>, %51, %cst_27 [1] : vector<8x8x16xf32> to vector<8x16xf32>
    %53 = vector.shape_cast %0 : vector<8x8x32xf32> to vector<64x32xf32>
    %c0_28 = arith.constant 0 : index
    %c0_29 = arith.constant 0 : index
    %54 = vector.load %arg9[%c0_28, %c0_29] : memref<32x16xf32, #tpu.memory_space<vmem>>, vector<32x16xf32>
    %cst_30 = arith.constant dense<0.000000e+00> : vector<64x16xf32>
    %55 = tpu.matmul %53, %54, %cst_30 {dimension_numbers = #tpu.dot_dimension_numbers<[1], [0], [0], [1], [0, 0, 1, 1], [], []>} : vector<64x32xf32>, vector<32x16xf32>, vector<64x16xf32> -> vector<64x16xf32>
    %56 = vector.shape_cast %55 : vector<64x16xf32> to vector<8x8x16xf32>
    %c0_31 = arith.constant 0 : index
    %c0_32 = arith.constant 0 : index
    %57 = vector.load %arg10[%c0_31, %c0_32] : memref<16x16xf32, #tpu.memory_space<vmem>>, vector<16x16xf32>
    %cst_33 = arith.constant dense<0.000000e+00> : vector<8x16xf32>
    %58 = tpu.matmul %52, %57, %cst_33 {dimension_numbers = #tpu.dot_dimension_numbers<[1], [0], [0], [1], [0, 0, 1, 1], [], []>} : vector<8x16xf32>, vector<16x16xf32>, vector<8x16xf32> -> vector<8x16xf32>
    %c0_34 = arith.constant 0 : index
    %c0_35 = arith.constant 0 : index
    %59 = vector.load %arg11[%c0_34, %c0_35] : memref<1x16xf32, #tpu.memory_space<vmem>>, vector<1x16xf32>
    %60 = vector.broadcast %59 : vector<1x16xf32> to vector<8x16xf32>
    %61 = arith.addf %58, %60 : vector<8x16xf32>
    %62 = vector.shape_cast %61 : vector<8x16xf32> to vector<8x1x16xf32>
    %63 = vector.broadcast %62 : vector<8x1x16xf32> to vector<8x8x16xf32>
    %64 = arith.addf %56, %63 : vector<8x8x16xf32>
    %65 = math.tanh %64 : vector<8x8x16xf32>
    %c0_36 = arith.constant 0 : index
    %c0_37 = arith.constant 0 : index
    %66 = vector.load %arg12[%c0_36, %c0_37] : memref<1x16xf32, #tpu.memory_space<vmem>>, vector<1x16xf32>
    %67 = vector.shape_cast %66 : vector<1x16xf32> to vector<1x1x16xf32>
    %68 = vector.broadcast %67 : vector<1x1x16xf32> to vector<8x8x16xf32>
    %69 = arith.mulf %65, %68 : vector<8x8x16xf32>
    %cst_38 = arith.constant dense<0.000000e+00> : vector<8x8xf32>
    %70 = vector.multi_reduction <add>, %69, %cst_38 [2] : vector<8x8x16xf32> to vector<8x8xf32>
    %cst_39 = arith.constant dense<0xFF800000> : vector<8xf32>
    %71 = vector.multi_reduction <maximumf>, %70, %cst_39 [1] : vector<8x8xf32> to vector<8xf32>
    %72 = vector.shape_cast %71 : vector<8xf32> to vector<8x1xf32>
    %73 = vector.broadcast %72 : vector<8x1xf32> to vector<8x8xf32>
    %74 = arith.subf %70, %73 : vector<8x8xf32>
    %75 = math.exp %74 : vector<8x8xf32>
    %76 = arith.mulf %75, %2 : vector<8x8xf32>
    %cst_40 = arith.constant dense<0.000000e+00> : vector<8xf32>
    %77 = vector.multi_reduction <add>, %76, %cst_40 [1] : vector<8x8xf32> to vector<8xf32>
    %78 = vector.shape_cast %77 : vector<8xf32> to vector<8x1xf32>
    %79 = tpu.reciprocal %78 {approx = true} : vector<8x1xf32> -> vector<8x1xf32>
    %80 = vector.broadcast %79 : vector<8x1xf32> to vector<8x8xf32>
    %81 = arith.mulf %76, %80 : vector<8x8xf32>
    %82 = vector.shape_cast %81 : vector<8x8xf32> to vector<8x8x1xf32>
    %83 = vector.broadcast %82 : vector<8x8x1xf32> to vector<8x8x32xf32>
    %84 = arith.mulf %83, %0 : vector<8x8x32xf32>
    %cst_41 = arith.constant dense<0.000000e+00> : vector<8x32xf32>
    %85 = vector.multi_reduction <add>, %84, %cst_41 [1] : vector<8x8x32xf32> to vector<8x32xf32>
    %c0_42 = arith.constant 0 : index
    %c0_43 = arith.constant 0 : index
    %86 = vector.load %arg13[%c0_42, %c0_43] : memref<16x128xf32, #tpu.memory_space<vmem>>, vector<16x128xf32>
    %cst_44 = arith.constant dense<0.000000e+00> : vector<8x128xf32>
    %87 = tpu.matmul %49, %86, %cst_44 {dimension_numbers = #tpu.dot_dimension_numbers<[1], [0], [0], [1], [0, 0, 1, 1], [], []>} : vector<8x16xf32>, vector<16x128xf32>, vector<8x128xf32> -> vector<8x128xf32>
    %c0_45 = arith.constant 0 : index
    %c0_46 = arith.constant 0 : index
    %88 = vector.load %arg14[%c0_45, %c0_46] : memref<32x128xf32, #tpu.memory_space<vmem>>, vector<32x128xf32>
    %cst_47 = arith.constant dense<0.000000e+00> : vector<8x128xf32>
    %89 = tpu.matmul %85, %88, %cst_47 {dimension_numbers = #tpu.dot_dimension_numbers<[1], [0], [0], [1], [0, 0, 1, 1], [], []>} : vector<8x32xf32>, vector<32x128xf32>, vector<8x128xf32> -> vector<8x128xf32>
    %90 = arith.addf %87, %89 : vector<8x128xf32>
    %c0_48 = arith.constant 0 : index
    %c0_49 = arith.constant 0 : index
    %91 = vector.load %arg15[%c0_48, %c0_49] : memref<1x128xf32, #tpu.memory_space<vmem>>, vector<1x128xf32>
    %92 = vector.broadcast %91 : vector<1x128xf32> to vector<8x128xf32>
    %93 = arith.addf %90, %92 : vector<8x128xf32>
    %c0_50 = arith.constant 0 : index
    %c0_51 = arith.constant 0 : index
    %94 = vector.load %arg16[%c0_50, %c0_51] : memref<8x128xf32, #tpu.memory_space<vmem>>, vector<8x128xf32>
    tpu.vector_store %arg16[%c0_50, %c0_51], %93 {strides = array<i32>} : memref<8x128xf32, #tpu.memory_space<vmem>>, vector<8x128xf32>,
    return
  }
  func.func @transform_0(%arg0: i32) -> (i32, i32, i32) {
    %c0_i32 = arith.constant 0 : i32
    %c0_i32_0 = arith.constant 0 : i32
    %c0_i32_1 = arith.constant 0 : i32
    return %arg0, %c0_i32, %c0_i32_0 : i32, i32, i32
  }
  func.func @transform_1(%arg0: i32) -> (i32, i32, i32) {
    %c0_i32 = arith.constant 0 : i32
    %c0_i32_0 = arith.constant 0 : i32
    %c0_i32_1 = arith.constant 0 : i32
    return %arg0, %c0_i32, %c0_i32_0 : i32, i32, i32
  }
  func.func @transform_2(%arg0: i32) -> (i32, i32) {
    %c0_i32 = arith.constant 0 : i32
    %c0_i32_0 = arith.constant 0 : i32
    return %arg0, %c0_i32 : i32, i32
  }
  func.func @transform_3(%arg0: i32) -> (i32, i32) {
    %c0_i32 = arith.constant 0 : i32
    %c0_i32_0 = arith.constant 0 : i32
    return %arg0, %c0_i32 : i32, i32
  }
  func.func @transform_4(%arg0: i32) -> (i32, i32) {
    %c0_i32 = arith.constant 0 : i32
    %c0_i32_0 = arith.constant 0 : i32
    %c0_i32_1 = arith.constant 0 : i32
    return %c0_i32, %c0_i32_0 : i32, i32
  }
  func.func @transform_5(%arg0: i32) -> (i32, i32) {
    %c0_i32 = arith.constant 0 : i32
    %c0_i32_0 = arith.constant 0 : i32
    %c0_i32_1 = arith.constant 0 : i32
    return %c0_i32, %c0_i32_0 : i32, i32
  }
  func.func @transform_6(%arg0: i32) -> (i32, i32) {
    %c0_i32 = arith.constant 0 : i32
    %c0_i32_0 = arith.constant 0 : i32
    %c0_i32_1 = arith.constant 0 : i32
    return %c0_i32, %c0_i32_0 : i32, i32
  }
  func.func @transform_7(%arg0: i32) -> (i32, i32) {
    %c0_i32 = arith.constant 0 : i32
    %c0_i32_0 = arith.constant 0 : i32
    %c0_i32_1 = arith.constant 0 : i32
    return %c0_i32, %c0_i32_0 : i32, i32
  }
  func.func @transform_8(%arg0: i32) -> (i32, i32) {
    %c0_i32 = arith.constant 0 : i32
    %c0_i32_0 = arith.constant 0 : i32
    %c0_i32_1 = arith.constant 0 : i32
    return %c0_i32, %c0_i32_0 : i32, i32
  }
  func.func @transform_9(%arg0: i32) -> (i32, i32) {
    %c0_i32 = arith.constant 0 : i32
    %c0_i32_0 = arith.constant 0 : i32
    %c0_i32_1 = arith.constant 0 : i32
    return %c0_i32, %c0_i32_0 : i32, i32
  }
  func.func @transform_10(%arg0: i32) -> (i32, i32) {
    %c0_i32 = arith.constant 0 : i32
    %c0_i32_0 = arith.constant 0 : i32
    %c0_i32_1 = arith.constant 0 : i32
    return %c0_i32, %c0_i32_0 : i32, i32
  }
  func.func @transform_11(%arg0: i32) -> (i32, i32) {
    %c0_i32 = arith.constant 0 : i32
    %c0_i32_0 = arith.constant 0 : i32
    %c0_i32_1 = arith.constant 0 : i32
    return %c0_i32, %c0_i32_0 : i32, i32
  }
  func.func @transform_12(%arg0: i32) -> (i32, i32) {
    %c0_i32 = arith.constant 0 : i32
    %c0_i32_0 = arith.constant 0 : i32
    %c0_i32_1 = arith.constant 0 : i32
    return %c0_i32, %c0_i32_0 : i32, i32
  }
  func.func @transform_13(%arg0: i32) -> (i32, i32) {
    %c0_i32 = arith.constant 0 : i32
    %c0_i32_0 = arith.constant 0 : i32
    %c0_i32_1 = arith.constant 0 : i32
    return %c0_i32, %c0_i32_0 : i32, i32
  }
  func.func @transform_14(%arg0: i32) -> (i32, i32) {
    %c0_i32 = arith.constant 0 : i32
    %c0_i32_0 = arith.constant 0 : i32
    %c0_i32_1 = arith.constant 0 : i32
    return %c0_i32, %c0_i32_0 : i32, i32
  }
  func.func @transform_15(%arg0: i32) -> (i32, i32) {
    %c0_i32 = arith.constant 0 : i32
    %c0_i32_0 = arith.constant 0 : i32
    return %arg0, %c0_i32 : i32, i32
  }
}

module attributes {stable_mosaic.version = 11 : i64} {
  func.func @_coattention_kernel(%arg0: i32, %arg1: memref<8x8x32xf32, #tpu.memory_space<vmem>>, %arg2: memref<8x8x16xf32, #tpu.memory_space<vmem>>, %arg3: memref<8x8xf32, #tpu.memory_space<vmem>>, %arg4: memref<8x8xf32, #tpu.memory_space<vmem>>, %arg5: memref<16x32xf32, #tpu.memory_space<vmem>>, %arg6: memref<32x32xf32, #tpu.memory_space<vmem>>, %arg7: memref<1x32xf32, #tpu.memory_space<vmem>>, %arg8: memref<1x32xf32, #tpu.memory_space<vmem>>, %arg9: memref<32x16xf32, #tpu.memory_space<vmem>>, %arg10: memref<16x16xf32, #tpu.memory_space<vmem>>, %arg11: memref<1x16xf32, #tpu.memory_space<vmem>>, %arg12: memref<1x16xf32, #tpu.memory_space<vmem>>, %arg13: memref<16x128xf32, #tpu.memory_space<vmem>>, %arg14: memref<32x128xf32, #tpu.memory_space<vmem>>, %arg15: memref<1x128xf32, #tpu.memory_space<vmem>>, %arg16: memref<8x128xf32, #tpu.memory_space<vmem>>) attributes {dimension_semantics = [#tpu.dimension_semantics<parallel>], iteration_bounds = array<i64: 2>, scalar_prefetch = 0 : i64, scratch_operands = 0 : i64, tpu.core_type = #tpu.core_type<tc>, window_params = [{transform_indices = @transform_0, window_bounds = array<i64: 8, 8, 32>}, {transform_indices = @transform_1, window_bounds = array<i64: 8, 8, 16>}, {transform_indices = @transform_2, window_bounds = array<i64: 8, 8>}, {transform_indices = @transform_3, window_bounds = array<i64: 8, 8>}, {pipeline_mode = #tpu.pipeline_mode<synchronous>, transform_indices = @transform_4, window_bounds = array<i64: 16, 32>}, {pipeline_mode = #tpu.pipeline_mode<synchronous>, transform_indices = @transform_5, window_bounds = array<i64: 32, 32>}, {pipeline_mode = #tpu.pipeline_mode<synchronous>, transform_indices = @transform_6, window_bounds = array<i64: 1, 32>}, {pipeline_mode = #tpu.pipeline_mode<synchronous>, transform_indices = @transform_7, window_bounds = array<i64: 1, 32>}, {pipeline_mode = #tpu.pipeline_mode<synchronous>, transform_indices = @transform_8, window_bounds = array<i64: 32, 16>}, {pipeline_mode = #tpu.pipeline_mode<synchronous>, transform_indices = @transform_9, window_bounds = array<i64: 16, 16>}, {pipeline_mode = #tpu.pipeline_mode<synchronous>, transform_indices = @transform_10, window_bounds = array<i64: 1, 16>}, {pipeline_mode = #tpu.pipeline_mode<synchronous>, transform_indices = @transform_11, window_bounds = array<i64: 1, 16>}, {pipeline_mode = #tpu.pipeline_mode<synchronous>, transform_indices = @transform_12, window_bounds = array<i64: 16, 128>}, {pipeline_mode = #tpu.pipeline_mode<synchronous>, transform_indices = @transform_13, window_bounds = array<i64: 32, 128>}, {pipeline_mode = #tpu.pipeline_mode<synchronous>, transform_indices = @transform_14, window_bounds = array<i64: 1, 128>}, {transform_indices = @transform_15, window_bounds = array<i64: 8, 128>}]} {
    %c0 = arith.constant 0 : index
    %c0_0 = arith.constant 0 : index
    %c0_1 = arith.constant 0 : index
    %0 = vector.load %arg1[%c0, %c0_0, %c0_1] : memref<8x8x32xf32, #tpu.memory_space<vmem>>, vector<8x8x32xf32>
    %c0_2 = arith.constant 0 : index
    %c0_3 = arith.constant 0 : index
    %c0_4 = arith.constant 0 : index
    %1 = vector.load %arg2[%c0_2, %c0_3, %c0_4] : memref<8x8x16xf32, #tpu.memory_space<vmem>>, vector<8x8x16xf32>
    %c0_5 = arith.constant 0 : index
    %c0_6 = arith.constant 0 : index
    %2 = vector.load %arg3[%c0_5, %c0_6] : memref<8x8xf32, #tpu.memory_space<vmem>>, vector<8x8xf32>
    %c0_7 = arith.constant 0 : index
    %c0_8 = arith.constant 0 : index
    %3 = vector.load %arg4[%c0_7, %c0_8] : memref<8x8xf32, #tpu.memory_space<vmem>>, vector<8x8xf32>
    %cst = arith.constant 1.000000e+00 : f32
    %4 = vector.broadcast %cst : f32 to vector<8x8xf32>
    %5 = arith.subf %2, %4 : vector<8x8xf32>
    %cst_9 = arith.constant 1.000000e+30 : f32
    %6 = vector.broadcast %cst_9 : f32 to vector<8x8xf32>
    %7 = arith.mulf %5, %6 : vector<8x8xf32>
    %8 = vector.shape_cast %7 : vector<8x8xf32> to vector<8x8x1xf32>
    %cst_10 = arith.constant 1.000000e+00 : f32
    %9 = vector.broadcast %cst_10 : f32 to vector<8x8xf32>
    %10 = arith.subf %3, %9 : vector<8x8xf32>
    %cst_11 = arith.constant 1.000000e+30 : f32
    %11 = vector.broadcast %cst_11 : f32 to vector<8x8xf32>
    %12 = arith.mulf %10, %11 : vector<8x8xf32>
    %13 = vector.shape_cast %12 : vector<8x8xf32> to vector<8x8x1xf32>
    %14 = vector.broadcast %8 : vector<8x8x1xf32> to vector<8x8x32xf32>
    %15 = arith.addf %0, %14 : vector<8x8x32xf32>
    %cst_12 = arith.constant dense<0xFF800000> : vector<8x32xf32>
    %16 = vector.multi_reduction <maximumf>, %15, %cst_12 [1] : vector<8x8x32xf32> to vector<8x32xf32>
    %17 = vector.shape_cast %1 : vector<8x8x16xf32> to vector<64x16xf32>
    %c0_13 = arith.constant 0 : index
    %c0_14 = arith.constant 0 : index
    %18 = vector.load %arg5[%c0_13, %c0_14] : memref<16x32xf32, #tpu.memory_space<vmem>>, vector<16x32xf32>
    %cst_15 = arith.constant dense<0.000000e+00> : vector<64x32xf32>
    %19 = tpu.matmul %17, %18, %cst_15 {dimension_numbers = #tpu.dot_dimension_numbers<[1], [0], [0], [1], [0, 0, 1, 1], [], []>} : vector<64x16xf32>, vector<16x32xf32>, vector<64x32xf32> -> vector<64x32xf32>
    %20 = vector.shape_cast %19 : vector<64x32xf32> to vector<8x8x32xf32>
    %c0_16 = arith.constant 0 : index
    %c0_17 = arith.constant 0 : index
    %21 = vector.load %arg6[%c0_16, %c0_17] : memref<32x32xf32, #tpu.memory_space<vmem>>, vector<32x32xf32>
    %cst_18 = arith.constant dense<0.000000e+00> : vector<8x32xf32>
    %22 = tpu.matmul %16, %21, %cst_18 {dimension_numbers = #tpu.dot_dimension_numbers<[1], [0], [0], [1], [0, 0, 1, 1], [], []>} : vector<8x32xf32>, vector<32x32xf32>, vector<8x32xf32> -> vector<8x32xf32>
    %c0_19 = arith.constant 0 : index
    %c0_20 = arith.constant 0 : index
    %23 = vector.load %arg7[%c0_19, %c0_20] : memref<1x32xf32, #tpu.memory_space<vmem>>, vector<1x32xf32>
    %24 = vector.broadcast %23 : vector<1x32xf32> to vector<8x32xf32>
    %25 = arith.addf %22, %24 : vector<8x32xf32>
    %26 = vector.shape_cast %25 : vector<8x32xf32> to vector<8x1x32xf32>
    %27 = vector.broadcast %26 : vector<8x1x32xf32> to vector<8x8x32xf32>
    %28 = arith.addf %20, %27 : vector<8x8x32xf32>
    %29 = math.tanh %28 : vector<8x8x32xf32>
    %c0_21 = arith.constant 0 : index
    %c0_22 = arith.constant 0 : index
    %30 = vector.load %arg8[%c0_21, %c0_22] : memref<1x32xf32, #tpu.memory_space<vmem>>, vector<1x32xf32>
    %31 = vector.shape_cast %30 : vector<1x32xf32> to vector<1x1x32xf32>
    %32 = vector.broadcast %31 : vector<1x1x32xf32> to vector<8x8x32xf32>
    %33 = arith.mulf %29, %32 : vector<8x8x32xf32>
    %cst_23 = arith.constant dense<0.000000e+00> : vector<8x8xf32>
    %34 = vector.multi_reduction <add>, %33, %cst_23 [2] : vector<8x8x32xf32> to vector<8x8xf32>
    %cst_24 = arith.constant dense<0xFF800000> : vector<8xf32>
    %35 = vector.multi_reduction <maximumf>, %34, %cst_24 [1] : vector<8x8xf32> to vector<8xf32>
    %36 = vector.shape_cast %35 : vector<8xf32> to vector<8x1xf32>
    %37 = vector.broadcast %36 : vector<8x1xf32> to vector<8x8xf32>
    %38 = arith.subf %34, %37 : vector<8x8xf32>
    %39 = math.exp %38 : vector<8x8xf32>
    %40 = arith.mulf %39, %3 : vector<8x8xf32>
    %cst_25 = arith.constant dense<0.000000e+00> : vector<8xf32>
    %41 = vector.multi_reduction <add>, %40, %cst_25 [1] : vector<8x8xf32> to vector<8xf32>
    %42 = vector.shape_cast %41 : vector<8xf32> to vector<8x1xf32>
    %43 = tpu.reciprocal %42 {approx = true} : vector<8x1xf32> -> vector<8x1xf32>
    %44 = vector.broadcast %43 : vector<8x1xf32> to vector<8x8xf32>
    %45 = arith.mulf %40, %44 : vector<8x8xf32>
    %46 = vector.shape_cast %45 : vector<8x8xf32> to vector<8x8x1xf32>
    %47 = vector.broadcast %46 : vector<8x8x1xf32> to vector<8x8x16xf32>
    %48 = arith.mulf %47, %1 : vector<8x8x16xf32>
    %cst_26 = arith.constant dense<0.000000e+00> : vector<8x16xf32>
    %49 = vector.multi_reduction <add>, %48, %cst_26 [1] : vector<8x8x16xf32> to vector<8x16xf32>
    %50 = vector.broadcast %13 : vector<8x8x1xf32> to vector<8x8x16xf32>
    %51 = arith.addf %1, %50 : vector<8x8x16xf32>
    %cst_27 = arith.constant dense<0xFF800000> : vector<8x16xf32>
    %52 = vector.multi_reduction <maximumf>, %51, %cst_27 [1] : vector<8x8x16xf32> to vector<8x16xf32>
    %53 = vector.shape_cast %0 : vector<8x8x32xf32> to vector<64x32xf32>
    %c0_28 = arith.constant 0 : index
    %c0_29 = arith.constant 0 : index
    %54 = vector.load %arg9[%c0_28, %c0_29] : memref<32x16xf32, #tpu.memory_space<vmem>>, vector<32x16xf32>
    %cst_30 = arith.constant dense<0.000000e+00> : vector<64x16xf32>
    %55 = tpu.matmul %53, %54, %cst_30 {dimension_numbers = #tpu.dot_dimension_numbers<[1], [0], [0], [1], [0, 0, 1, 1], [], []>} : vector<64x32xf32>, vector<32x16xf32>, vector<64x16xf32> -> vector<64x16xf32>
    %56 = vector.shape_cast %55 : vector<64x16xf32> to vector<8x8x16xf32>
    %c0_31 = arith.constant 0 : index
    %c0_32 = arith.constant 0 : index
    %57 = vector.load %arg10[%c0_31, %c0_32] : memref<16x16xf32, #tpu.memory_space<vmem>>, vector<16x16xf32>
    %cst_33 = arith.constant dense<0.000000e+00> : vector<8x16xf32>
    %58 = tpu.matmul %52, %57, %cst_33 {dimension_numbers = #tpu.dot_dimension_numbers<[1], [0], [0], [1], [0, 0, 1, 1], [], []>} : vector<8x16xf32>, vector<16x16xf32>, vector<8x16xf32> -> vector<8x16xf32>
    %c0_34 = arith.constant 0 : index
    %c0_35 = arith.constant 0 : index
    %59 = vector.load %arg11[%c0_34, %c0_35] : memref<1x16xf32, #tpu.memory_space<vmem>>, vector<1x16xf32>
    %60 = vector.broadcast %59 : vector<1x16xf32> to vector<8x16xf32>
    %61 = arith.addf %58, %60 : vector<8x16xf32>
    %62 = vector.shape_cast %61 : vector<8x16xf32> to vector<8x1x16xf32>
    %63 = vector.broadcast %62 : vector<8x1x16xf32> to vector<8x8x16xf32>
    %64 = arith.addf %56, %63 : vector<8x8x16xf32>
    %65 = math.tanh %64 : vector<8x8x16xf32>
    %c0_36 = arith.constant 0 : index
    %c0_37 = arith.constant 0 : index
    %66 = vector.load %arg12[%c0_36, %c0_37] : memref<1x16xf32, #tpu.memory_space<vmem>>, vector<1x16xf32>
    %67 = vector.shape_cast %66 : vector<1x16xf32> to vector<1x1x16xf32>
    %68 = vector.broadcast %67 : vector<1x1x16xf32> to vector<8x8x16xf32>
    %69 = arith.mulf %65, %68 : vector<8x8x16xf32>
    %cst_38 = arith.constant dense<0.000000e+00> : vector<8x8xf32>
    %70 = vector.multi_reduction <add>, %69, %cst_38 [2] : vector<8x8x16xf32> to vector<8x8xf32>
    %cst_39 = arith.constant dense<0xFF800000> : vector<8xf32>
    %71 = vector.multi_reduction <maximumf>, %70, %cst_39 [1] : vector<8x8xf32> to vector<8xf32>
    %72 = vector.shape_cast %71 : vector<8xf32> to vector<8x1xf32>
    %73 = vector.broadcast %72 : vector<8x1xf32> to vector<8x8xf32>
    %74 = arith.subf %70, %73 : vector<8x8xf32>
    %75 = math.exp %74 : vector<8x8xf32>
    %76 = arith.mulf %75, %2 : vector<8x8xf32>
    %cst_40 = arith.constant dense<0.000000e+00> : vector<8xf32>
    %77 = vector.multi_reduction <add>, %76, %cst_40 [1] : vector<8x8xf32> to vector<8xf32>
    %78 = vector.shape_cast %77 : vector<8xf32> to vector<8x1xf32>
    %79 = tpu.reciprocal %78 {approx = true} : vector<8x1xf32> -> vector<8x1xf32>
    %80 = vector.broadcast %79 : vector<8x1xf32> to vector<8x8xf32>
    %81 = arith.mulf %76, %80 : vector<8x8xf32>
    %82 = vector.shape_cast %81 : vector<8x8xf32> to vector<8x8x1xf32>
    %83 = vector.broadcast %82 : vector<8x8x1xf32> to vector<8x8x32xf32>
    %84 = arith.mulf %83, %0 : vector<8x8x32xf32>
    %cst_41 = arith.constant dense<0.000000e+00> : vector<8x32xf32>
    %85 = vector.multi_reduction <add>, %84, %cst_41 [1] : vector<8x8x32xf32> to vector<8x32xf32>
    %c0_42 = arith.constant 0 : index
    %c0_43 = arith.constant 0 : index
    %86 = vector.load %arg13[%c0_42, %c0_43] : memref<16x128xf32, #tpu.memory_space<vmem>>, vector<16x128xf32>
    %cst_44 = arith.constant dense<0.000000e+00> : vector<8x128xf32>
    %87 = tpu.matmul %49, %86, %cst_44 {dimension_numbers = #tpu.dot_dimension_numbers<[1], [0], [0], [1], [0, 0, 1, 1], [], []>} : vector<8x16xf32>, vector<16x128xf32>, vector<8x128xf32> -> vector<8x128xf32>
    %c0_45 = arith.constant 0 : index
    %c0_46 = arith.constant 0 : index
    %88 = vector.load %arg14[%c0_45, %c0_46] : memref<32x128xf32, #tpu.memory_space<vmem>>, vector<32x128xf32>
    %cst_47 = arith.constant dense<0.000000e+00> : vector<8x128xf32>
    %89 = tpu.matmul %85, %88, %cst_47 {dimension_numbers = #tpu.dot_dimension_numbers<[1], [0], [0], [1], [0, 0, 1, 1], [], []>} : vector<8x32xf32>, vector<32x128xf32>, vector<8x128xf32> -> vector<8x128xf32>
    %90 = arith.addf %87, %89 : vector<8x128xf32>
    %c0_48 = arith.constant 0 : index
    %c0_49 = arith.constant 0 : index
    %91 = vector.load %arg15[%c0_48, %c0_49] : memref<1x128xf32, #tpu.memory_space<vmem>>, vector<1x128xf32>
    %92 = vector.broadcast %91 : vector<1x128xf32> to vector<8x128xf32>
    %93 = arith.addf %90, %92 : vector<8x128xf32>
    %c0_50 = arith.constant 0 : index
    %c0_51 = arith.constant 0 : index
    %94 = vector.load %arg16[%c0_50, %c0_51] : memref<8x128xf32, #tpu.memory_space<vmem>>, vector<8x128xf32>
    tpu.vector_store %arg16[%c0_50, %c0_51], %93 {strides = array<i32>} : memref<8x128xf32, #tpu.memory_space<vmem>>, vector<8x128xf32>,
    return
  }
  func.func @transform_0(%arg0: i32) -> (i32, i32, i32) {
    %c0_i32 = arith.constant 0 : i32
    %c0_i32_0 = arith.constant 0 : i32
    %c0_i32_1 = arith.constant 0 : i32
    return %arg0, %c0_i32, %c0_i32_0 : i32, i32, i32
  }
  func.func @transform_1(%arg0: i32) -> (i32, i32, i32) {
    %c0_i32 = arith.constant 0 : i32
    %c0_i32_0 = arith.constant 0 : i32
    %c0_i32_1 = arith.constant 0 : i32
    return %arg0, %c0_i32, %c0_i32_0 : i32, i32, i32
  }
  func.func @transform_2(%arg0: i32) -> (i32, i32) {
    %c0_i32 = arith.constant 0 : i32
    %c0_i32_0 = arith.constant 0 : i32
    return %arg0, %c0_i32 : i32, i32
  }
  func.func @transform_3(%arg0: i32) -> (i32, i32) {
    %c0_i32 = arith.constant 0 : i32
    %c0_i32_0 = arith.constant 0 : i32
    return %arg0, %c0_i32 : i32, i32
  }
  func.func @transform_4(%arg0: i32) -> (i32, i32) {
    %c0_i32 = arith.constant 0 : i32
    %c0_i32_0 = arith.constant 0 : i32
    %c0_i32_1 = arith.constant 0 : i32
    return %c0_i32, %c0_i32_0 : i32, i32
  }
  func.func @transform_5(%arg0: i32) -> (i32, i32) {
    %c0_i32 = arith.constant 0 : i32
    %c0_i32_0 = arith.constant 0 : i32
    %c0_i32_1 = arith.constant 0 : i32
    return %c0_i32, %c0_i32_0 : i32, i32
  }
  func.func @transform_6(%arg0: i32) -> (i32, i32) {
    %c0_i32 = arith.constant 0 : i32
    %c0_i32_0 = arith.constant 0 : i32
    %c0_i32_1 = arith.constant 0 : i32
    return %c0_i32, %c0_i32_0 : i32, i32
  }
  func.func @transform_7(%arg0: i32) -> (i32, i32) {
    %c0_i32 = arith.constant 0 : i32
    %c0_i32_0 = arith.constant 0 : i32
    %c0_i32_1 = arith.constant 0 : i32
    return %c0_i32, %c0_i32_0 : i32, i32
  }
  func.func @transform_8(%arg0: i32) -> (i32, i32) {
    %c0_i32 = arith.constant 0 : i32
    %c0_i32_0 = arith.constant 0 : i32
    %c0_i32_1 = arith.constant 0 : i32
    return %c0_i32, %c0_i32_0 : i32, i32
  }
  func.func @transform_9(%arg0: i32) -> (i32, i32) {
    %c0_i32 = arith.constant 0 : i32
    %c0_i32_0 = arith.constant 0 : i32
    %c0_i32_1 = arith.constant 0 : i32
    return %c0_i32, %c0_i32_0 : i32, i32
  }
  func.func @transform_10(%arg0: i32) -> (i32, i32) {
    %c0_i32 = arith.constant 0 : i32
    %c0_i32_0 = arith.constant 0 : i32
    %c0_i32_1 = arith.constant 0 : i32
    return %c0_i32, %c0_i32_0 : i32, i32
  }
  func.func @transform_11(%arg0: i32) -> (i32, i32) {
    %c0_i32 = arith.constant 0 : i32
    %c0_i32_0 = arith.constant 0 : i32
    %c0_i32_1 = arith.constant 0 : i32
    return %c0_i32, %c0_i32_0 : i32, i32
  }
  func.func @transform_12(%arg0: i32) -> (i32, i32) {
    %c0_i32 = arith.constant 0 : i32
    %c0_i32_0 = arith.constant 0 : i32
    %c0_i32_1 = arith.constant 0 : i32
    return %c0_i32, %c0_i32_0 : i32, i32
  }
  func.func @transform_13(%arg0: i32) -> (i32, i32) {
    %c0_i32 = arith.constant 0 : i32
    %c0_i32_0 = arith.constant 0 : i32
    %c0_i32_1 = arith.constant 0 : i32
    return %c0_i32, %c0_i32_0 : i32, i32
  }
  func.func @transform_14(%arg0: i32) -> (i32, i32) {
    %c0_i32 = arith.constant 0 : i32
    %c0_i32_0 = arith.constant 0 : i32
    %c0_i32_1 = arith.constant 0 : i32
    return %c0_i32, %c0_i32_0 : i32, i32
  }
  func.func @transform_15(%arg0: i32) -> (i32, i32) {
    %c0_i32 = arith.constant 0 : i32
    %c0_i32_0 = arith.constant 0 : i32
    return %arg0, %c0_i32 : i32, i32
  }
}

</mosaic_0001>

<llo_original>
// kernel: tpu_custom_call.1
$region0: #{tpu_custom_call.1}
  #allocation0 [shape = 'u32[]', space=smem, size = 0x4, offset = 0x4, fixed_abs, tag = 'smem constant byte address 0x4 - core index']
  #allocation1 [shape = 'u32[144,128]{1,0:T(1,128)}', space=vmem, size = 0x12000, scoped, tag = 'internal scratch']
  %s0 = inlined_call_operand.hbm [shape: f32[16,8,32], index: 0, kind: input, shape index: {}]
  %s1 = inlined_call_operand.hbm [shape: f32[16,8,16], index: 1, kind: input, shape index: {}]
  %s2 = inlined_call_operand.vmem [shape: f32[16,8], index: 2, kind: input, shape index: {}]
  %s3 = inlined_call_operand.vmem [shape: f32[16,8], index: 3, kind: input, shape index: {}]
  %s4 = inlined_call_operand.vmem [shape: f32[16,32], index: 4, kind: input, shape index: {}]
  %s5 = inlined_call_operand.vmem [shape: f32[32,32], index: 5, kind: input, shape index: {}]
  %s6 = inlined_call_operand.vmem [shape: f32[1,32], index: 6, kind: input, shape index: {}]
  %s7 = inlined_call_operand.vmem [shape: f32[1,32], index: 7, kind: input, shape index: {}]
  %s8 = inlined_call_operand.vmem [shape: f32[32,16], index: 8, kind: input, shape index: {}]
  %s9 = inlined_call_operand.vmem [shape: f32[16,16], index: 9, kind: input, shape index: {}]
  %s10 = inlined_call_operand.vmem [shape: f32[1,16], index: 10, kind: input, shape index: {}]
  %s11 = inlined_call_operand.vmem [shape: f32[1,16], index: 11, kind: input, shape index: {}]
  %s12 = inlined_call_operand.vmem [shape: f32[16,128], index: 12, kind: input, shape index: {}]
  %s13 = inlined_call_operand.vmem [shape: f32[32,128], index: 13, kind: input, shape index: {}]
  %s14 = inlined_call_operand.vmem [shape: f32[1,128], index: 14, kind: input, shape index: {}]
  %s15 = inlined_call_operand.hbm [shape: f32[16,128], index: 15, kind: output, shape index: {}]
  %s16 = sld [smem:[#allocation0]]
  $region101: #{tpu_custom_call.1} parent=0
    _
  %s18 = ssub.s32 1, %s16
  %s19 = scalar_select 0, %s18, %s16
  $region1: #{tpu_custom_call.1} parent=0
    #allocation2 [shape = 'u8[65536]{0}', space=vmem, size = 0x10000, scoped, tag = 'input window, operand 0']
    #allocation3 [shape = 's32[2]{0}', space=sflag, size = 0x8, scoped, tag = 'scoped memory for tpu_custom_call.1']
    #allocation4 [shape = 's32[2]{0}', space=sflag, size = 0x8, scoped, tag = 'scoped memory for tpu_custom_call.1']
    #allocation5 [shape = 'u8[65536]{0}', space=vmem, size = 0x10000, scoped, tag = 'input window, operand 1']
    #allocation6 [shape = 's32[2]{0}', space=sflag, size = 0x8, scoped, tag = 'scoped memory for tpu_custom_call.1']
    #allocation7 [shape = 'u8[8192]{0}', space=vmem, size = 0x2000, scoped, tag = 'output window, operand 0']
    %20 = vsyncpa [#allocation3], 0
    %s21 = scalar_lea.sflag [#allocation3], 1
    %22 = vsyncpa %s21, 0
    %23 = vsyncpa [#allocation6], 0
    %s24 = scalar_lea.sflag [#allocation6], 1
    %25 = vsyncpa %s24, 0
    %26 = vsyncpa [#allocation4], 0
    %s27 = scalar_lea.sflag [#allocation4], 1
    %28 = vsyncpa %s27, 0
    loop: start=0, step=1, limit=4
    $region2: #{tpu_custom_call.1} parent=1 // loop_pre_header
      _
    $region3: #{tpu_custom_call.1} parent=1 // loop_header
      %s30 = sphi 0, %s34
      %p31 = scmp.ge.s32.totalorder %s30, 4
      %s40 = sphi 0, %s42
      %s43 = sphi 0, %s40
      %s44 = sphi 0, %s43
      %s60 = sphi 0, %s44
      %s66 = sphi 0, %s68
      %s69 = sphi 0, %s66
      %s70 = sphi 0, %s69
      %s86 = sphi 0, %s70
      %s92 = sphi 0, %s94
      %s95 = sphi 0, %s92
      %s96 = sphi 0, %s95
      %s112 = sphi 0, %s96
      %s118 = sphi 0, %s120
      %s121 = sphi 0, %s118
      %s122 = sphi 0, %s121
      %s138 = sphi 0, %s122
      %s142 = sphi 0, %s142
      %s144 = sphi 0, %s142
      %s145 = sphi 0, %s144
      %s159 = sphi 0, %s145
      %s163 = sphi 0, %s163
      %s165 = sphi 0, %s163
      %s166 = sphi 0, %s165
      %s180 = sphi 0, %s166
      %s184 = sphi 0, %s184
      %s186 = sphi 0, %s184
      %s187 = sphi 0, %s186
      %s201 = sphi 0, %s187
      %s205 = sphi 0, %s205
      %s207 = sphi 0, %s205
      %s208 = sphi 0, %s207
      %s222 = sphi 0, %s208
      %s226 = sphi 0, %s226
      %s228 = sphi 0, %s226
      %s229 = sphi 0, %s228
      %s243 = sphi 0, %s229
      %s247 = sphi 0, %s247
      %s249 = sphi 0, %s247
      %s250 = sphi 0, %s249
      %s264 = sphi 0, %s250
      %s268 = sphi 0, %s268
      %s270 = sphi 0, %s268
      %s271 = sphi 0, %s270
      %s285 = sphi 0, %s271
      %s289 = sphi 0, %s289
      %s291 = sphi 0, %s289
      %s292 = sphi 0, %s291
      %s306 = sphi 0, %s292
      %s310 = sphi 0, %s310
      %s312 = sphi 0, %s310
      %s313 = sphi 0, %s312
      %s327 = sphi 0, %s313
      %s331 = sphi 0, %s331
      %s333 = sphi 0, %s331
      %s334 = sphi 0, %s333
      %s348 = sphi 0, %s334
      %s352 = sphi 0, %s352
      %s354 = sphi 0, %s352
      %s355 = sphi 0, %s354
      %s369 = sphi 0, %s355
      %s375 = sphi 0, %s377
      %s378 = sphi 0, %s375
      %s379 = sphi 0, %s378
      %s395 = sphi 0, %s379
    $region4: #{tpu_custom_call.1} parent=1 // loop_header_branch
      %33 = sbr.rel (%p31) target = $region8
    $region5: #{tpu_custom_call.1} parent=1 // loop_body
      %s35 = ssub.s32 %s30, 1
      %s36 = ssub.s32 %s30, 2
      %s37 = sadd.s32 %s30, 1
      %s38 = ssub.s32 %s30, %s37
      %p39 = scmp.eq.s32.totalorder %s38, 0
      %s41 = sadd.s32 %s40, 1
      %s42 = scalar_select %p39, %s40, %s41
      %p45 = pneg %p39
      %p46 = scmp.eq.s32.totalorder %s30, 1
      %p47 = por %p45, %p46
      %p48 = scmp.ne.s32.totalorder %s40, %s43
      %p49 = scmp.eq.s32.totalorder %s30, 0
      %p50 = por %p48, %p49
      %p51 = scmp.ne.s32.totalorder %s40, %s43
      %p52 = scmp.eq.s32.totalorder %s35, 1
      %p53 = por %p51, %p52
      %p54 = scmp.ne.s32.totalorder %s43, %s44
      %p55 = scmp.eq.s32.totalorder %s35, 0
      %p56 = por %p54, %p55
      %p57 = scmp.ne.s32.totalorder %s43, %s44
      %p58 = scmp.eq.s32.totalorder %s36, 1
      %p59 = por %p57, %p58
      %p61 = scmp.ne.s32.totalorder %s44, %s60
      %p62 = scmp.eq.s32.totalorder %s36, 0
      %p63 = por %p61, %p62
      %s64 = ssub.s32 %s30, %s37
      %p65 = scmp.eq.s32.totalorder %s64, 0
      %s67 = sadd.s32 %s66, 1
      %s68 = scalar_select %p65, %s66, %s67
      %p71 = pneg %p65
      %p72 = scmp.eq.s32.totalorder %s30, 1
      %p73 = por %p71, %p72
      %p74 = scmp.ne.s32.totalorder %s66, %s69
      %p75 = scmp.eq.s32.totalorder %s30, 0
      %p76 = por %p74, %p75
      %p77 = scmp.ne.s32.totalorder %s66, %s69
      %p78 = scmp.eq.s32.totalorder %s35, 1
      %p79 = por %p77, %p78
      %p80 = scmp.ne.s32.totalorder %s69, %s70
      %p81 = scmp.eq.s32.totalorder %s35, 0
      %p82 = por %p80, %p81
      %p83 = scmp.ne.s32.totalorder %s69, %s70
      %p84 = scmp.eq.s32.totalorder %s36, 1
      %p85 = por %p83, %p84
      %p87 = scmp.ne.s32.totalorder %s70, %s86
      %p88 = scmp.eq.s32.totalorder %s36, 0
      %p89 = por %p87, %p88
      %s90 = ssub.s32 %s30, %s37
      %p91 = scmp.eq.s32.totalorder %s90, 0
      %s93 = sadd.s32 %s92, 1
      %s94 = scalar_select %p91, %s92, %s93
      %p97 = pneg %p91
      %p98 = scmp.eq.s32.totalorder %s30, 1
      %p99 = por %p97, %p98
      %p100 = scmp.ne.s32.totalorder %s92, %s95
      %p101 = scmp.eq.s32.totalorder %s30, 0
      %p102 = por %p100, %p101
      %p103 = scmp.ne.s32.totalorder %s92, %s95
      %p104 = scmp.eq.s32.totalorder %s35, 1
      %p105 = por %p103, %p104
      %p106 = scmp.ne.s32.totalorder %s95, %s96
      %p107 = scmp.eq.s32.totalorder %s35, 0
      %p108 = por %p106, %p107
      %p109 = scmp.ne.s32.totalorder %s95, %s96
      %p110 = scmp.eq.s32.totalorder %s36, 1
      %p111 = por %p109, %p110
      %p113 = scmp.ne.s32.totalorder %s96, %s112
      %p114 = scmp.eq.s32.totalorder %s36, 0
      %p115 = por %p113, %p114
      %s116 = ssub.s32 %s30, %s37
      %p117 = scmp.eq.s32.totalorder %s116, 0
      %s119 = sadd.s32 %s118, 1
      %s120 = scalar_select %p117, %s118, %s119
      %p123 = pneg %p117
      %p124 = scmp.eq.s32.totalorder %s30, 1
      %p125 = por %p123, %p124
      %p126 = scmp.ne.s32.totalorder %s118, %s121
      %p127 = scmp.eq.s32.totalorder %s30, 0
      %p128 = por %p126, %p127
      %p129 = scmp.ne.s32.totalorder %s118, %s121
      %p130 = scmp.eq.s32.totalorder %s35, 1
      %p131 = por %p129, %p130
      %p132 = scmp.ne.s32.totalorder %s121, %s122
      %p133 = scmp.eq.s32.totalorder %s35, 0
      %p134 = por %p132, %p133
      %p135 = scmp.ne.s32.totalorder %s121, %s122
      %p136 = scmp.eq.s32.totalorder %s36, 1
      %p137 = por %p135, %p136
      %p139 = scmp.ne.s32.totalorder %s122, %s138
      %p140 = scmp.eq.s32.totalorder %s36, 0
      %p141 = por %p139, %p140
      %s143 = sadd.s32 %s142, 1
      %p146 = scmp.eq.s32.totalorder %s30, 1
      %p147 = scmp.ne.s32.totalorder %s142, %s144
      %p148 = scmp.eq.s32.totalorder %s30, 0
      %p149 = por %p147, %p148
      %p150 = scmp.ne.s32.totalorder %s142, %s144
      %p151 = scmp.eq.s32.totalorder %s35, 1
      %p152 = por %p150, %p151
      %p153 = scmp.ne.s32.totalorder %s144, %s145
      %p154 = scmp.eq.s32.totalorder %s35, 0
      %p155 = por %p153, %p154
      %p156 = scmp.ne.s32.totalorder %s144, %s145
      %p157 = scmp.eq.s32.totalorder %s36, 1
      %p158 = por %p156, %p157
      %p160 = scmp.ne.s32.totalorder %s145, %s159
      %p161 = scmp.eq.s32.totalorder %s36, 0
      %p162 = por %p160, %p161
      %s164 = sadd.s32 %s163, 1
      %p167 = scmp.eq.s32.totalorder %s30, 1
      %p168 = scmp.ne.s32.totalorder %s163, %s165
      %p169 = scmp.eq.s32.totalorder %s30, 0
      %p170 = por %p168, %p169
      %p171 = scmp.ne.s32.totalorder %s163, %s165
      %p172 = scmp.eq.s32.totalorder %s35, 1
      %p173 = por %p171, %p172
      %p174 = scmp.ne.s32.totalorder %s165, %s166
      %p175 = scmp.eq.s32.totalorder %s35, 0
      %p176 = por %p174, %p175
      %p177 = scmp.ne.s32.totalorder %s165, %s166
      %p178 = scmp.eq.s32.totalorder %s36, 1
      %p179 = por %p177, %p178
      %p181 = scmp.ne.s32.totalorder %s166, %s180
      %p182 = scmp.eq.s32.totalorder %s36, 0
      %p183 = por %p181, %p182
      %s185 = sadd.s32 %s184, 1
      %p188 = scmp.eq.s32.totalorder %s30, 1
      %p189 = scmp.ne.s32.totalorder %s184, %s186
      %p190 = scmp.eq.s32.totalorder %s30, 0
      %p191 = por %p189, %p190
      %p192 = scmp.ne.s32.totalorder %s184, %s186
      %p193 = scmp.eq.s32.totalorder %s35, 1
      %p194 = por %p192, %p193
      %p195 = scmp.ne.s32.totalorder %s186, %s187
      %p196 = scmp.eq.s32.totalorder %s35, 0
      %p197 = por %p195, %p196
      %p198 = scmp.ne.s32.totalorder %s186, %s187
      %p199 = scmp.eq.s32.totalorder %s36, 1
      %p200 = por %p198, %p199
      %p202 = scmp.ne.s32.totalorder %s187, %s201
      %p203 = scmp.eq.s32.totalorder %s36, 0
      %p204 = por %p202, %p203
      %s206 = sadd.s32 %s205, 1
      %p209 = scmp.eq.s32.totalorder %s30, 1
      %p210 = scmp.ne.s32.totalorder %s205, %s207
      %p211 = scmp.eq.s32.totalorder %s30, 0
      %p212 = por %p210, %p211
      %p213 = scmp.ne.s32.totalorder %s205, %s207
      %p214 = scmp.eq.s32.totalorder %s35, 1
      %p215 = por %p213, %p214
      %p216 = scmp.ne.s32.totalorder %s207, %s208
      %p217 = scmp.eq.s32.totalorder %s35, 0
      %p218 = por %p216, %p217
      %p219 = scmp.ne.s32.totalorder %s207, %s208
      %p220 = scmp.eq.s32.totalorder %s36, 1
      %p221 = por %p219, %p220
      %p223 = scmp.ne.s32.totalorder %s208, %s222
      %p224 = scmp.eq.s32.totalorder %s36, 0
      %p225 = por %p223, %p224
      %s227 = sadd.s32 %s226, 1
      %p230 = scmp.eq.s32.totalorder %s30, 1
      %p231 = scmp.ne.s32.totalorder %s226, %s228
      %p232 = scmp.eq.s32.totalorder %s30, 0
      %p233 = por %p231, %p232
      %p234 = scmp.ne.s32.totalorder %s226, %s228
      %p235 = scmp.eq.s32.totalorder %s35, 1
      %p236 = por %p234, %p235
      %p237 = scmp.ne.s32.totalorder %s228, %s229
      %p238 = scmp.eq.s32.totalorder %s35, 0
      %p239 = por %p237, %p238
      %p240 = scmp.ne.s32.totalorder %s228, %s229
      %p241 = scmp.eq.s32.totalorder %s36, 1
      %p242 = por %p240, %p241
      %p244 = scmp.ne.s32.totalorder %s229, %s243
      %p245 = scmp.eq.s32.totalorder %s36, 0
      %p246 = por %p244, %p245
      %s248 = sadd.s32 %s247, 1
      %p251 = scmp.eq.s32.totalorder %s30, 1
      %p252 = scmp.ne.s32.totalorder %s247, %s249
      %p253 = scmp.eq.s32.totalorder %s30, 0
      %p254 = por %p252, %p253
      %p255 = scmp.ne.s32.totalorder %s247, %s249
      %p256 = scmp.eq.s32.totalorder %s35, 1
      %p257 = por %p255, %p256
      %p258 = scmp.ne.s32.totalorder %s249, %s250
      %p259 = scmp.eq.s32.totalorder %s35, 0
      %p260 = por %p258, %p259
      %p261 = scmp.ne.s32.totalorder %s249, %s250
      %p262 = scmp.eq.s32.totalorder %s36, 1
      %p263 = por %p261, %p262
      %p265 = scmp.ne.s32.totalorder %s250, %s264
      %p266 = scmp.eq.s32.totalorder %s36, 0
      %p267 = por %p265, %p266
      %s269 = sadd.s32 %s268, 1
      %p272 = scmp.eq.s32.totalorder %s30, 1
      %p273 = scmp.ne.s32.totalorder %s268, %s270
      %p274 = scmp.eq.s32.totalorder %s30, 0
      %p275 = por %p273, %p274
      %p276 = scmp.ne.s32.totalorder %s268, %s270
      %p277 = scmp.eq.s32.totalorder %s35, 1
      %p278 = por %p276, %p277
      %p279 = scmp.ne.s32.totalorder %s270, %s271
      %p280 = scmp.eq.s32.totalorder %s35, 0
      %p281 = por %p279, %p280
      %p282 = scmp.ne.s32.totalorder %s270, %s271
      %p283 = scmp.eq.s32.totalorder %s36, 1
      %p284 = por %p282, %p283
      %p286 = scmp.ne.s32.totalorder %s271, %s285
      %p287 = scmp.eq.s32.totalorder %s36, 0
      %p288 = por %p286, %p287
      %s290 = sadd.s32 %s289, 1
      %p293 = scmp.eq.s32.totalorder %s30, 1
      %p294 = scmp.ne.s32.totalorder %s289, %s291
      %p295 = scmp.eq.s32.totalorder %s30, 0
      %p296 = por %p294, %p295
      %p297 = scmp.ne.s32.totalorder %s289, %s291
      %p298 = scmp.eq.s32.totalorder %s35, 1
      %p299 = por %p297, %p298
      %p300 = scmp.ne.s32.totalorder %s291, %s292
      %p301 = scmp.eq.s32.totalorder %s35, 0
      %p302 = por %p300, %p301
      %p303 = scmp.ne.s32.totalorder %s291, %s292
      %p304 = scmp.eq.s32.totalorder %s36, 1
      %p305 = por %p303, %p304
      %p307 = scmp.ne.s32.totalorder %s292, %s306
      %p308 = scmp.eq.s32.totalorder %s36, 0
      %p309 = por %p307, %p308
      %s311 = sadd.s32 %s310, 1
      %p314 = scmp.eq.s32.totalorder %s30, 1
      %p315 = scmp.ne.s32.totalorder %s310, %s312
      %p316 = scmp.eq.s32.totalorder %s30, 0
      %p317 = por %p315, %p316
      %p318 = scmp.ne.s32.totalorder %s310, %s312
      %p319 = scmp.eq.s32.totalorder %s35, 1
      %p320 = por %p318, %p319
      %p321 = scmp.ne.s32.totalorder %s312, %s313
      %p322 = scmp.eq.s32.totalorder %s35, 0
      %p323 = por %p321, %p322
      %p324 = scmp.ne.s32.totalorder %s312, %s313
      %p325 = scmp.eq.s32.totalorder %s36, 1
      %p326 = por %p324, %p325
      %p328 = scmp.ne.s32.totalorder %s313, %s327
      %p329 = scmp.eq.s32.totalorder %s36, 0
      %p330 = por %p328, %p329
      %s332 = sadd.s32 %s331, 1
      %p335 = scmp.eq.s32.totalorder %s30, 1
      %p336 = scmp.ne.s32.totalorder %s331, %s333
      %p337 = scmp.eq.s32.totalorder %s30, 0
      %p338 = por %p336, %p337
      %p339 = scmp.ne.s32.totalorder %s331, %s333
      %p340 = scmp.eq.s32.totalorder %s35, 1
      %p341 = por %p339, %p340
      %p342 = scmp.ne.s32.totalorder %s333, %s334
      %p343 = scmp.eq.s32.totalorder %s35, 0
      %p344 = por %p342, %p343
      %p345 = scmp.ne.s32.totalorder %s333, %s334
      %p346 = scmp.eq.s32.totalorder %s36, 1
      %p347 = por %p345, %p346
      %p349 = scmp.ne.s32.totalorder %s334, %s348
      %p350 = scmp.eq.s32.totalorder %s36, 0
      %p351 = por %p349, %p350
      %s353 = sadd.s32 %s352, 1
      %p356 = scmp.eq.s32.totalorder %s30, 1
      %p357 = scmp.ne.s32.totalorder %s352, %s354
      %p358 = scmp.eq.s32.totalorder %s30, 0
      %p359 = por %p357, %p358
      %p360 = scmp.ne.s32.totalorder %s352, %s354
      %p361 = scmp.eq.s32.totalorder %s35, 1
      %p362 = por %p360, %p361
      %p363 = scmp.ne.s32.totalorder %s354, %s355
      %p364 = scmp.eq.s32.totalorder %s35, 0
      %p365 = por %p363, %p364
      %p366 = scmp.ne.s32.totalorder %s354, %s355
      %p367 = scmp.eq.s32.totalorder %s36, 1
      %p368 = por %p366, %p367
      %p370 = scmp.ne.s32.totalorder %s355, %s369
      %p371 = scmp.eq.s32.totalorder %s36, 0
      %p372 = por %p370, %p371
      %s373 = ssub.s32 %s30, %s37
      %p374 = scmp.eq.s32.totalorder %s373, 0
      %s376 = sadd.s32 %s375, 1
      %s377 = scalar_select %p374, %s375, %s376
      %p380 = pneg %p374
      %p381 = scmp.eq.s32.totalorder %s30, 1
      %p382 = por %p380, %p381
      %p383 = scmp.ne.s32.totalorder %s375, %s378
      %p384 = scmp.eq.s32.totalorder %s30, 0
      %p385 = por %p383, %p384
      %p386 = scmp.ne.s32.totalorder %s375, %s378
      %p387 = scmp.eq.s32.totalorder %s35, 1
      %p388 = por %p386, %p387
      %p389 = scmp.ne.s32.totalorder %s378, %s379
      %p390 = scmp.eq.s32.totalorder %s35, 0
      %p391 = por %p389, %p390
      %p392 = scmp.ne.s32.totalorder %s378, %s379
      %p393 = scmp.eq.s32.totalorder %s36, 1
      %p394 = por %p392, %p393
      %p396 = scmp.ne.s32.totalorder %s379, %s395
      %p397 = scmp.eq.s32.totalorder %s36, 0
      %p398 = por %p396, %p397
      %p399 = scmp.le.s32.totalorder 1, %s30
      %p400 = scmp.lt.s32.totalorder %s30, 3
      %p401 = pnand %p399, %p400
      %p402 = pneg %p401
      // Predicated region
      $region9: #{tpu_custom_call.1} parent=5 // pred_check
        _
      $region10: #{tpu_custom_call.1} parent=5 // pred_check_branch
        %404 = sbr.rel (%p401) target = $region12
      $region11: #{tpu_custom_call.1} parent=5 // pred_region
        %s405 = ssub.s32 %s30, 1
        // Predicated region
        $region13: #{tpu_custom_call.1} parent=11 // pred_check
          %p406 = pneg %p155
        $region14: #{tpu_custom_call.1} parent=11 // pred_check_branch
          %408 = sbr.rel (%p406) target = $region16
        $region15: #{tpu_custom_call.1} parent=11 // pred_region
          _
        $region16: #{tpu_custom_call.1} parent=11 // pred_fallthru
          _
        // Predicated region
        $region17: #{tpu_custom_call.1} parent=11 // pred_check
          %p409 = pneg %p176
        $region18: #{tpu_custom_call.1} parent=11 // pred_check_branch
          %411 = sbr.rel (%p409) target = $region20
        $region19: #{tpu_custom_call.1} parent=11 // pred_region
          _
        $region20: #{tpu_custom_call.1} parent=11 // pred_fallthru
          _
        // Predicated region
        $region21: #{tpu_custom_call.1} parent=11 // pred_check
          %p412 = pneg %p197
        $region22: #{tpu_custom_call.1} parent=11 // pred_check_branch
          %414 = sbr.rel (%p412) target = $region24
        $region23: #{tpu_custom_call.1} parent=11 // pred_region
          _
        $region24: #{tpu_custom_call.1} parent=11 // pred_fallthru
          _
        // Predicated region
        $region25: #{tpu_custom_call.1} parent=11 // pred_check
          %p415 = pneg %p218
        $region26: #{tpu_custom_call.1} parent=11 // pred_check_branch
          %417 = sbr.rel (%p415) target = $region28
        $region27: #{tpu_custom_call.1} parent=11 // pred_region
          _
        $region28: #{tpu_custom_call.1} parent=11 // pred_fallthru
          _
        // Predicated region
        $region29: #{tpu_custom_call.1} parent=11 // pred_check
          %p418 = pneg %p239
        $region30: #{tpu_custom_call.1} parent=11 // pred_check_branch
          %420 = sbr.rel (%p418) target = $region32
        $region31: #{tpu_custom_call.1} parent=11 // pred_region
          _
        $region32: #{tpu_custom_call.1} parent=11 // pred_fallthru
          _
        // Predicated region
        $region33: #{tpu_custom_call.1} parent=11 // pred_check
          %p421 = pneg %p260
        $region34: #{tpu_custom_call.1} parent=11 // pred_check_branch
          %423 = sbr.rel (%p421) target = $region36
        $region35: #{tpu_custom_call.1} parent=11 // pred_region
          _
        $region36: #{tpu_custom_call.1} parent=11 // pred_fallthru
          _
        // Predicated region
        $region37: #{tpu_custom_call.1} parent=11 // pred_check
          %p424 = pneg %p281
        $region38: #{tpu_custom_call.1} parent=11 // pred_check_branch
          %426 = sbr.rel (%p424) target = $region40
        $region39: #{tpu_custom_call.1} parent=11 // pred_region
          _
        $region40: #{tpu_custom_call.1} parent=11 // pred_fallthru
          _
        // Predicated region
        $region41: #{tpu_custom_call.1} parent=11 // pred_check
          %p427 = pneg %p302
        $region42: #{tpu_custom_call.1} parent=11 // pred_check_branch
          %429 = sbr.rel (%p427) target = $region44
        $region43: #{tpu_custom_call.1} parent=11 // pred_region
          _
        $region44: #{tpu_custom_call.1} parent=11 // pred_fallthru
          _
        // Predicated region
        $region45: #{tpu_custom_call.1} parent=11 // pred_check
          %p430 = pneg %p323
        $region46: #{tpu_custom_call.1} parent=11 // pred_check_branch
          %432 = sbr.rel (%p430) target = $region48
        $region47: #{tpu_custom_call.1} parent=11 // pred_region
          _
        $region48: #{tpu_custom_call.1} parent=11 // pred_fallthru
          _
        // Predicated region
        $region49: #{tpu_custom_call.1} parent=11 // pred_check
          %p433 = pneg %p344
        $region50: #{tpu_custom_call.1} parent=11 // pred_check_branch
          %435 = sbr.rel (%p433) target = $region52
        $region51: #{tpu_custom_call.1} parent=11 // pred_region
          _
        $region52: #{tpu_custom_call.1} parent=11 // pred_fallthru
          _
        // Predicated region
        $region53: #{tpu_custom_call.1} parent=11 // pred_check
          %p436 = pneg %p365
        $region54: #{tpu_custom_call.1} parent=11 // pred_check_branch
          %438 = sbr.rel (%p436) target = $region56
        $region55: #{tpu_custom_call.1} parent=11 // pred_region
          _
        $region56: #{tpu_custom_call.1} parent=11 // pred_fallthru
          _
      $region12: #{tpu_custom_call.1} parent=5 // pred_fallthru
        _
      %p439 = scmp.lt.s32.totalorder %s30, 2
      // Predicated region
      $region57: #{tpu_custom_call.1} parent=5 // pred_check
        %p440 = pneg %p439
      $region58: #{tpu_custom_call.1} parent=5 // pred_check_branch
        %442 = sbr.rel (%p440) target = $region60
      $region59: #{tpu_custom_call.1} parent=5 // pred_region
        // Predicated region
        $region61: #{tpu_custom_call.1} parent=59 // pred_check
          %p443 = pneg %p50
        $region62: #{tpu_custom_call.1} parent=59 // pred_check_branch
          %445 = sbr.rel (%p443) target = $region64
        $region63: #{tpu_custom_call.1} parent=59 // pred_region
          %s446 = sand.u32 %s40, 1
          %s447 = scalar_lea.sflag [#allocation3], %s446
          %s448 = sand.u32 %s40, 1
          %s449 = smul.addr %s448, 64
          %s450 = scalar_lea.vmem [#allocation2], %s449
          %s451 = smul.u32 8, %s30
          %s453 = ssub.s32 1024, 1024
          %454 = vsyncadd %s447, %s453
          %s455 = smul.addr %s451, 128
          %s456 = scalar_lea.hbm %s0, %s455
          %s457 = sshll.u32 %s450, 4
          %s458 = int_to_ptr.vmem [resolvable:$true] %s457
          %463 = dma.hbm_to_vmem [thread:$0]  %s456, 1024, %s458, %s447, 128, 128, 8
        $region64: #{tpu_custom_call.1} parent=59 // pred_fallthru
          _
        // Predicated region
        $region65: #{tpu_custom_call.1} parent=59 // pred_check
          %p464 = pneg %p76
        $region66: #{tpu_custom_call.1} parent=59 // pred_check_branch
          %466 = sbr.rel (%p464) target = $region68
        $region67: #{tpu_custom_call.1} parent=59 // pred_region
          %s467 = sand.u32 %s66, 1
          %s468 = scalar_lea.sflag [#allocation6], %s467
          %s469 = sand.u32 %s66, 1
          %s470 = smul.addr %s469, 64
          %s471 = scalar_lea.vmem [#allocation5], %s470
          %s472 = smul.u32 8, %s30
          %s474 = ssub.s32 1024, 1024
          %475 = vsyncadd %s468, %s474
          %s476 = smul.addr %s472, 128
          %s477 = scalar_lea.hbm %s1, %s476
          %s478 = sshll.u32 %s471, 4
          %s479 = int_to_ptr.vmem [resolvable:$true] %s478
          %484 = dma.hbm_to_vmem [thread:$0]  %s477, 1024, %s479, %s468, 128, 128, 8
        $region68: #{tpu_custom_call.1} parent=59 // pred_fallthru
          _
        // Predicated region
        $region69: #{tpu_custom_call.1} parent=59 // pred_check
          %p485 = pneg %p102
        $region70: #{tpu_custom_call.1} parent=59 // pred_check_branch
          %487 = sbr.rel (%p485) target = $region72
        $region71: #{tpu_custom_call.1} parent=59 // pred_region
          %p488 = scmp.lt.s32.totalorder %s30, 1
          %s489 = scalar_select %p488, %s30, 1
          %s490 = smul.addr %s489, 8
          %s491 = scalar_lea.vmem %s2, %s490
        $region72: #{tpu_custom_call.1} parent=59 // pred_fallthru
          _
        // Predicated region
        $region73: #{tpu_custom_call.1} parent=59 // pred_check
          %p492 = pneg %p128
        $region74: #{tpu_custom_call.1} parent=59 // pred_check_branch
          %494 = sbr.rel (%p492) target = $region76
        $region75: #{tpu_custom_call.1} parent=59 // pred_region
          %p495 = scmp.lt.s32.totalorder %s30, 1
          %s496 = scalar_select %p495, %s30, 1
          %s497 = smul.addr %s496, 8
          %s498 = scalar_lea.vmem %s3, %s497
        $region76: #{tpu_custom_call.1} parent=59 // pred_fallthru
          _
      $region60: #{tpu_custom_call.1} parent=5 // pred_fallthru
        _
      %p499 = scmp.le.s32.totalorder 1, %s30
      %p500 = scmp.lt.s32.totalorder %s30, 3
      %p501 = pnand %p499, %p500
      %p502 = pneg %p501
      // Predicated region
      $region77: #{tpu_custom_call.1} parent=5 // pred_check
        _
      $region78: #{tpu_custom_call.1} parent=5 // pred_check_branch
        %504 = sbr.rel (%p501) target = $region80
      $region79: #{tpu_custom_call.1} parent=5 // pred_region
        %s505 = ssub.s32 %s30, 1
        %s506 = sand.u32 %s43, 1
        %s507 = scalar_lea.sflag [#allocation3], %s506
        %s508 = sand.u32 %s43, 1
        %s509 = smul.addr %s508, 64
        %s510 = scalar_lea.vmem [#allocation2], %s509
        // Predicated region
        $region81: #{tpu_custom_call.1} parent=79 // pred_check
          %p511 = pneg %p56
        $region82: #{tpu_custom_call.1} parent=79 // pred_check_branch
          %513 = sbr.rel (%p511) target = $region84
        $region83: #{tpu_custom_call.1} parent=79 // pred_region
          %514 = dma.done %s507, 1024
        $region84: #{tpu_custom_call.1} parent=79 // pred_fallthru
          _
        %s515 = sand.u32 %s69, 1
        %s516 = scalar_lea.sflag [#allocation6], %s515
        %s517 = sand.u32 %s69, 1
        %s518 = smul.addr %s517, 64
        %s519 = scalar_lea.vmem [#allocation5], %s518
        // Predicated region
        $region85: #{tpu_custom_call.1} parent=79 // pred_check
          %p520 = pneg %p82
        $region86: #{tpu_custom_call.1} parent=79 // pred_check_branch
          %522 = sbr.rel (%p520) target = $region88
        $region87: #{tpu_custom_call.1} parent=79 // pred_region
          %523 = dma.done %s516, 1024
        $region88: #{tpu_custom_call.1} parent=79 // pred_fallthru
          _
        %s524 = sand.u32 %s43, 1
        %s525 = scalar_lea.sflag [#allocation3], %s524
        %s526 = sand.u32 %s43, 1
        %s527 = smul.addr %s526, 64
        %s528 = scalar_lea.vmem [#allocation2], %s527
        %p529 = pneg %p56
        %p530 = pneg %p53
        %s531 = sand.u32 %s69, 1
        %s532 = scalar_lea.sflag [#allocation6], %s531
        %s533 = sand.u32 %s69, 1
        %s534 = smul.addr %s533, 64
        %s535 = scalar_lea.vmem [#allocation5], %s534
        %p536 = pneg %p82
        %p537 = pneg %p79
        %p538 = scmp.lt.s32.totalorder %s35, 1
        %s539 = scalar_select %p538, %s35, 1
        %s540 = smul.addr %s539, 8
        %s541 = scalar_lea.vmem %s2, %s540
        %p542 = pneg %p108
        %p543 = pneg %p105
        %p544 = scmp.lt.s32.totalorder %s35, 1
        %s545 = scalar_select %p544, %s35, 1
        %s546 = smul.addr %s545, 8
        %s547 = scalar_lea.vmem %s3, %s546
        %p548 = pneg %p134
        %p549 = pneg %p131
        %p550 = pneg %p155
        %p551 = pneg %p152
        %p552 = pneg %p176
        %p553 = pneg %p173
        %p554 = pneg %p197
        %p555 = pneg %p194
        %p556 = pneg %p218
        %p557 = pneg %p215
        %p558 = pneg %p239
        %p559 = pneg %p236
        %p560 = pneg %p260
        %p561 = pneg %p257
        %p562 = pneg %p281
        %p563 = pneg %p278
        %p564 = pneg %p302
        %p565 = pneg %p299
        %p566 = pneg %p323
        %p567 = pneg %p320
        %p568 = pneg %p344
        %p569 = pneg %p341
        %p570 = pneg %p365
        %p571 = pneg %p362
        %p572 = pneg %p391
        %p573 = pneg %p388
        %s574 = sand.u32 %s378, 1
        %s575 = scalar_lea.sflag [#allocation4], %s574
        %s576 = sand.u32 %s378, 1
        %s577 = smul.addr %s576, 8
        %s578 = scalar_lea.vmem [#allocation7], %s577
        %s579 = smul.u32 8, %s35
        %s580 = smul.u32 8, %s35
        %p581 = scmp.lt.s32.totalorder %s35, 1
        %s582 = scalar_select %p581, %s35, 1
        %s583 = smul.addr %s582, 8
        %s584 = scalar_lea.vmem %s2, %s583
        %p585 = scmp.lt.s32.totalorder %s35, 1
        %s586 = scalar_select %p585, %s35, 1
        %s587 = smul.addr %s586, 8
        %s588 = scalar_lea.vmem %s3, %s587
        %v589 = vld [vmem:[%s510] sm:$0xff]
        %v590 = vld [vmem:[%s510 + $0x8] sm:$0xff]
        %v591 = vld [vmem:[%s510 + $0x10] sm:$0xff]
        %v592 = vld [vmem:[%s510 + $0x18] sm:$0xff]
        %v593 = vld [vmem:[%s510 + $0x20] sm:$0xff]
        %v594 = vld [vmem:[%s510 + $0x28] sm:$0xff]
        %v595 = vld [vmem:[%s510 + $0x30] sm:$0xff]
        %v596 = vld [vmem:[%s510 + $0x38] sm:$0xff]
        %v597 = vld [vmem:[%s519] sm:$0xff]
        %v598 = vld [vmem:[%s519 + $0x8] sm:$0xff]
        %v599 = vld [vmem:[%s519 + $0x10] sm:$0xff]
        %v600 = vld [vmem:[%s519 + $0x18] sm:$0xff]
        %v601 = vld [vmem:[%s519 + $0x20] sm:$0xff]
        %v602 = vld [vmem:[%s519 + $0x28] sm:$0xff]
        %v603 = vld [vmem:[%s519 + $0x30] sm:$0xff]
        %v604 = vld [vmem:[%s519 + $0x38] sm:$0xff]
        %v605 = vld [vmem:[%s584] sm:$0xff]
        %v606 = vld [vmem:[%s588] sm:$0xff]
        %v607 = vsub.f32 %v605, 1.0
        %v608 = vmul.f32 %v607, 1e+30
        %v609 = vlaneseq
        %v610 = vshrl.u32 %v609, 7
        %v611 = vsub.s32 0, %v610
        %v612 = vrot.slane %v608, %v611
        %614 = vbcast.lane.b32.xlu0 %v612, 256
        %v615 = vpop.permute.xlu0 %614
        %v616 = vlaneseq
        %v617 = vshrl.u32 %v616, 7
        %v618 = vsub.s32 1, %v617
        %v619 = vrot.slane %v608, %v618
        %621 = vbcast.lane.b32.xlu0 %v619, 256
        %v622 = vpop.permute.xlu0 %621
        %v623 = vlaneseq
        %v624 = vshrl.u32 %v623, 7
        %v625 = vsub.s32 2, %v624
        %v626 = vrot.slane %v608, %v625
        %628 = vbcast.lane.b32.xlu0 %v626, 256
        %v629 = vpop.permute.xlu0 %628
        %v630 = vlaneseq
        %v631 = vshrl.u32 %v630, 7
        %v632 = vsub.s32 3, %v631
        %v633 = vrot.slane %v608, %v632
        %635 = vbcast.lane.b32.xlu0 %v633, 256
        %v636 = vpop.permute.xlu0 %635
        %v637 = vlaneseq
        %v638 = vshrl.u32 %v637, 7
        %v639 = vsub.s32 4, %v638
        %v640 = vrot.slane %v608, %v639
        %642 = vbcast.lane.b32.xlu0 %v640, 256
        %v643 = vpop.permute.xlu0 %642
        %v644 = vlaneseq
        %v645 = vshrl.u32 %v644, 7
        %v646 = vsub.s32 5, %v645
        %v647 = vrot.slane %v608, %v646
        %649 = vbcast.lane.b32.xlu0 %v647, 256
        %v650 = vpop.permute.xlu0 %649
        %v651 = vlaneseq
        %v652 = vshrl.u32 %v651, 7
        %v653 = vsub.s32 6, %v652
        %v654 = vrot.slane %v608, %v653
        %656 = vbcast.lane.b32.xlu0 %v654, 256
        %v657 = vpop.permute.xlu0 %656
        %v658 = vlaneseq
        %v659 = vshrl.u32 %v658, 7
        %v660 = vsub.s32 7, %v659
        %v661 = vrot.slane %v608, %v660
        %663 = vbcast.lane.b32.xlu0 %v661, 256
        %v664 = vpop.permute.xlu0 %663
        %v665 = vsub.f32 %v606, 1.0
        %v666 = vmul.f32 %v665, 1e+30
        %v667 = vlaneseq
        %v668 = vshrl.u32 %v667, 7
        %v669 = vsub.s32 0, %v668
        %v670 = vrot.slane %v666, %v669
        %672 = vbcast.lane.b32.xlu0 %v670, 256
        %v673 = vpop.permute.xlu0 %672
        %v674 = vlaneseq
        %v675 = vshrl.u32 %v674, 7
        %v676 = vsub.s32 1, %v675
        %v677 = vrot.slane %v666, %v676
        %679 = vbcast.lane.b32.xlu0 %v677, 256
        %v680 = vpop.permute.xlu0 %679
        %v681 = vlaneseq
        %v682 = vshrl.u32 %v681, 7
        %v683 = vsub.s32 2, %v682
        %v684 = vrot.slane %v666, %v683
        %686 = vbcast.lane.b32.xlu0 %v684, 256
        %v687 = vpop.permute.xlu0 %686
        %v688 = vlaneseq
        %v689 = vshrl.u32 %v688, 7
        %v690 = vsub.s32 3, %v689
        %v691 = vrot.slane %v666, %v690
        %693 = vbcast.lane.b32.xlu0 %v691, 256
        %v694 = vpop.permute.xlu0 %693
        %v695 = vlaneseq
        %v696 = vshrl.u32 %v695, 7
        %v697 = vsub.s32 4, %v696
        %v698 = vrot.slane %v666, %v697
        %700 = vbcast.lane.b32.xlu0 %v698, 256
        %v701 = vpop.permute.xlu0 %700
        %v702 = vlaneseq
        %v703 = vshrl.u32 %v702, 7
        %v704 = vsub.s32 5, %v703
        %v705 = vrot.slane %v666, %v704
        %707 = vbcast.lane.b32.xlu0 %v705, 256
        %v708 = vpop.permute.xlu0 %707
        %v709 = vlaneseq
        %v710 = vshrl.u32 %v709, 7
        %v711 = vsub.s32 6, %v710
        %v712 = vrot.slane %v666, %v711
        %714 = vbcast.lane.b32.xlu0 %v712, 256
        %v715 = vpop.permute.xlu0 %714
        %v716 = vlaneseq
        %v717 = vshrl.u32 %v716, 7
        %v718 = vsub.s32 7, %v717
        %v719 = vrot.slane %v666, %v718
        %721 = vbcast.lane.b32.xlu0 %v719, 256
        %v722 = vpop.permute.xlu0 %721
        %v723 = vadd.f32 %v589, %v615
        %v724 = vadd.f32 %v590, %v622
        %v725 = vadd.f32 %v591, %v629
        %v726 = vadd.f32 %v592, %v636
        %v727 = vadd.f32 %v593, %v643
        %v728 = vadd.f32 %v594, %v650
        %v729 = vadd.f32 %v595, %v657
        %v730 = vadd.f32 %v596, %v664
        %vm731 = vcmask 261120
        %v732 = vsel %vm731, %v723, -inf
        %v733 = vrot.slane %v732, 4
        %v734 = vmax.f32 %v732, %v733
        %v735 = vrot.slane %v734, 2
        %v736 = vmax.f32 %v734, %v735
        %v737 = vrot.slane %v736, 1
        %v738 = vmax.f32 %v736, %v737
        %v739 = vsel %vm731, %v724, -inf
        %v740 = vrot.slane %v739, 4
        %v741 = vmax.f32 %v739, %v740
        %v742 = vrot.slane %v741, 2
        %v743 = vmax.f32 %v741, %v742
        %v744 = vrot.slane %v743, 1
        %v745 = vmax.f32 %v743, %v744
        %v746 = vsel %vm731, %v725, -inf
        %v747 = vrot.slane %v746, 4
        %v748 = vmax.f32 %v746, %v747
        %v749 = vrot.slane %v748, 2
        %v750 = vmax.f32 %v748, %v749
        %v751 = vrot.slane %v750, 1
        %v752 = vmax.f32 %v750, %v751
        %v753 = vsel %vm731, %v726, -inf
        %v754 = vrot.slane %v753, 4
        %v755 = vmax.f32 %v753, %v754
        %v756 = vrot.slane %v755, 2
        %v757 = vmax.f32 %v755, %v756
        %v758 = vrot.slane %v757, 1
        %v759 = vmax.f32 %v757, %v758
        %v760 = vsel %vm731, %v727, -inf
        %v761 = vrot.slane %v760, 4
        %v762 = vmax.f32 %v760, %v761
        %v763 = vrot.slane %v762, 2
        %v764 = vmax.f32 %v762, %v763
        %v765 = vrot.slane %v764, 1
        %v766 = vmax.f32 %v764, %v765
        %v767 = vsel %vm731, %v728, -inf
        %v768 = vrot.slane %v767, 4
        %v769 = vmax.f32 %v767, %v768
        %v770 = vrot.slane %v769, 2
        %v771 = vmax.f32 %v769, %v770
        %v772 = vrot.slane %v771, 1
        %v773 = vmax.f32 %v771, %v772
        %v774 = vsel %vm731, %v729, -inf
        %v775 = vrot.slane %v774, 4
        %v776 = vmax.f32 %v774, %v775
        %v777 = vrot.slane %v776, 2
        %v778 = vmax.f32 %v776, %v777
        %v779 = vrot.slane %v778, 1
        %v780 = vmax.f32 %v778, %v779
        %v781 = vsel %vm731, %v730, -inf
        %v782 = vrot.slane %v781, 4
        %v783 = vmax.f32 %v781, %v782
        %v784 = vrot.slane %v783, 2
        %v785 = vmax.f32 %v783, %v784
        %v786 = vrot.slane %v785, 1
        %v787 = vmax.f32 %v785, %v786
        %v788 = vld [vmem:[%s4] sm:$0xff]
        %v789 = vld [vmem:[%s4 + $0x8] sm:$0xff]
        %vm790 = vcmask 130048
        %v792 = vsel %vm790, %v597, 0
        %v795 = vsel %vm790, %v598, 0
        %v798 = vsel %vm790, %v599, 0
        %v801 = vsel %vm790, %v600, 0
        %v804 = vsel %vm790, %v601, 0
        %v807 = vsel %vm790, %v602, 0
        %v810 = vsel %vm790, %v603, 0
        %v813 = vsel %vm790, %v604, 0
        %815 = vmatprep.subr.mxu0 0.0
        %816 = vmatpush1.msra.mxu0 %v788
        %817 = vmatprep.subr.mxu0 0.0
        %818 = vmatpush1.msra.mxu0 %v789
        %819 = vmatprep.subr.mxu0 0.0
        %820 = vmatpush1.msra.mxu0 0.0
        %821 = vmatprep.subr.mxu0 0.0
        %822 = vmatpush1.msra.mxu0 0.0
        %823 = vmatprep.subr.mxu0 0.0
        %824 = vmatpush1.msra.mxu0 0.0
        %825 = vmatprep.subr.mxu0 0.0
        %826 = vmatpush1.msra.mxu0 0.0
        %827 = vmatprep.subr.mxu0 0.0
        %828 = vmatpush1.msra.mxu0 0.0
        %829 = vmatprep.subr.mxu0 0.0
        %830 = vmatpush1.msra.mxu0 0.0
        %831 = vmatprep.subr.mxu0 0.0
        %832 = vmatpush1.msra.mxu0 0.0
        %833 = vmatprep.subr.mxu0 0.0
        %834 = vmatpush1.msra.mxu0 0.0
        %835 = vmatprep.subr.mxu0 0.0
        %836 = vmatpush1.msra.mxu0 0.0
        %837 = vmatprep.subr.mxu0 0.0
        %838 = vmatpush1.msra.mxu0 0.0
        %839 = vmatprep.subr.mxu0 0.0
        %840 = vmatpush1.msra.mxu0 0.0
        %841 = vmatprep.subr.mxu0 0.0
        %842 = vmatpush1.msra.mxu0 0.0
        %843 = vmatprep.subr.mxu0 0.0
        %844 = vmatpush1.msra.mxu0 0.0
        %845 = vmatprep.subr.mxu0 0.0
        %846 = vmatpush1.msra.mxu0 0.0
        %847 = vmatprep.subr.mxu0 0.0
        %848 = vmatpush1.msra.mxu0 0.0
        %849 = vmatprep.subr.mxu0 0.0
        %850 = vmatpush1.msra.mxu0 0.0
        %851 = vmatprep.subr.mxu0 0.0
        %852 = vmatpush1.msra.mxu0 0.0
        %853 = vmatprep.subr.mxu0 0.0
        %854 = vmatpush1.msra.mxu0 0.0
        %855 = vmatprep.subr.mxu0 0.0
        %856 = vmatpush1.msra.mxu0 0.0
        %857 = vmatprep.subr.mxu0 0.0
        %858 = vmatpush1.msra.mxu0 0.0
        %859 = vmatprep.subr.mxu0 0.0
        %860 = vmatpush1.msra.mxu0 0.0
        %861 = vmatprep.subr.mxu0 0.0
        %862 = vmatpush1.msra.mxu0 0.0
        %863 = vmatprep.subr.mxu0 0.0
        %864 = vmatpush1.msra.mxu0 0.0
        %865 = vmatprep.subr.mxu0 0.0
        %866 = vmatpush1.msra.mxu0 0.0
        %867 = vmatprep.subr.mxu0 0.0
        %868 = vmatpush1.msra.mxu0 0.0
        %869 = vmatprep.subr.mxu0 0.0
        %870 = vmatpush1.msra.mxu0 0.0
        %871 = vmatprep.subr.mxu0 0.0
        %872 = vmatpush1.msra.mxu0 0.0
        %873 = vmatprep.subr.mxu0 0.0
        %874 = vmatpush1.msra.mxu0 0.0
        %875 = vmatprep.subr.mxu0 0.0
        %876 = vmatpush1.msra.mxu0 0.0
        %877 = vmatprep.subr.mxu0 0.0
        %878 = vmatpush1.msra.mxu0 0.0
        %879 = vmatprep.mubr.f32.mxu0 0.0
        %880 = vmatmul.mubr.f32.gmra.mrb[0].mxu0 %v792
        %v881 = vpop.f32.mrb[0].mxu0
        %v882 = vadd.f32 0.0, %v881
        %v883 = vpop.f32.mrb[0].mxu0
        %884 = vmatprep.mubr.f32.mxu0 0.0
        %885 = vmatmul.mubr.f32.gmra.mrb[0].mxu0 %v795
        %v886 = vpop.f32.mrb[0].mxu0
        %v887 = vadd.f32 0.0, %v886
        %v888 = vpop.f32.mrb[0].mxu0
        %889 = vmatprep.mubr.f32.mxu0 0.0
        %890 = vmatmul.mubr.f32.gmra.mrb[0].mxu0 %v798
        %v891 = vpop.f32.mrb[0].mxu0
        %v892 = vadd.f32 0.0, %v891
        %v893 = vpop.f32.mrb[0].mxu0
        %894 = vmatprep.mubr.f32.mxu0 0.0
        %895 = vmatmul.mubr.f32.gmra.mrb[0].mxu0 %v801
        %v896 = vpop.f32.mrb[0].mxu0
        %v897 = vadd.f32 0.0, %v896
        %v898 = vpop.f32.mrb[0].mxu0
        %899 = vmatprep.mubr.f32.mxu0 0.0
        %900 = vmatmul.mubr.f32.gmra.mrb[0].mxu0 %v804
        %v901 = vpop.f32.mrb[0].mxu0
        %v902 = vadd.f32 0.0, %v901
        %v903 = vpop.f32.mrb[0].mxu0
        %904 = vmatprep.mubr.f32.mxu0 0.0
        %905 = vmatmul.mubr.f32.gmra.mrb[0].mxu0 %v807
        %v906 = vpop.f32.mrb[0].mxu0
        %v907 = vadd.f32 0.0, %v906
        %v908 = vpop.f32.mrb[0].mxu0
        %909 = vmatprep.mubr.f32.mxu0 0.0
        %910 = vmatmul.mubr.f32.gmra.mrb[0].mxu0 %v810
        %v911 = vpop.f32.mrb[0].mxu0
        %v912 = vadd.f32 0.0, %v911
        %v913 = vpop.f32.mrb[0].mxu0
        %914 = vmatprep.mubr.f32.mxu0 0.0
        %915 = vmatmul.mubr.f32.gmra.mrb[0].mxu0 %v813
        %v916 = vpop.f32.mrb[0].mxu0
        %v917 = vadd.f32 0.0, %v916
        %v918 = vpop.f32.mrb[0].mxu0
        %919 = vdwg.mxu0
        %v920 = vld [vmem:[%s5] sm:$0xff]
        %v921 = vld [vmem:[%s5 + $0x8] sm:$0xff]
        %v922 = vld [vmem:[%s5 + $0x10] sm:$0xff]
        %v923 = vld [vmem:[%s5 + $0x18] sm:$0xff]
        %v924 = vld [vmem:[%s6] sm:$0x1]
        %v926 = vlaneseq
        %v927 = vshrl.u32 %v926, 7
        %v928 = vsub.s32 0, %v927
        %v929 = vrot.slane %v924, %v928
        %vm939 = vcmask 1041409
        %v940 = vsel %vm939, %v745, %v738
        %vm941 = vcmask 1042434
        %v942 = vsel %vm941, %v752, %v940
        %vm943 = vcmask 1043459
        %v944 = vsel %vm943, %v759, %v942
        %vm945 = vcmask 1044484
        %v946 = vsel %vm945, %v766, %v944
        %vm947 = vcmask 1045509
        %v948 = vsel %vm947, %v773, %v946
        %vm949 = vcmask 1046534
        %v950 = vsel %vm949, %v780, %v948
        %vm951 = vcmask 1047559
        %v952 = vsel %vm951, %v787, %v950
        %v953 = vsel %vm731, %v952, 0
        %955 = vmatprep.subr.mxu0 0.0
        %956 = vmatpush1.msra.mxu0 %v920
        %957 = vmatprep.subr.mxu0 0.0
        %958 = vmatpush1.msra.mxu0 %v921
        %959 = vmatprep.subr.mxu0 0.0
        %960 = vmatpush1.msra.mxu0 %v922
        %961 = vmatprep.subr.mxu0 0.0
        %962 = vmatpush1.msra.mxu0 %v923
        %963 = vmatprep.subr.mxu0 0.0
        %964 = vmatpush1.msra.mxu0 0.0
        %965 = vmatprep.subr.mxu0 0.0
        %966 = vmatpush1.msra.mxu0 0.0
        %967 = vmatprep.subr.mxu0 0.0
        %968 = vmatpush1.msra.mxu0 0.0
        %969 = vmatprep.subr.mxu0 0.0
        %970 = vmatpush1.msra.mxu0 0.0
        %971 = vmatprep.subr.mxu0 0.0
        %972 = vmatpush1.msra.mxu0 0.0
        %973 = vmatprep.subr.mxu0 0.0
        %974 = vmatpush1.msra.mxu0 0.0
        %975 = vmatprep.subr.mxu0 0.0
        %976 = vmatpush1.msra.mxu0 0.0
        %977 = vmatprep.subr.mxu0 0.0
        %978 = vmatpush1.msra.mxu0 0.0
        %979 = vmatprep.subr.mxu0 0.0
        %980 = vmatpush1.msra.mxu0 0.0
        %981 = vmatprep.subr.mxu0 0.0
        %982 = vmatpush1.msra.mxu0 0.0
        %983 = vmatprep.subr.mxu0 0.0
        %984 = vmatpush1.msra.mxu0 0.0
        %985 = vmatprep.subr.mxu0 0.0
        %986 = vmatpush1.msra.mxu0 0.0
        %987 = vmatprep.subr.mxu0 0.0
        %988 = vmatpush1.msra.mxu0 0.0
        %989 = vmatprep.subr.mxu0 0.0
        %990 = vmatpush1.msra.mxu0 0.0
        %991 = vmatprep.subr.mxu0 0.0
        %992 = vmatpush1.msra.mxu0 0.0
        %993 = vmatprep.subr.mxu0 0.0
        %994 = vmatpush1.msra.mxu0 0.0
        %995 = vmatprep.subr.mxu0 0.0
        %996 = vmatpush1.msra.mxu0 0.0
        %997 = vmatprep.subr.mxu0 0.0
        %998 = vmatpush1.msra.mxu0 0.0
        %999 = vmatprep.subr.mxu0 0.0
        %1000 = vmatpush1.msra.mxu0 0.0
        %1001 = vmatprep.subr.mxu0 0.0
        %1002 = vmatpush1.msra.mxu0 0.0
        %1003 = vmatprep.subr.mxu0 0.0
        %1004 = vmatpush1.msra.mxu0 0.0
        %1005 = vmatprep.subr.mxu0 0.0
        %1006 = vmatpush1.msra.mxu0 0.0
        %1007 = vmatprep.subr.mxu0 0.0
        %1008 = vmatpush1.msra.mxu0 0.0
        %1009 = vmatprep.subr.mxu0 0.0
        %1010 = vmatpush1.msra.mxu0 0.0
        %1011 = vmatprep.subr.mxu0 0.0
        %1012 = vmatpush1.msra.mxu0 0.0
        %1013 = vmatprep.subr.mxu0 0.0
        %1014 = vmatpush1.msra.mxu0 0.0
        %1015 = vmatprep.subr.mxu0 0.0
        %1016 = vmatpush1.msra.mxu0 0.0
        %1017 = vmatprep.subr.mxu0 0.0
        %1018 = vmatpush1.msra.mxu0 0.0
        %1019 = vmatprep.mubr.f32.mxu0 0.0
        %1020 = vmatmul.mubr.f32.gmra.mrb[0].mxu0 %v953
        %v1021 = vpop.f32.mrb[0].mxu0
        %v1022 = vadd.f32 %v929, %v1021
        %v1023 = vpop.f32.mrb[0].mxu0
        %1024 = vdwg.mxu0
        %v1026 = vcombine.high %v1022, %v1022
        %v1028 = vunpack.c.l.s4 1966171168
        %v1029 = vunpack.c.0.s8 %v1028
        %v1030 = vlaneseq
        %v1031 = vshrl.u32 %v1030, 7
        %v1032 = vsub.s32 %v1029, %v1031
        %v1033 = vrot.slane %v1022, %v1032
        %v1035 = vunpack.c.l.s4 1966171168
        %v1036 = vunpack.c.0.s8 %v1035
        %v1037 = vlaneseq
        %v1038 = vshrl.u32 %v1037, 7
        %v1039 = vsub.s32 %v1036, %v1038
        %v1040 = vrot.slane %v1026, %v1039
        %v1041 = vcombine.high %v1033, %v1033
        %v1042 = vcombine.high %v1040, %v1040
        %v1044 = vunpack.c.l.s4 1966171168
        %v1045 = vunpack.c.0.s8 %v1044
        %v1046 = vlaneseq
        %v1047 = vshrl.u32 %v1046, 7
        %v1048 = vsub.s32 %v1045, %v1047
        %v1049 = vrot.slane %v1033, %v1048
        %v1051 = vunpack.c.l.s4 1966171168
        %v1052 = vunpack.c.0.s8 %v1051
        %v1053 = vlaneseq
        %v1054 = vshrl.u32 %v1053, 7
        %v1055 = vsub.s32 %v1052, %v1054
        %v1056 = vrot.slane %v1040, %v1055
        %v1058 = vunpack.c.l.s4 1966171168
        %v1059 = vunpack.c.0.s8 %v1058
        %v1060 = vlaneseq
        %v1061 = vshrl.u32 %v1060, 7
        %v1062 = vsub.s32 %v1059, %v1061
        %v1063 = vrot.slane %v1041, %v1062
        %v1065 = vunpack.c.l.s4 1966171168
        %v1066 = vunpack.c.0.s8 %v1065
        %v1067 = vlaneseq
        %v1068 = vshrl.u32 %v1067, 7
        %v1069 = vsub.s32 %v1066, %v1068
        %v1070 = vrot.slane %v1042, %v1069
        %v1071 = vcombine.high %v1049, %v1049
        %v1072 = vcombine.high %v1056, %v1056
        %v1073 = vcombine.high %v1063, %v1063
        %v1074 = vcombine.high %v1070, %v1070
        %v1075 = vlaneseq
        %v1076 = vshrl.u32 %v1075, 7
        %v1077 = vsub.s32 0, %v1076
        %v1078 = vrot.slane %v1049, %v1077
        %v1079 = vlaneseq
        %v1080 = vshrl.u32 %v1079, 7
        %v1081 = vsub.s32 0, %v1080
        %v1082 = vrot.slane %v1063, %v1081
        %v1083 = vlaneseq
        %v1084 = vshrl.u32 %v1083, 7
        %v1085 = vsub.s32 0, %v1084
        %v1086 = vrot.slane %v1071, %v1085
        %v1087 = vlaneseq
        %v1088 = vshrl.u32 %v1087, 7
        %v1089 = vsub.s32 0, %v1088
        %v1090 = vrot.slane %v1073, %v1089
        %v1091 = vlaneseq
        %v1092 = vshrl.u32 %v1091, 7
        %v1093 = vsub.s32 0, %v1092
        %v1094 = vrot.slane %v1056, %v1093
        %v1095 = vlaneseq
        %v1096 = vshrl.u32 %v1095, 7
        %v1097 = vsub.s32 0, %v1096
        %v1098 = vrot.slane %v1070, %v1097
        %v1099 = vlaneseq
        %v1100 = vshrl.u32 %v1099, 7
        %v1101 = vsub.s32 0, %v1100
        %v1102 = vrot.slane %v1072, %v1101
        %v1103 = vlaneseq
        %v1104 = vshrl.u32 %v1103, 7
        %v1105 = vsub.s32 0, %v1104
        %v1106 = vrot.slane %v1074, %v1105
        %v1115 = vadd.f32 %v882, %v1078
        %v1116 = vadd.f32 %v887, %v1082
        %v1117 = vadd.f32 %v892, %v1086
        %v1118 = vadd.f32 %v897, %v1090
        %v1119 = vadd.f32 %v902, %v1094
        %v1120 = vadd.f32 %v907, %v1098
        %v1121 = vadd.f32 %v912, %v1102
        %v1122 = vadd.f32 %v917, %v1106
        %v1123 = vtanh.pop %v1115
        %v1124 = vtanh.pop %v1116
        %v1125 = vtanh.pop %v1117
        %v1126 = vtanh.pop %v1118
        %v1127 = vtanh.pop %v1119
        %v1128 = vtanh.pop %v1120
        %v1129 = vtanh.pop %v1121
        %v1130 = vtanh.pop %v1122
        %v1131 = vld [vmem:[%s7] sm:$0x1]
        %v1133 = vlaneseq
        %v1134 = vshrl.u32 %v1133, 7
        %v1135 = vsub.s32 0, %v1134
        %v1136 = vrot.slane %v1131, %v1135
        %v1138 = vmul.f32 %v1123, %v1136
        %v1139 = vmul.f32 %v1124, %v1136
        %v1140 = vmul.f32 %v1125, %v1136
        %v1141 = vmul.f32 %v1126, %v1136
        %v1142 = vmul.f32 %v1127, %v1136
        %v1143 = vmul.f32 %v1128, %v1136
        %v1144 = vmul.f32 %v1129, %v1136
        %v1145 = vmul.f32 %v1130, %v1136
        %v1146 = vsel %vm731, %v1138, 0.0
        %1147 = vadd.xlane.f32.xlu0 %v1146
        %v1148 = vpop.xlane.xlu0 %1147
        %v1149 = vsel %vm731, %v1139, 0.0
        %1150 = vadd.xlane.f32.xlu0 %v1149
        %v1151 = vpop.xlane.xlu0 %1150
        %v1152 = vsel %vm731, %v1140, 0.0
        %1153 = vadd.xlane.f32.xlu0 %v1152
        %v1154 = vpop.xlane.xlu0 %1153
        %v1155 = vsel %vm731, %v1141, 0.0
        %1156 = vadd.xlane.f32.xlu0 %v1155
        %v1157 = vpop.xlane.xlu0 %1156
        %v1158 = vsel %vm731, %v1142, 0.0
        %1159 = vadd.xlane.f32.xlu0 %v1158
        %v1160 = vpop.xlane.xlu0 %1159
        %v1161 = vsel %vm731, %v1143, 0.0
        %1162 = vadd.xlane.f32.xlu0 %v1161
        %v1163 = vpop.xlane.xlu0 %1162
        %v1164 = vsel %vm731, %v1144, 0.0
        %1165 = vadd.xlane.f32.xlu0 %v1164
        %v1166 = vpop.xlane.xlu0 %1165
        %v1167 = vsel %vm731, %v1145, 0.0
        %1168 = vadd.xlane.f32.xlu0 %v1167
        %v1169 = vpop.xlane.xlu0 %1168
        %v1178 = vlaneseq
        %v1179 = vand.u32 %v1178, 127
        %v1180 = vlaneseq
        %v1181 = vshrl.u32 %v1180, 7
        %v1182 = vsub.s32 %v1179, %v1181
        %v1183 = vrot.slane %v1148, %v1182
        %v1184 = vlaneseq
        %v1185 = vshrl.u32 %v1184, 7
        %v1186 = vsub.s32 %v1179, %v1185
        %v1187 = vrot.slane %v1151, %v1186
        %v1188 = vlaneseq
        %v1189 = vshrl.u32 %v1188, 7
        %v1190 = vsub.s32 %v1179, %v1189
        %v1191 = vrot.slane %v1154, %v1190
        %v1192 = vlaneseq
        %v1193 = vshrl.u32 %v1192, 7
        %v1194 = vsub.s32 %v1179, %v1193
        %v1195 = vrot.slane %v1157, %v1194
        %v1196 = vlaneseq
        %v1197 = vshrl.u32 %v1196, 7
        %v1198 = vsub.s32 %v1179, %v1197
        %v1199 = vrot.slane %v1160, %v1198
        %v1200 = vlaneseq
        %v1201 = vshrl.u32 %v1200, 7
        %v1202 = vsub.s32 %v1179, %v1201
        %v1203 = vrot.slane %v1163, %v1202
        %v1204 = vlaneseq
        %v1205 = vshrl.u32 %v1204, 7
        %v1206 = vsub.s32 %v1179, %v1205
        %v1207 = vrot.slane %v1166, %v1206
        %v1208 = vlaneseq
        %v1209 = vshrl.u32 %v1208, 7
        %v1210 = vsub.s32 %v1179, %v1209
        %v1211 = vrot.slane %v1169, %v1210
        %v1212 = vsel %vm939, %v1187, %v1183
        %v1213 = vsel %vm941, %v1191, %v1212
        %v1214 = vsel %vm943, %v1195, %v1213
        %v1215 = vsel %vm945, %v1199, %v1214
        %v1216 = vsel %vm947, %v1203, %v1215
        %v1217 = vsel %vm949, %v1207, %v1216
        %v1218 = vsel %vm951, %v1211, %v1217
        %vm1220 = vcmask 64512
        %v1221 = vsel %vm1220, %v1218, -inf
        %1222 = vmax.xlane.f32.xlu0 %v1221
        %v1223 = vpop.xlane.xlu0 %1222
        %v1225 = vlaneseq
        %v1226 = vshrl.u32 %v1225, 7
        %v1227 = vsub.s32 0, %v1226
        %v1228 = vrot.slane %v1223, %v1227
        %v1229 = vlaneseq
        %v1230 = vshrl.u32 %v1229, 7
        %v1231 = vsub.s32 1, %v1230
        %v1232 = vrot.slane %v1223, %v1231
        %v1233 = vlaneseq
        %v1234 = vshrl.u32 %v1233, 7
        %v1235 = vsub.s32 2, %v1234
        %v1236 = vrot.slane %v1223, %v1235
        %v1237 = vlaneseq
        %v1238 = vshrl.u32 %v1237, 7
        %v1239 = vsub.s32 3, %v1238
        %v1240 = vrot.slane %v1223, %v1239
        %v1241 = vlaneseq
        %v1242 = vshrl.u32 %v1241, 7
        %v1243 = vsub.s32 4, %v1242
        %v1244 = vrot.slane %v1223, %v1243
        %v1245 = vlaneseq
        %v1246 = vshrl.u32 %v1245, 7
        %v1247 = vsub.s32 5, %v1246
        %v1248 = vrot.slane %v1223, %v1247
        %v1249 = vlaneseq
        %v1250 = vshrl.u32 %v1249, 7
        %v1251 = vsub.s32 6, %v1250
        %v1252 = vrot.slane %v1223, %v1251
        %v1253 = vlaneseq
        %v1254 = vshrl.u32 %v1253, 7
        %v1255 = vsub.s32 7, %v1254
        %v1256 = vrot.slane %v1223, %v1255
        %v1265 = vsub.f32 %v1148, %v1228
        %v1266 = vsub.f32 %v1151, %v1232
        %v1267 = vsub.f32 %v1154, %v1236
        %v1268 = vsub.f32 %v1157, %v1240
        %v1269 = vsub.f32 %v1160, %v1244
        %v1270 = vsub.f32 %v1163, %v1248
        %v1271 = vsub.f32 %v1166, %v1252
        %v1272 = vsub.f32 %v1169, %v1256
        %v1273 = vmul.f32 %v1265, 1.442695
        %v1274 = vpow.pop %v1273
        %v1275 = vmul.f32 %v1266, 1.442695
        %v1276 = vpow.pop %v1275
        %v1277 = vmul.f32 %v1267, 1.442695
        %v1278 = vpow.pop %v1277
        %v1279 = vmul.f32 %v1268, 1.442695
        %v1280 = vpow.pop %v1279
        %v1281 = vmul.f32 %v1269, 1.442695
        %v1282 = vpow.pop %v1281
        %v1283 = vmul.f32 %v1270, 1.442695
        %v1284 = vpow.pop %v1283
        %v1285 = vmul.f32 %v1271, 1.442695
        %v1286 = vpow.pop %v1285
        %v1287 = vmul.f32 %v1272, 1.442695
        %v1288 = vpow.pop %v1287
        %v1290 = vlaneseq
        %v1291 = vshrl.u32 %v1290, 7
        %v1292 = vsub.s32 0, %v1291
        %v1293 = vrot.slane %v606, %v1292
        %1295 = vbcast.lane.b32.xlu0 %v1293, 256
        %v1296 = vpop.permute.xlu0 %1295
        %v1297 = vlaneseq
        %v1298 = vshrl.u32 %v1297, 7
        %v1299 = vsub.s32 1, %v1298
        %v1300 = vrot.slane %v606, %v1299
        %1302 = vbcast.lane.b32.xlu0 %v1300, 256
        %v1303 = vpop.permute.xlu0 %1302
        %v1304 = vlaneseq
        %v1305 = vshrl.u32 %v1304, 7
        %v1306 = vsub.s32 2, %v1305
        %v1307 = vrot.slane %v606, %v1306
        %1309 = vbcast.lane.b32.xlu0 %v1307, 256
        %v1310 = vpop.permute.xlu0 %1309
        %v1311 = vlaneseq
        %v1312 = vshrl.u32 %v1311, 7
        %v1313 = vsub.s32 3, %v1312
        %v1314 = vrot.slane %v606, %v1313
        %1316 = vbcast.lane.b32.xlu0 %v1314, 256
        %v1317 = vpop.permute.xlu0 %1316
        %v1318 = vlaneseq
        %v1319 = vshrl.u32 %v1318, 7
        %v1320 = vsub.s32 4, %v1319
        %v1321 = vrot.slane %v606, %v1320
        %1323 = vbcast.lane.b32.xlu0 %v1321, 256
        %v1324 = vpop.permute.xlu0 %1323
        %v1325 = vlaneseq
        %v1326 = vshrl.u32 %v1325, 7
        %v1327 = vsub.s32 5, %v1326
        %v1328 = vrot.slane %v606, %v1327
        %1330 = vbcast.lane.b32.xlu0 %v1328, 256
        %v1331 = vpop.permute.xlu0 %1330
        %v1332 = vlaneseq
        %v1333 = vshrl.u32 %v1332, 7
        %v1334 = vsub.s32 6, %v1333
        %v1335 = vrot.slane %v606, %v1334
        %1337 = vbcast.lane.b32.xlu0 %v1335, 256
        %v1338 = vpop.permute.xlu0 %1337
        %v1339 = vlaneseq
        %v1340 = vshrl.u32 %v1339, 7
        %v1341 = vsub.s32 7, %v1340
        %v1342 = vrot.slane %v606, %v1341
        %1344 = vbcast.lane.b32.xlu0 %v1342, 256
        %v1345 = vpop.permute.xlu0 %1344
        %v1354 = vmul.f32 %v1274, %v1296
        %v1355 = vmul.f32 %v1276, %v1303
        %v1356 = vmul.f32 %v1278, %v1310
        %v1357 = vmul.f32 %v1280, %v1317
        %v1358 = vmul.f32 %v1282, %v1324
        %v1359 = vmul.f32 %v1284, %v1331
        %v1360 = vmul.f32 %v1286, %v1338
        %v1361 = vmul.f32 %v1288, %v1345
        %1370 = vset.pattern.permute.xlu0 0
        %1371 = vperm.xlu0 %1370, %v1354
        %v1372 = vpop.permute.xlu0 %1371
        %1373 = vset.pattern.permute.xlu0 0
        %1374 = vperm.xlu0 %1373, %v1355
        %v1375 = vpop.permute.xlu0 %1374
        %1376 = vset.pattern.permute.xlu0 0
        %1377 = vperm.xlu0 %1376, %v1356
        %v1378 = vpop.permute.xlu0 %1377
        %1379 = vset.pattern.permute.xlu0 0
        %1380 = vperm.xlu0 %1379, %v1357
        %v1381 = vpop.permute.xlu0 %1380
        %1382 = vset.pattern.permute.xlu0 0
        %1383 = vperm.xlu0 %1382, %v1358
        %v1384 = vpop.permute.xlu0 %1383
        %1385 = vset.pattern.permute.xlu0 0
        %1386 = vperm.xlu0 %1385, %v1359
        %v1387 = vpop.permute.xlu0 %1386
        %1388 = vset.pattern.permute.xlu0 0
        %1389 = vperm.xlu0 %1388, %v1360
        %v1390 = vpop.permute.xlu0 %1389
        %1391 = vset.pattern.permute.xlu0 0
        %1392 = vperm.xlu0 %1391, %v1361
        %v1393 = vpop.permute.xlu0 %1392
        %v1394 = vlaneseq
        %v1395 = vshrl.u32 %v1394, 7
        %v1396 = vsub.s32 %v1179, %v1395
        %v1397 = vrot.slane %v1372, %v1396
        %v1398 = vlaneseq
        %v1399 = vshrl.u32 %v1398, 7
        %v1400 = vsub.s32 %v1179, %v1399
        %v1401 = vrot.slane %v1375, %v1400
        %v1402 = vlaneseq
        %v1403 = vshrl.u32 %v1402, 7
        %v1404 = vsub.s32 %v1179, %v1403
        %v1405 = vrot.slane %v1378, %v1404
        %v1406 = vlaneseq
        %v1407 = vshrl.u32 %v1406, 7
        %v1408 = vsub.s32 %v1179, %v1407
        %v1409 = vrot.slane %v1381, %v1408
        %v1410 = vlaneseq
        %v1411 = vshrl.u32 %v1410, 7
        %v1412 = vsub.s32 %v1179, %v1411
        %v1413 = vrot.slane %v1384, %v1412
        %v1414 = vlaneseq
        %v1415 = vshrl.u32 %v1414, 7
        %v1416 = vsub.s32 %v1179, %v1415
        %v1417 = vrot.slane %v1387, %v1416
        %v1418 = vlaneseq
        %v1419 = vshrl.u32 %v1418, 7
        %v1420 = vsub.s32 %v1179, %v1419
        %v1421 = vrot.slane %v1390, %v1420
        %v1422 = vlaneseq
        %v1423 = vshrl.u32 %v1422, 7
        %v1424 = vsub.s32 %v1179, %v1423
        %v1425 = vrot.slane %v1393, %v1424
        %v1426 = vsel %vm939, %v1401, %v1397
        %v1427 = vsel %vm941, %v1405, %v1426
        %v1428 = vsel %vm943, %v1409, %v1427
        %v1429 = vsel %vm945, %v1413, %v1428
        %v1430 = vsel %vm947, %v1417, %v1429
        %v1431 = vsel %vm949, %v1421, %v1430
        %v1432 = vsel %vm951, %v1425, %v1431
        %v1434 = vsel %vm1220, %v1432, 0.0
        %1435 = vadd.xlane.f32.xlu0 %v1434
        %v1436 = vpop.xlane.xlu0 %1435
        %v1437 = vrcp.pop %v1436
        %v1439 = vlaneseq
        %v1440 = vshrl.u32 %v1439, 7
        %v1441 = vsub.s32 0, %v1440
        %v1442 = vrot.slane %v1437, %v1441
        %v1443 = vlaneseq
        %v1444 = vshrl.u32 %v1443, 7
        %v1445 = vsub.s32 1, %v1444
        %v1446 = vrot.slane %v1437, %v1445
        %v1447 = vlaneseq
        %v1448 = vshrl.u32 %v1447, 7
        %v1449 = vsub.s32 2, %v1448
        %v1450 = vrot.slane %v1437, %v1449
        %v1451 = vlaneseq
        %v1452 = vshrl.u32 %v1451, 7
        %v1453 = vsub.s32 3, %v1452
        %v1454 = vrot.slane %v1437, %v1453
        %v1455 = vlaneseq
        %v1456 = vshrl.u32 %v1455, 7
        %v1457 = vsub.s32 4, %v1456
        %v1458 = vrot.slane %v1437, %v1457
        %v1459 = vlaneseq
        %v1460 = vshrl.u32 %v1459, 7
        %v1461 = vsub.s32 5, %v1460
        %v1462 = vrot.slane %v1437, %v1461
        %v1463 = vlaneseq
        %v1464 = vshrl.u32 %v1463, 7
        %v1465 = vsub.s32 6, %v1464
        %v1466 = vrot.slane %v1437, %v1465
        %v1467 = vlaneseq
        %v1468 = vshrl.u32 %v1467, 7
        %v1469 = vsub.s32 7, %v1468
        %v1470 = vrot.slane %v1437, %v1469
        %v1479 = vmul.f32 %v1354, %v1442
        %v1480 = vmul.f32 %v1355, %v1446
        %v1481 = vmul.f32 %v1356, %v1450
        %v1482 = vmul.f32 %v1357, %v1454
        %v1483 = vmul.f32 %v1358, %v1458
        %v1484 = vmul.f32 %v1359, %v1462
        %v1485 = vmul.f32 %v1360, %v1466
        %v1486 = vmul.f32 %v1361, %v1470
        %1488 = vset.pattern.permute.xlu0 0
        %1489 = vperm.xlu0 %1488, %v1479
        %v1490 = vpop.permute.xlu0 %1489
        %1493 = vset.pattern.permute.xlu0 0
        %1494 = vperm.xlu0 %1493, %v1480
        %v1495 = vpop.permute.xlu0 %1494
        %1498 = vset.pattern.permute.xlu0 0
        %1499 = vperm.xlu0 %1498, %v1481
        %v1500 = vpop.permute.xlu0 %1499
        %1503 = vset.pattern.permute.xlu0 0
        %1504 = vperm.xlu0 %1503, %v1482
        %v1505 = vpop.permute.xlu0 %1504
        %1508 = vset.pattern.permute.xlu0 0
        %1509 = vperm.xlu0 %1508, %v1483
        %v1510 = vpop.permute.xlu0 %1509
        %1513 = vset.pattern.permute.xlu0 0
        %1514 = vperm.xlu0 %1513, %v1484
        %v1515 = vpop.permute.xlu0 %1514
        %1518 = vset.pattern.permute.xlu0 0
        %1519 = vperm.xlu0 %1518, %v1485
        %v1520 = vpop.permute.xlu0 %1519
        %1523 = vset.pattern.permute.xlu0 0
        %1524 = vperm.xlu0 %1523, %v1486
        %v1525 = vpop.permute.xlu0 %1524
        %v1527 = vmul.f32 %v1490, %v597
        %v1528 = vmul.f32 %v1495, %v598
        %v1529 = vmul.f32 %v1500, %v599
        %v1530 = vmul.f32 %v1505, %v600
        %v1531 = vmul.f32 %v1510, %v601
        %v1532 = vmul.f32 %v1515, %v602
        %v1533 = vmul.f32 %v1520, %v603
        %v1534 = vmul.f32 %v1525, %v604
        %v1535 = vsel %vm790, %v1527, 0.0
        %v1536 = vrot.slane %v1535, 4
        %v1537 = vadd.f32 %v1535, %v1536
        %v1538 = vrot.slane %v1537, 2
        %v1539 = vadd.f32 %v1537, %v1538
        %v1540 = vrot.slane %v1539, 1
        %v1541 = vadd.f32 %v1539, %v1540
        %v1542 = vsel %vm790, %v1528, 0.0
        %v1543 = vrot.slane %v1542, 4
        %v1544 = vadd.f32 %v1542, %v1543
        %v1545 = vrot.slane %v1544, 2
        %v1546 = vadd.f32 %v1544, %v1545
        %v1547 = vrot.slane %v1546, 1
        %v1548 = vadd.f32 %v1546, %v1547
        %v1549 = vsel %vm790, %v1529, 0.0
        %v1550 = vrot.slane %v1549, 4
        %v1551 = vadd.f32 %v1549, %v1550
        %v1552 = vrot.slane %v1551, 2
        %v1553 = vadd.f32 %v1551, %v1552
        %v1554 = vrot.slane %v1553, 1
        %v1555 = vadd.f32 %v1553, %v1554
        %v1556 = vsel %vm790, %v1530, 0.0
        %v1557 = vrot.slane %v1556, 4
        %v1558 = vadd.f32 %v1556, %v1557
        %v1559 = vrot.slane %v1558, 2
        %v1560 = vadd.f32 %v1558, %v1559
        %v1561 = vrot.slane %v1560, 1
        %v1562 = vadd.f32 %v1560, %v1561
        %v1563 = vsel %vm790, %v1531, 0.0
        %v1564 = vrot.slane %v1563, 4
        %v1565 = vadd.f32 %v1563, %v1564
        %v1566 = vrot.slane %v1565, 2
        %v1567 = vadd.f32 %v1565, %v1566
        %v1568 = vrot.slane %v1567, 1
        %v1569 = vadd.f32 %v1567, %v1568
        %v1570 = vsel %vm790, %v1532, 0.0
        %v1571 = vrot.slane %v1570, 4
        %v1572 = vadd.f32 %v1570, %v1571
        %v1573 = vrot.slane %v1572, 2
        %v1574 = vadd.f32 %v1572, %v1573
        %v1575 = vrot.slane %v1574, 1
        %v1576 = vadd.f32 %v1574, %v1575
        %v1577 = vsel %vm790, %v1533, 0.0
        %v1578 = vrot.slane %v1577, 4
        %v1579 = vadd.f32 %v1577, %v1578
        %v1580 = vrot.slane %v1579, 2
        %v1581 = vadd.f32 %v1579, %v1580
        %v1582 = vrot.slane %v1581, 1
        %v1583 = vadd.f32 %v1581, %v1582
        %v1584 = vsel %vm790, %v1534, 0.0
        %v1585 = vrot.slane %v1584, 4
        %v1586 = vadd.f32 %v1584, %v1585
        %v1587 = vrot.slane %v1586, 2
        %v1588 = vadd.f32 %v1586, %v1587
        %v1589 = vrot.slane %v1588, 1
        %v1590 = vadd.f32 %v1588, %v1589
        %v1591 = vadd.f32 %v597, %v673
        %v1592 = vadd.f32 %v598, %v680
        %v1593 = vadd.f32 %v599, %v687
        %v1594 = vadd.f32 %v600, %v694
        %v1595 = vadd.f32 %v601, %v701
        %v1596 = vadd.f32 %v602, %v708
        %v1597 = vadd.f32 %v603, %v715
        %v1598 = vadd.f32 %v604, %v722
        %v1599 = vsel %vm790, %v1591, -inf
        %v1600 = vrot.slane %v1599, 4
        %v1601 = vmax.f32 %v1599, %v1600
        %v1602 = vrot.slane %v1601, 2
        %v1603 = vmax.f32 %v1601, %v1602
        %v1604 = vrot.slane %v1603, 1
        %v1605 = vmax.f32 %v1603, %v1604
        %v1606 = vsel %vm790, %v1592, -inf
        %v1607 = vrot.slane %v1606, 4
        %v1608 = vmax.f32 %v1606, %v1607
        %v1609 = vrot.slane %v1608, 2
        %v1610 = vmax.f32 %v1608, %v1609
        %v1611 = vrot.slane %v1610, 1
        %v1612 = vmax.f32 %v1610, %v1611
        %v1613 = vsel %vm790, %v1593, -inf
        %v1614 = vrot.slane %v1613, 4
        %v1615 = vmax.f32 %v1613, %v1614
        %v1616 = vrot.slane %v1615, 2
        %v1617 = vmax.f32 %v1615, %v1616
        %v1618 = vrot.slane %v1617, 1
        %v1619 = vmax.f32 %v1617, %v1618
        %v1620 = vsel %vm790, %v1594, -inf
        %v1621 = vrot.slane %v1620, 4
        %v1622 = vmax.f32 %v1620, %v1621
        %v1623 = vrot.slane %v1622, 2
        %v1624 = vmax.f32 %v1622, %v1623
        %v1625 = vrot.slane %v1624, 1
        %v1626 = vmax.f32 %v1624, %v1625
        %v1627 = vsel %vm790, %v1595, -inf
        %v1628 = vrot.slane %v1627, 4
        %v1629 = vmax.f32 %v1627, %v1628
        %v1630 = vrot.slane %v1629, 2
        %v1631 = vmax.f32 %v1629, %v1630
        %v1632 = vrot.slane %v1631, 1
        %v1633 = vmax.f32 %v1631, %v1632
        %v1634 = vsel %vm790, %v1596, -inf
        %v1635 = vrot.slane %v1634, 4
        %v1636 = vmax.f32 %v1634, %v1635
        %v1637 = vrot.slane %v1636, 2
        %v1638 = vmax.f32 %v1636, %v1637
        %v1639 = vrot.slane %v1638, 1
        %v1640 = vmax.f32 %v1638, %v1639
        %v1641 = vsel %vm790, %v1597, -inf
        %v1642 = vrot.slane %v1641, 4
        %v1643 = vmax.f32 %v1641, %v1642
        %v1644 = vrot.slane %v1643, 2
        %v1645 = vmax.f32 %v1643, %v1644
        %v1646 = vrot.slane %v1645, 1
        %v1647 = vmax.f32 %v1645, %v1646
        %v1648 = vsel %vm790, %v1598, -inf
        %v1649 = vrot.slane %v1648, 4
        %v1650 = vmax.f32 %v1648, %v1649
        %v1651 = vrot.slane %v1650, 2
        %v1652 = vmax.f32 %v1650, %v1651
        %v1653 = vrot.slane %v1652, 1
        %v1654 = vmax.f32 %v1652, %v1653
        %v1655 = vld [vmem:[%s8] sm:$0xff]
        %v1656 = vld [vmem:[%s8 + $0x8] sm:$0xff]
        %v1657 = vld [vmem:[%s8 + $0x10] sm:$0xff]
        %v1658 = vld [vmem:[%s8 + $0x18] sm:$0xff]
        %v1660 = vsel %vm731, %v589, 0
        %v1663 = vsel %vm731, %v590, 0
        %v1666 = vsel %vm731, %v591, 0
        %v1669 = vsel %vm731, %v592, 0
        %v1672 = vsel %vm731, %v593, 0
        %v1675 = vsel %vm731, %v594, 0
        %v1678 = vsel %vm731, %v595, 0
        %v1681 = vsel %vm731, %v596, 0
        %1683 = vmatprep.subr.mxu0 0.0
        %1684 = vmatpush1.msra.mxu0 %v1655
        %1685 = vmatprep.subr.mxu0 0.0
        %1686 = vmatpush1.msra.mxu0 %v1656
        %1687 = vmatprep.subr.mxu0 0.0
        %1688 = vmatpush1.msra.mxu0 %v1657
        %1689 = vmatprep.subr.mxu0 0.0
        %1690 = vmatpush1.msra.mxu0 %v1658
        %1691 = vmatprep.subr.mxu0 0.0
        %1692 = vmatpush1.msra.mxu0 0.0
        %1693 = vmatprep.subr.mxu0 0.0
        %1694 = vmatpush1.msra.mxu0 0.0
        %1695 = vmatprep.subr.mxu0 0.0
        %1696 = vmatpush1.msra.mxu0 0.0
        %1697 = vmatprep.subr.mxu0 0.0
        %1698 = vmatpush1.msra.mxu0 0.0
        %1699 = vmatprep.subr.mxu0 0.0
        %1700 = vmatpush1.msra.mxu0 0.0
        %1701 = vmatprep.subr.mxu0 0.0
        %1702 = vmatpush1.msra.mxu0 0.0
        %1703 = vmatprep.subr.mxu0 0.0
        %1704 = vmatpush1.msra.mxu0 0.0
        %1705 = vmatprep.subr.mxu0 0.0
        %1706 = vmatpush1.msra.mxu0 0.0
        %1707 = vmatprep.subr.mxu0 0.0
        %1708 = vmatpush1.msra.mxu0 0.0
        %1709 = vmatprep.subr.mxu0 0.0
        %1710 = vmatpush1.msra.mxu0 0.0
        %1711 = vmatprep.subr.mxu0 0.0
        %1712 = vmatpush1.msra.mxu0 0.0
        %1713 = vmatprep.subr.mxu0 0.0
        %1714 = vmatpush1.msra.mxu0 0.0
        %1715 = vmatprep.subr.mxu0 0.0
        %1716 = vmatpush1.msra.mxu0 0.0
        %1717 = vmatprep.subr.mxu0 0.0
        %1718 = vmatpush1.msra.mxu0 0.0
        %1719 = vmatprep.subr.mxu0 0.0
        %1720 = vmatpush1.msra.mxu0 0.0
        %1721 = vmatprep.subr.mxu0 0.0
        %1722 = vmatpush1.msra.mxu0 0.0
        %1723 = vmatprep.subr.mxu0 0.0
        %1724 = vmatpush1.msra.mxu0 0.0
        %1725 = vmatprep.subr.mxu0 0.0
        %1726 = vmatpush1.msra.mxu0 0.0
        %1727 = vmatprep.subr.mxu0 0.0
        %1728 = vmatpush1.msra.mxu0 0.0
        %1729 = vmatprep.subr.mxu0 0.0
        %1730 = vmatpush1.msra.mxu0 0.0
        %1731 = vmatprep.subr.mxu0 0.0
        %1732 = vmatpush1.msra.mxu0 0.0
        %1733 = vmatprep.subr.mxu0 0.0
        %1734 = vmatpush1.msra.mxu0 0.0
        %1735 = vmatprep.subr.mxu0 0.0
        %1736 = vmatpush1.msra.mxu0 0.0
        %1737 = vmatprep.subr.mxu0 0.0
        %1738 = vmatpush1.msra.mxu0 0.0
        %1739 = vmatprep.subr.mxu0 0.0
        %1740 = vmatpush1.msra.mxu0 0.0
        %1741 = vmatprep.subr.mxu0 0.0
        %1742 = vmatpush1.msra.mxu0 0.0
        %1743 = vmatprep.subr.mxu0 0.0
        %1744 = vmatpush1.msra.mxu0 0.0
        %1745 = vmatprep.subr.mxu0 0.0
        %1746 = vmatpush1.msra.mxu0 0.0
        %1747 = vmatprep.mubr.f32.mxu0 0.0
        %1748 = vmatmul.mubr.f32.gmra.mrb[0].mxu0 %v1660
        %v1749 = vpop.f32.mrb[0].mxu0
        %v1750 = vadd.f32 0.0, %v1749
        %v1751 = vpop.f32.mrb[0].mxu0
        %1752 = vmatprep.mubr.f32.mxu0 0.0
        %1753 = vmatmul.mubr.f32.gmra.mrb[0].mxu0 %v1663
        %v1754 = vpop.f32.mrb[0].mxu0
        %v1755 = vadd.f32 0.0, %v1754
        %v1756 = vpop.f32.mrb[0].mxu0
        %1757 = vmatprep.mubr.f32.mxu0 0.0
        %1758 = vmatmul.mubr.f32.gmra.mrb[0].mxu0 %v1666
        %v1759 = vpop.f32.mrb[0].mxu0
        %v1760 = vadd.f32 0.0, %v1759
        %v1761 = vpop.f32.mrb[0].mxu0
        %1762 = vmatprep.mubr.f32.mxu0 0.0
        %1763 = vmatmul.mubr.f32.gmra.mrb[0].mxu0 %v1669
        %v1764 = vpop.f32.mrb[0].mxu0
        %v1765 = vadd.f32 0.0, %v1764
        %v1766 = vpop.f32.mrb[0].mxu0
        %1767 = vmatprep.mubr.f32.mxu0 0.0
        %1768 = vmatmul.mubr.f32.gmra.mrb[0].mxu0 %v1672
        %v1769 = vpop.f32.mrb[0].mxu0
        %v1770 = vadd.f32 0.0, %v1769
        %v1771 = vpop.f32.mrb[0].mxu0
        %1772 = vmatprep.mubr.f32.mxu0 0.0
        %1773 = vmatmul.mubr.f32.gmra.mrb[0].mxu0 %v1675
        %v1774 = vpop.f32.mrb[0].mxu0
        %v1775 = vadd.f32 0.0, %v1774
        %v1776 = vpop.f32.mrb[0].mxu0
        %1777 = vmatprep.mubr.f32.mxu0 0.0
        %1778 = vmatmul.mubr.f32.gmra.mrb[0].mxu0 %v1678
        %v1779 = vpop.f32.mrb[0].mxu0
        %v1780 = vadd.f32 0.0, %v1779
        %v1781 = vpop.f32.mrb[0].mxu0
        %1782 = vmatprep.mubr.f32.mxu0 0.0
        %1783 = vmatmul.mubr.f32.gmra.mrb[0].mxu0 %v1681
        %v1784 = vpop.f32.mrb[0].mxu0
        %v1785 = vadd.f32 0.0, %v1784
        %v1786 = vpop.f32.mrb[0].mxu0
        %1787 = vdwg.mxu0
        %v1788 = vld [vmem:[%s9] sm:$0xff]
        %v1789 = vld [vmem:[%s9 + $0x8] sm:$0xff]
        %v1790 = vld [vmem:[%s10] sm:$0x1]
        %v1792 = vlaneseq
        %v1793 = vshrl.u32 %v1792, 7
        %v1794 = vsub.s32 0, %v1793
        %v1795 = vrot.slane %v1790, %v1794
        %v1805 = vsel %vm939, %v1612, %v1605
        %v1806 = vsel %vm941, %v1619, %v1805
        %v1807 = vsel %vm943, %v1626, %v1806
        %v1808 = vsel %vm945, %v1633, %v1807
        %v1809 = vsel %vm947, %v1640, %v1808
        %v1810 = vsel %vm949, %v1647, %v1809
        %v1811 = vsel %vm951, %v1654, %v1810
        %v1812 = vsel %vm790, %v1811, 0
        %1814 = vmatprep.subr.mxu0 0.0
        %1815 = vmatpush1.msra.mxu0 %v1788
        %1816 = vmatprep.subr.mxu0 0.0
        %1817 = vmatpush1.msra.mxu0 %v1789
        %1818 = vmatprep.subr.mxu0 0.0
        %1819 = vmatpush1.msra.mxu0 0.0
        %1820 = vmatprep.subr.mxu0 0.0
        %1821 = vmatpush1.msra.mxu0 0.0
        %1822 = vmatprep.subr.mxu0 0.0
        %1823 = vmatpush1.msra.mxu0 0.0
        %1824 = vmatprep.subr.mxu0 0.0
        %1825 = vmatpush1.msra.mxu0 0.0
        %1826 = vmatprep.subr.mxu0 0.0
        %1827 = vmatpush1.msra.mxu0 0.0
        %1828 = vmatprep.subr.mxu0 0.0
        %1829 = vmatpush1.msra.mxu0 0.0
        %1830 = vmatprep.subr.mxu0 0.0
        %1831 = vmatpush1.msra.mxu0 0.0
        %1832 = vmatprep.subr.mxu0 0.0
        %1833 = vmatpush1.msra.mxu0 0.0
        %1834 = vmatprep.subr.mxu0 0.0
        %1835 = vmatpush1.msra.mxu0 0.0
        %1836 = vmatprep.subr.mxu0 0.0
        %1837 = vmatpush1.msra.mxu0 0.0
        %1838 = vmatprep.subr.mxu0 0.0
        %1839 = vmatpush1.msra.mxu0 0.0
        %1840 = vmatprep.subr.mxu0 0.0
        %1841 = vmatpush1.msra.mxu0 0.0
        %1842 = vmatprep.subr.mxu0 0.0
        %1843 = vmatpush1.msra.mxu0 0.0
        %1844 = vmatprep.subr.mxu0 0.0
        %1845 = vmatpush1.msra.mxu0 0.0
        %1846 = vmatprep.subr.mxu0 0.0
        %1847 = vmatpush1.msra.mxu0 0.0
        %1848 = vmatprep.subr.mxu0 0.0
        %1849 = vmatpush1.msra.mxu0 0.0
        %1850 = vmatprep.subr.mxu0 0.0
        %1851 = vmatpush1.msra.mxu0 0.0
        %1852 = vmatprep.subr.mxu0 0.0
        %1853 = vmatpush1.msra.mxu0 0.0
        %1854 = vmatprep.subr.mxu0 0.0
        %1855 = vmatpush1.msra.mxu0 0.0
        %1856 = vmatprep.subr.mxu0 0.0
        %1857 = vmatpush1.msra.mxu0 0.0
        %1858 = vmatprep.subr.mxu0 0.0
        %1859 = vmatpush1.msra.mxu0 0.0
        %1860 = vmatprep.subr.mxu0 0.0
        %1861 = vmatpush1.msra.mxu0 0.0
        %1862 = vmatprep.subr.mxu0 0.0
        %1863 = vmatpush1.msra.mxu0 0.0
        %1864 = vmatprep.subr.mxu0 0.0
        %1865 = vmatpush1.msra.mxu0 0.0
        %1866 = vmatprep.subr.mxu0 0.0
        %1867 = vmatpush1.msra.mxu0 0.0
        %1868 = vmatprep.subr.mxu0 0.0
        %1869 = vmatpush1.msra.mxu0 0.0
        %1870 = vmatprep.subr.mxu0 0.0
        %1871 = vmatpush1.msra.mxu0 0.0
        %1872 = vmatprep.subr.mxu0 0.0
        %1873 = vmatpush1.msra.mxu0 0.0
        %1874 = vmatprep.subr.mxu0 0.0
        %1875 = vmatpush1.msra.mxu0 0.0
        %1876 = vmatprep.subr.mxu0 0.0
        %1877 = vmatpush1.msra.mxu0 0.0
        %1878 = vmatprep.mubr.f32.mxu0 0.0
        %1879 = vmatmul.mubr.f32.gmra.mrb[0].mxu0 %v1812
        %v1880 = vpop.f32.mrb[0].mxu0
        %v1881 = vadd.f32 %v1795, %v1880
        %v1882 = vpop.f32.mrb[0].mxu0
        %1883 = vdwg.mxu0
        %v1885 = vcombine.high %v1881, %v1881
        %v1887 = vunpack.c.l.s4 1966171168
        %v1888 = vunpack.c.0.s8 %v1887
        %v1889 = vlaneseq
        %v1890 = vshrl.u32 %v1889, 7
        %v1891 = vsub.s32 %v1888, %v1890
        %v1892 = vrot.slane %v1881, %v1891
        %v1894 = vunpack.c.l.s4 1966171168
        %v1895 = vunpack.c.0.s8 %v1894
        %v1896 = vlaneseq
        %v1897 = vshrl.u32 %v1896, 7
        %v1898 = vsub.s32 %v1895, %v1897
        %v1899 = vrot.slane %v1885, %v1898
        %v1900 = vcombine.high %v1892, %v1892
        %v1901 = vcombine.high %v1899, %v1899
        %v1903 = vunpack.c.l.s4 1966171168
        %v1904 = vunpack.c.0.s8 %v1903
        %v1905 = vlaneseq
        %v1906 = vshrl.u32 %v1905, 7
        %v1907 = vsub.s32 %v1904, %v1906
        %v1908 = vrot.slane %v1892, %v1907
        %v1910 = vunpack.c.l.s4 1966171168
        %v1911 = vunpack.c.0.s8 %v1910
        %v1912 = vlaneseq
        %v1913 = vshrl.u32 %v1912, 7
        %v1914 = vsub.s32 %v1911, %v1913
        %v1915 = vrot.slane %v1899, %v1914
        %v1917 = vunpack.c.l.s4 1966171168
        %v1918 = vunpack.c.0.s8 %v1917
        %v1919 = vlaneseq
        %v1920 = vshrl.u32 %v1919, 7
        %v1921 = vsub.s32 %v1918, %v1920
        %v1922 = vrot.slane %v1900, %v1921
        %v1924 = vunpack.c.l.s4 1966171168
        %v1925 = vunpack.c.0.s8 %v1924
        %v1926 = vlaneseq
        %v1927 = vshrl.u32 %v1926, 7
        %v1928 = vsub.s32 %v1925, %v1927
        %v1929 = vrot.slane %v1901, %v1928
        %v1930 = vcombine.high %v1908, %v1908
        %v1931 = vcombine.high %v1915, %v1915
        %v1932 = vcombine.high %v1922, %v1922
        %v1933 = vcombine.high %v1929, %v1929
        %v1934 = vlaneseq
        %v1935 = vshrl.u32 %v1934, 7
        %v1936 = vsub.s32 0, %v1935
        %v1937 = vrot.slane %v1908, %v1936
        %v1938 = vlaneseq
        %v1939 = vshrl.u32 %v1938, 7
        %v1940 = vsub.s32 0, %v1939
        %v1941 = vrot.slane %v1922, %v1940
        %v1942 = vlaneseq
        %v1943 = vshrl.u32 %v1942, 7
        %v1944 = vsub.s32 0, %v1943
        %v1945 = vrot.slane %v1930, %v1944
        %v1946 = vlaneseq
        %v1947 = vshrl.u32 %v1946, 7
        %v1948 = vsub.s32 0, %v1947
        %v1949 = vrot.slane %v1932, %v1948
        %v1950 = vlaneseq
        %v1951 = vshrl.u32 %v1950, 7
        %v1952 = vsub.s32 0, %v1951
        %v1953 = vrot.slane %v1915, %v1952
        %v1954 = vlaneseq
        %v1955 = vshrl.u32 %v1954, 7
        %v1956 = vsub.s32 0, %v1955
        %v1957 = vrot.slane %v1929, %v1956
        %v1958 = vlaneseq
        %v1959 = vshrl.u32 %v1958, 7
        %v1960 = vsub.s32 0, %v1959
        %v1961 = vrot.slane %v1931, %v1960
        %v1962 = vlaneseq
        %v1963 = vshrl.u32 %v1962, 7
        %v1964 = vsub.s32 0, %v1963
        %v1965 = vrot.slane %v1933, %v1964
        %v1974 = vadd.f32 %v1750, %v1937
        %v1975 = vadd.f32 %v1755, %v1941
        %v1976 = vadd.f32 %v1760, %v1945
        %v1977 = vadd.f32 %v1765, %v1949
        %v1978 = vadd.f32 %v1770, %v1953
        %v1979 = vadd.f32 %v1775, %v1957
        %v1980 = vadd.f32 %v1780, %v1961
        %v1981 = vadd.f32 %v1785, %v1965
        %v1982 = vtanh.pop %v1974
        %v1983 = vtanh.pop %v1975
        %v1984 = vtanh.pop %v1976
        %v1985 = vtanh.pop %v1977
        %v1986 = vtanh.pop %v1978
        %v1987 = vtanh.pop %v1979
        %v1988 = vtanh.pop %v1980
        %v1989 = vtanh.pop %v1981
        %v1990 = vld [vmem:[%s11] sm:$0x1]
        %v1992 = vlaneseq
        %v1993 = vshrl.u32 %v1992, 7
        %v1994 = vsub.s32 0, %v1993
        %v1995 = vrot.slane %v1990, %v1994
        %v1997 = vmul.f32 %v1982, %v1995
        %v1998 = vmul.f32 %v1983, %v1995
        %v1999 = vmul.f32 %v1984, %v1995
        %v2000 = vmul.f32 %v1985, %v1995
        %v2001 = vmul.f32 %v1986, %v1995
        %v2002 = vmul.f32 %v1987, %v1995
        %v2003 = vmul.f32 %v1988, %v1995
        %v2004 = vmul.f32 %v1989, %v1995
        %v2005 = vsel %vm790, %v1997, 0.0
        %2006 = vadd.xlane.f32.xlu0 %v2005
        %v2007 = vpop.xlane.xlu0 %2006
        %v2008 = vsel %vm790, %v1998, 0.0
        %2009 = vadd.xlane.f32.xlu0 %v2008
        %v2010 = vpop.xlane.xlu0 %2009
        %v2011 = vsel %vm790, %v1999, 0.0
        %2012 = vadd.xlane.f32.xlu0 %v2011
        %v2013 = vpop.xlane.xlu0 %2012
        %v2014 = vsel %vm790, %v2000, 0.0
        %2015 = vadd.xlane.f32.xlu0 %v2014
        %v2016 = vpop.xlane.xlu0 %2015
        %v2017 = vsel %vm790, %v2001, 0.0
        %2018 = vadd.xlane.f32.xlu0 %v2017
        %v2019 = vpop.xlane.xlu0 %2018
        %v2020 = vsel %vm790, %v2002, 0.0
        %2021 = vadd.xlane.f32.xlu0 %v2020
        %v2022 = vpop.xlane.xlu0 %2021
        %v2023 = vsel %vm790, %v2003, 0.0
        %2024 = vadd.xlane.f32.xlu0 %v2023
        %v2025 = vpop.xlane.xlu0 %2024
        %v2026 = vsel %vm790, %v2004, 0.0
        %2027 = vadd.xlane.f32.xlu0 %v2026
        %v2028 = vpop.xlane.xlu0 %2027
        %v2037 = vlaneseq
        %v2038 = vshrl.u32 %v2037, 7
        %v2039 = vsub.s32 %v1179, %v2038
        %v2040 = vrot.slane %v2007, %v2039
        %v2041 = vlaneseq
        %v2042 = vshrl.u32 %v2041, 7
        %v2043 = vsub.s32 %v1179, %v2042
        %v2044 = vrot.slane %v2010, %v2043
        %v2045 = vlaneseq
        %v2046 = vshrl.u32 %v2045, 7
        %v2047 = vsub.s32 %v1179, %v2046
        %v2048 = vrot.slane %v2013, %v2047
        %v2049 = vlaneseq
        %v2050 = vshrl.u32 %v2049, 7
        %v2051 = vsub.s32 %v1179, %v2050
        %v2052 = vrot.slane %v2016, %v2051
        %v2053 = vlaneseq
        %v2054 = vshrl.u32 %v2053, 7
        %v2055 = vsub.s32 %v1179, %v2054
        %v2056 = vrot.slane %v2019, %v2055
        %v2057 = vlaneseq
        %v2058 = vshrl.u32 %v2057, 7
        %v2059 = vsub.s32 %v1179, %v2058
        %v2060 = vrot.slane %v2022, %v2059
        %v2061 = vlaneseq
        %v2062 = vshrl.u32 %v2061, 7
        %v2063 = vsub.s32 %v1179, %v2062
        %v2064 = vrot.slane %v2025, %v2063
        %v2065 = vlaneseq
        %v2066 = vshrl.u32 %v2065, 7
        %v2067 = vsub.s32 %v1179, %v2066
        %v2068 = vrot.slane %v2028, %v2067
        %v2069 = vsel %vm939, %v2044, %v2040
        %v2070 = vsel %vm941, %v2048, %v2069
        %v2071 = vsel %vm943, %v2052, %v2070
        %v2072 = vsel %vm945, %v2056, %v2071
        %v2073 = vsel %vm947, %v2060, %v2072
        %v2074 = vsel %vm949, %v2064, %v2073
        %v2075 = vsel %vm951, %v2068, %v2074
        %v2077 = vsel %vm1220, %v2075, -inf
        %2078 = vmax.xlane.f32.xlu0 %v2077
        %v2079 = vpop.xlane.xlu0 %2078
        %v2081 = vlaneseq
        %v2082 = vshrl.u32 %v2081, 7
        %v2083 = vsub.s32 0, %v2082
        %v2084 = vrot.slane %v2079, %v2083
        %v2085 = vlaneseq
        %v2086 = vshrl.u32 %v2085, 7
        %v2087 = vsub.s32 1, %v2086
        %v2088 = vrot.slane %v2079, %v2087
        %v2089 = vlaneseq
        %v2090 = vshrl.u32 %v2089, 7
        %v2091 = vsub.s32 2, %v2090
        %v2092 = vrot.slane %v2079, %v2091
        %v2093 = vlaneseq
        %v2094 = vshrl.u32 %v2093, 7
        %v2095 = vsub.s32 3, %v2094
        %v2096 = vrot.slane %v2079, %v2095
        %v2097 = vlaneseq
        %v2098 = vshrl.u32 %v2097, 7
        %v2099 = vsub.s32 4, %v2098
        %v2100 = vrot.slane %v2079, %v2099
        %v2101 = vlaneseq
        %v2102 = vshrl.u32 %v2101, 7
        %v2103 = vsub.s32 5, %v2102
        %v2104 = vrot.slane %v2079, %v2103
        %v2105 = vlaneseq
        %v2106 = vshrl.u32 %v2105, 7
        %v2107 = vsub.s32 6, %v2106
        %v2108 = vrot.slane %v2079, %v2107
        %v2109 = vlaneseq
        %v2110 = vshrl.u32 %v2109, 7
        %v2111 = vsub.s32 7, %v2110
        %v2112 = vrot.slane %v2079, %v2111
        %v2121 = vsub.f32 %v2007, %v2084
        %v2122 = vsub.f32 %v2010, %v2088
        %v2123 = vsub.f32 %v2013, %v2092
        %v2124 = vsub.f32 %v2016, %v2096
        %v2125 = vsub.f32 %v2019, %v2100
        %v2126 = vsub.f32 %v2022, %v2104
        %v2127 = vsub.f32 %v2025, %v2108
        %v2128 = vsub.f32 %v2028, %v2112
        %v2129 = vmul.f32 %v2121, 1.442695
        %v2130 = vpow.pop %v2129
        %v2131 = vmul.f32 %v2122, 1.442695
        %v2132 = vpow.pop %v2131
        %v2133 = vmul.f32 %v2123, 1.442695
        %v2134 = vpow.pop %v2133
        %v2135 = vmul.f32 %v2124, 1.442695
        %v2136 = vpow.pop %v2135
        %v2137 = vmul.f32 %v2125, 1.442695
        %v2138 = vpow.pop %v2137
        %v2139 = vmul.f32 %v2126, 1.442695
        %v2140 = vpow.pop %v2139
        %v2141 = vmul.f32 %v2127, 1.442695
        %v2142 = vpow.pop %v2141
        %v2143 = vmul.f32 %v2128, 1.442695
        %v2144 = vpow.pop %v2143
        %v2146 = vlaneseq
        %v2147 = vshrl.u32 %v2146, 7
        %v2148 = vsub.s32 0, %v2147
        %v2149 = vrot.slane %v605, %v2148
        %2151 = vbcast.lane.b32.xlu0 %v2149, 256
        %v2152 = vpop.permute.xlu0 %2151
        %v2153 = vlaneseq
        %v2154 = vshrl.u32 %v2153, 7
        %v2155 = vsub.s32 1, %v2154
        %v2156 = vrot.slane %v605, %v2155
        %2158 = vbcast.lane.b32.xlu0 %v2156, 256
        %v2159 = vpop.permute.xlu0 %2158
        %v2160 = vlaneseq
        %v2161 = vshrl.u32 %v2160, 7
        %v2162 = vsub.s32 2, %v2161
        %v2163 = vrot.slane %v605, %v2162
        %2165 = vbcast.lane.b32.xlu0 %v2163, 256
        %v2166 = vpop.permute.xlu0 %2165
        %v2167 = vlaneseq
        %v2168 = vshrl.u32 %v2167, 7
        %v2169 = vsub.s32 3, %v2168
        %v2170 = vrot.slane %v605, %v2169
        %2172 = vbcast.lane.b32.xlu0 %v2170, 256
        %v2173 = vpop.permute.xlu0 %2172
        %v2174 = vlaneseq
        %v2175 = vshrl.u32 %v2174, 7
        %v2176 = vsub.s32 4, %v2175
        %v2177 = vrot.slane %v605, %v2176
        %2179 = vbcast.lane.b32.xlu0 %v2177, 256
        %v2180 = vpop.permute.xlu0 %2179
        %v2181 = vlaneseq
        %v2182 = vshrl.u32 %v2181, 7
        %v2183 = vsub.s32 5, %v2182
        %v2184 = vrot.slane %v605, %v2183
        %2186 = vbcast.lane.b32.xlu0 %v2184, 256
        %v2187 = vpop.permute.xlu0 %2186
        %v2188 = vlaneseq
        %v2189 = vshrl.u32 %v2188, 7
        %v2190 = vsub.s32 6, %v2189
        %v2191 = vrot.slane %v605, %v2190
        %2193 = vbcast.lane.b32.xlu0 %v2191, 256
        %v2194 = vpop.permute.xlu0 %2193
        %v2195 = vlaneseq
        %v2196 = vshrl.u32 %v2195, 7
        %v2197 = vsub.s32 7, %v2196
        %v2198 = vrot.slane %v605, %v2197
        %2200 = vbcast.lane.b32.xlu0 %v2198, 256
        %v2201 = vpop.permute.xlu0 %2200
        %v2210 = vmul.f32 %v2130, %v2152
        %v2211 = vmul.f32 %v2132, %v2159
        %v2212 = vmul.f32 %v2134, %v2166
        %v2213 = vmul.f32 %v2136, %v2173
        %v2214 = vmul.f32 %v2138, %v2180
        %v2215 = vmul.f32 %v2140, %v2187
        %v2216 = vmul.f32 %v2142, %v2194
        %v2217 = vmul.f32 %v2144, %v2201
        %2226 = vset.pattern.permute.xlu0 0
        %2227 = vperm.xlu0 %2226, %v2210
        %v2228 = vpop.permute.xlu0 %2227
        %2229 = vset.pattern.permute.xlu0 0
        %2230 = vperm.xlu0 %2229, %v2211
        %v2231 = vpop.permute.xlu0 %2230
        %2232 = vset.pattern.permute.xlu0 0
        %2233 = vperm.xlu0 %2232, %v2212
        %v2234 = vpop.permute.xlu0 %2233
        %2235 = vset.pattern.permute.xlu0 0
        %2236 = vperm.xlu0 %2235, %v2213
        %v2237 = vpop.permute.xlu0 %2236
        %2238 = vset.pattern.permute.xlu0 0
        %2239 = vperm.xlu0 %2238, %v2214
        %v2240 = vpop.permute.xlu0 %2239
        %2241 = vset.pattern.permute.xlu0 0
        %2242 = vperm.xlu0 %2241, %v2215
        %v2243 = vpop.permute.xlu0 %2242
        %2244 = vset.pattern.permute.xlu0 0
        %2245 = vperm.xlu0 %2244, %v2216
        %v2246 = vpop.permute.xlu0 %2245
        %2247 = vset.pattern.permute.xlu0 0
        %2248 = vperm.xlu0 %2247, %v2217
        %v2249 = vpop.permute.xlu0 %2248
        %v2250 = vlaneseq
        %v2251 = vshrl.u32 %v2250, 7
        %v2252 = vsub.s32 %v1179, %v2251
        %v2253 = vrot.slane %v2228, %v2252
        %v2254 = vlaneseq
        %v2255 = vshrl.u32 %v2254, 7
        %v2256 = vsub.s32 %v1179, %v2255
        %v2257 = vrot.slane %v2231, %v2256
        %v2258 = vlaneseq
        %v2259 = vshrl.u32 %v2258, 7
        %v2260 = vsub.s32 %v1179, %v2259
        %v2261 = vrot.slane %v2234, %v2260
        %v2262 = vlaneseq
        %v2263 = vshrl.u32 %v2262, 7
        %v2264 = vsub.s32 %v1179, %v2263
        %v2265 = vrot.slane %v2237, %v2264
        %v2266 = vlaneseq
        %v2267 = vshrl.u32 %v2266, 7
        %v2268 = vsub.s32 %v1179, %v2267
        %v2269 = vrot.slane %v2240, %v2268
        %v2270 = vlaneseq
        %v2271 = vshrl.u32 %v2270, 7
        %v2272 = vsub.s32 %v1179, %v2271
        %v2273 = vrot.slane %v2243, %v2272
        %v2274 = vlaneseq
        %v2275 = vshrl.u32 %v2274, 7
        %v2276 = vsub.s32 %v1179, %v2275
        %v2277 = vrot.slane %v2246, %v2276
        %v2278 = vlaneseq
        %v2279 = vshrl.u32 %v2278, 7
        %v2280 = vsub.s32 %v1179, %v2279
        %v2281 = vrot.slane %v2249, %v2280
        %v2282 = vsel %vm939, %v2257, %v2253
        %v2283 = vsel %vm941, %v2261, %v2282
        %v2284 = vsel %vm943, %v2265, %v2283
        %v2285 = vsel %vm945, %v2269, %v2284
        %v2286 = vsel %vm947, %v2273, %v2285
        %v2287 = vsel %vm949, %v2277, %v2286
        %v2288 = vsel %vm951, %v2281, %v2287
        %v2290 = vsel %vm1220, %v2288, 0.0
        %2291 = vadd.xlane.f32.xlu0 %v2290
        %v2292 = vpop.xlane.xlu0 %2291
        %v2293 = vrcp.pop %v2292
        %v2295 = vlaneseq
        %v2296 = vshrl.u32 %v2295, 7
        %v2297 = vsub.s32 0, %v2296
        %v2298 = vrot.slane %v2293, %v2297
        %v2299 = vlaneseq
        %v2300 = vshrl.u32 %v2299, 7
        %v2301 = vsub.s32 1, %v2300
        %v2302 = vrot.slane %v2293, %v2301
        %v2303 = vlaneseq
        %v2304 = vshrl.u32 %v2303, 7
        %v2305 = vsub.s32 2, %v2304
        %v2306 = vrot.slane %v2293, %v2305
        %v2307 = vlaneseq
        %v2308 = vshrl.u32 %v2307, 7
        %v2309 = vsub.s32 3, %v2308
        %v2310 = vrot.slane %v2293, %v2309
        %v2311 = vlaneseq
        %v2312 = vshrl.u32 %v2311, 7
        %v2313 = vsub.s32 4, %v2312
        %v2314 = vrot.slane %v2293, %v2313
        %v2315 = vlaneseq
        %v2316 = vshrl.u32 %v2315, 7
        %v2317 = vsub.s32 5, %v2316
        %v2318 = vrot.slane %v2293, %v2317
        %v2319 = vlaneseq
        %v2320 = vshrl.u32 %v2319, 7
        %v2321 = vsub.s32 6, %v2320
        %v2322 = vrot.slane %v2293, %v2321
        %v2323 = vlaneseq
        %v2324 = vshrl.u32 %v2323, 7
        %v2325 = vsub.s32 7, %v2324
        %v2326 = vrot.slane %v2293, %v2325
        %v2335 = vmul.f32 %v2210, %v2298
        %v2336 = vmul.f32 %v2211, %v2302
        %v2337 = vmul.f32 %v2212, %v2306
        %v2338 = vmul.f32 %v2213, %v2310
        %v2339 = vmul.f32 %v2214, %v2314
        %v2340 = vmul.f32 %v2215, %v2318
        %v2341 = vmul.f32 %v2216, %v2322
        %v2342 = vmul.f32 %v2217, %v2326
        %2344 = vset.pattern.permute.xlu0 0
        %2345 = vperm.xlu0 %2344, %v2335
        %v2346 = vpop.permute.xlu0 %2345
        %2349 = vset.pattern.permute.xlu0 0
        %2350 = vperm.xlu0 %2349, %v2336
        %v2351 = vpop.permute.xlu0 %2350
        %2354 = vset.pattern.permute.xlu0 0
        %2355 = vperm.xlu0 %2354, %v2337
        %v2356 = vpop.permute.xlu0 %2355
        %2359 = vset.pattern.permute.xlu0 0
        %2360 = vperm.xlu0 %2359, %v2338
        %v2361 = vpop.permute.xlu0 %2360
        %2364 = vset.pattern.permute.xlu0 0
        %2365 = vperm.xlu0 %2364, %v2339
        %v2366 = vpop.permute.xlu0 %2365
        %2369 = vset.pattern.permute.xlu0 0
        %2370 = vperm.xlu0 %2369, %v2340
        %v2371 = vpop.permute.xlu0 %2370
        %2374 = vset.pattern.permute.xlu0 0
        %2375 = vperm.xlu0 %2374, %v2341
        %v2376 = vpop.permute.xlu0 %2375
        %2379 = vset.pattern.permute.xlu0 0
        %2380 = vperm.xlu0 %2379, %v2342
        %v2381 = vpop.permute.xlu0 %2380
        %v2383 = vmul.f32 %v2346, %v589
        %v2384 = vmul.f32 %v2351, %v590
        %v2385 = vmul.f32 %v2356, %v591
        %v2386 = vmul.f32 %v2361, %v592
        %v2387 = vmul.f32 %v2366, %v593
        %v2388 = vmul.f32 %v2371, %v594
        %v2389 = vmul.f32 %v2376, %v595
        %v2390 = vmul.f32 %v2381, %v596
        %v2391 = vsel %vm731, %v2383, 0.0
        %v2392 = vrot.slane %v2391, 4
        %v2393 = vadd.f32 %v2391, %v2392
        %v2394 = vrot.slane %v2393, 2
        %v2395 = vadd.f32 %v2393, %v2394
        %v2396 = vrot.slane %v2395, 1
        %v2397 = vadd.f32 %v2395, %v2396
        %v2398 = vsel %vm731, %v2384, 0.0
        %v2399 = vrot.slane %v2398, 4
        %v2400 = vadd.f32 %v2398, %v2399
        %v2401 = vrot.slane %v2400, 2
        %v2402 = vadd.f32 %v2400, %v2401
        %v2403 = vrot.slane %v2402, 1
        %v2404 = vadd.f32 %v2402, %v2403
        %v2405 = vsel %vm731, %v2385, 0.0
        %v2406 = vrot.slane %v2405, 4
        %v2407 = vadd.f32 %v2405, %v2406
        %v2408 = vrot.slane %v2407, 2
        %v2409 = vadd.f32 %v2407, %v2408
        %v2410 = vrot.slane %v2409, 1
        %v2411 = vadd.f32 %v2409, %v2410
        %v2412 = vsel %vm731, %v2386, 0.0
        %v2413 = vrot.slane %v2412, 4
        %v2414 = vadd.f32 %v2412, %v2413
        %v2415 = vrot.slane %v2414, 2
        %v2416 = vadd.f32 %v2414, %v2415
        %v2417 = vrot.slane %v2416, 1
        %v2418 = vadd.f32 %v2416, %v2417
        %v2419 = vsel %vm731, %v2387, 0.0
        %v2420 = vrot.slane %v2419, 4
        %v2421 = vadd.f32 %v2419, %v2420
        %v2422 = vrot.slane %v2421, 2
        %v2423 = vadd.f32 %v2421, %v2422
        %v2424 = vrot.slane %v2423, 1
        %v2425 = vadd.f32 %v2423, %v2424
        %v2426 = vsel %vm731, %v2388, 0.0
        %v2427 = vrot.slane %v2426, 4
        %v2428 = vadd.f32 %v2426, %v2427
        %v2429 = vrot.slane %v2428, 2
        %v2430 = vadd.f32 %v2428, %v2429
        %v2431 = vrot.slane %v2430, 1
        %v2432 = vadd.f32 %v2430, %v2431
        %v2433 = vsel %vm731, %v2389, 0.0
        %v2434 = vrot.slane %v2433, 4
        %v2435 = vadd.f32 %v2433, %v2434
        %v2436 = vrot.slane %v2435, 2
        %v2437 = vadd.f32 %v2435, %v2436
        %v2438 = vrot.slane %v2437, 1
        %v2439 = vadd.f32 %v2437, %v2438
        %v2440 = vsel %vm731, %v2390, 0.0
        %v2441 = vrot.slane %v2440, 4
        %v2442 = vadd.f32 %v2440, %v2441
        %v2443 = vrot.slane %v2442, 2
        %v2444 = vadd.f32 %v2442, %v2443
        %v2445 = vrot.slane %v2444, 1
        %v2446 = vadd.f32 %v2444, %v2445
        %v2447 = vld [vmem:[%s12] sm:$0xff]
        %v2448 = vld [vmem:[%s12 + $0x8] sm:$0xff]
        %v2449 = vld [vmem:[%s13] sm:$0xff]
        %v2450 = vld [vmem:[%s13 + $0x8] sm:$0xff]
        %v2451 = vld [vmem:[%s13 + $0x10] sm:$0xff]
        %v2452 = vld [vmem:[%s13 + $0x18] sm:$0xff]
        %v2461 = vsel %vm939, %v2404, %v2397
        %v2462 = vsel %vm941, %v2411, %v2461
        %v2463 = vsel %vm943, %v2418, %v2462
        %v2464 = vsel %vm945, %v2425, %v2463
        %v2465 = vsel %vm947, %v2432, %v2464
        %v2466 = vsel %vm949, %v2439, %v2465
        %v2467 = vsel %vm951, %v2446, %v2466
        %v2468 = vsel %vm731, %v2467, 0
        %2470 = vmatprep.subr.mxu0 0.0
        %2471 = vmatpush1.msra.mxu0 %v2449
        %2472 = vmatprep.subr.mxu0 0.0
        %2473 = vmatpush1.msra.mxu0 %v2450
        %2474 = vmatprep.subr.mxu0 0.0
        %2475 = vmatpush1.msra.mxu0 %v2451
        %2476 = vmatprep.subr.mxu0 0.0
        %2477 = vmatpush1.msra.mxu0 %v2452
        %2478 = vmatprep.subr.mxu0 0.0
        %2479 = vmatpush1.msra.mxu0 0.0
        %2480 = vmatprep.subr.mxu0 0.0
        %2481 = vmatpush1.msra.mxu0 0.0
        %2482 = vmatprep.subr.mxu0 0.0
        %2483 = vmatpush1.msra.mxu0 0.0
        %2484 = vmatprep.subr.mxu0 0.0
        %2485 = vmatpush1.msra.mxu0 0.0
        %2486 = vmatprep.subr.mxu0 0.0
        %2487 = vmatpush1.msra.mxu0 0.0
        %2488 = vmatprep.subr.mxu0 0.0
        %2489 = vmatpush1.msra.mxu0 0.0
        %2490 = vmatprep.subr.mxu0 0.0
        %2491 = vmatpush1.msra.mxu0 0.0
        %2492 = vmatprep.subr.mxu0 0.0
        %2493 = vmatpush1.msra.mxu0 0.0
        %2494 = vmatprep.subr.mxu0 0.0
        %2495 = vmatpush1.msra.mxu0 0.0
        %2496 = vmatprep.subr.mxu0 0.0
        %2497 = vmatpush1.msra.mxu0 0.0
        %2498 = vmatprep.subr.mxu0 0.0
        %2499 = vmatpush1.msra.mxu0 0.0
        %2500 = vmatprep.subr.mxu0 0.0
        %2501 = vmatpush1.msra.mxu0 0.0
        %2502 = vmatprep.subr.mxu0 0.0
        %2503 = vmatpush1.msra.mxu0 0.0
        %2504 = vmatprep.subr.mxu0 0.0
        %2505 = vmatpush1.msra.mxu0 0.0
        %2506 = vmatprep.subr.mxu0 0.0
        %2507 = vmatpush1.msra.mxu0 0.0
        %2508 = vmatprep.subr.mxu0 0.0
        %2509 = vmatpush1.msra.mxu0 0.0
        %2510 = vmatprep.subr.mxu0 0.0
        %2511 = vmatpush1.msra.mxu0 0.0
        %2512 = vmatprep.subr.mxu0 0.0
        %2513 = vmatpush1.msra.mxu0 0.0
        %2514 = vmatprep.subr.mxu0 0.0
        %2515 = vmatpush1.msra.mxu0 0.0
        %2516 = vmatprep.subr.mxu0 0.0
        %2517 = vmatpush1.msra.mxu0 0.0
        %2518 = vmatprep.subr.mxu0 0.0
        %2519 = vmatpush1.msra.mxu0 0.0
        %2520 = vmatprep.subr.mxu0 0.0
        %2521 = vmatpush1.msra.mxu0 0.0
        %2522 = vmatprep.subr.mxu0 0.0
        %2523 = vmatpush1.msra.mxu0 0.0
        %2524 = vmatprep.subr.mxu0 0.0
        %2525 = vmatpush1.msra.mxu0 0.0
        %2526 = vmatprep.subr.mxu0 0.0
        %2527 = vmatpush1.msra.mxu0 0.0
        %2528 = vmatprep.subr.mxu0 0.0
        %2529 = vmatpush1.msra.mxu0 0.0
        %2530 = vmatprep.subr.mxu0 0.0
        %2531 = vmatpush1.msra.mxu0 0.0
        %2532 = vmatprep.subr.mxu0 0.0
        %2533 = vmatpush1.msra.mxu0 0.0
        %2534 = vmatprep.mubr.f32.mxu0 0.0
        %2535 = vmatmul.mubr.f32.gmra.mrb[0].mxu0 %v2468
        %v2536 = vpop.f32.mrb[0].mxu0
        %v2537 = vadd.f32 0.0, %v2536
        %v2538 = vpop.f32.mrb[0].mxu0
        %2539 = vdwg.mxu0
        %v2548 = vsel %vm939, %v1548, %v1541
        %v2549 = vsel %vm941, %v1555, %v2548
        %v2550 = vsel %vm943, %v1562, %v2549
        %v2551 = vsel %vm945, %v1569, %v2550
        %v2552 = vsel %vm947, %v1576, %v2551
        %v2553 = vsel %vm949, %v1583, %v2552
        %v2554 = vsel %vm951, %v1590, %v2553
        %v2555 = vsel %vm790, %v2554, 0
        %2557 = vmatprep.subr.mxu0 0.0
        %2558 = vmatpush1.msra.mxu0 %v2447
        %2559 = vmatprep.subr.mxu0 0.0
        %2560 = vmatpush1.msra.mxu0 %v2448
        %2561 = vmatprep.subr.mxu0 0.0
        %2562 = vmatpush1.msra.mxu0 0.0
        %2563 = vmatprep.subr.mxu0 0.0
        %2564 = vmatpush1.msra.mxu0 0.0
        %2565 = vmatprep.subr.mxu0 0.0
        %2566 = vmatpush1.msra.mxu0 0.0
        %2567 = vmatprep.subr.mxu0 0.0
        %2568 = vmatpush1.msra.mxu0 0.0
        %2569 = vmatprep.subr.mxu0 0.0
        %2570 = vmatpush1.msra.mxu0 0.0
        %2571 = vmatprep.subr.mxu0 0.0
        %2572 = vmatpush1.msra.mxu0 0.0
        %2573 = vmatprep.subr.mxu0 0.0
        %2574 = vmatpush1.msra.mxu0 0.0
        %2575 = vmatprep.subr.mxu0 0.0
        %2576 = vmatpush1.msra.mxu0 0.0
        %2577 = vmatprep.subr.mxu0 0.0
        %2578 = vmatpush1.msra.mxu0 0.0
        %2579 = vmatprep.subr.mxu0 0.0
        %2580 = vmatpush1.msra.mxu0 0.0
        %2581 = vmatprep.subr.mxu0 0.0
        %2582 = vmatpush1.msra.mxu0 0.0
        %2583 = vmatprep.subr.mxu0 0.0
        %2584 = vmatpush1.msra.mxu0 0.0
        %2585 = vmatprep.subr.mxu0 0.0
        %2586 = vmatpush1.msra.mxu0 0.0
        %2587 = vmatprep.subr.mxu0 0.0
        %2588 = vmatpush1.msra.mxu0 0.0
        %2589 = vmatprep.subr.mxu0 0.0
        %2590 = vmatpush1.msra.mxu0 0.0
        %2591 = vmatprep.subr.mxu0 0.0
        %2592 = vmatpush1.msra.mxu0 0.0
        %2593 = vmatprep.subr.mxu0 0.0
        %2594 = vmatpush1.msra.mxu0 0.0
        %2595 = vmatprep.subr.mxu0 0.0
        %2596 = vmatpush1.msra.mxu0 0.0
        %2597 = vmatprep.subr.mxu0 0.0
        %2598 = vmatpush1.msra.mxu0 0.0
        %2599 = vmatprep.subr.mxu0 0.0
        %2600 = vmatpush1.msra.mxu0 0.0
        %2601 = vmatprep.subr.mxu0 0.0
        %2602 = vmatpush1.msra.mxu0 0.0
        %2603 = vmatprep.subr.mxu0 0.0
        %2604 = vmatpush1.msra.mxu0 0.0
        %2605 = vmatprep.subr.mxu0 0.0
        %2606 = vmatpush1.msra.mxu0 0.0
        %2607 = vmatprep.subr.mxu0 0.0
        %2608 = vmatpush1.msra.mxu0 0.0
        %2609 = vmatprep.subr.mxu0 0.0
        %2610 = vmatpush1.msra.mxu0 0.0
        %2611 = vmatprep.subr.mxu0 0.0
        %2612 = vmatpush1.msra.mxu0 0.0
        %2613 = vmatprep.subr.mxu0 0.0
        %2614 = vmatpush1.msra.mxu0 0.0
        %2615 = vmatprep.subr.mxu0 0.0
        %2616 = vmatpush1.msra.mxu0 0.0
        %2617 = vmatprep.subr.mxu0 0.0
        %2618 = vmatpush1.msra.mxu0 0.0
        %2619 = vmatprep.subr.mxu0 0.0
        %2620 = vmatpush1.msra.mxu0 0.0
        %2621 = vmatprep.mubr.f32.mxu0 0.0
        %2622 = vmatmul.mubr.f32.gmra.mrb[0].mxu0 %v2555
        %v2623 = vpop.f32.mrb[0].mxu0
        %v2624 = vadd.f32 %v2537, %v2623
        %v2625 = vpop.f32.mrb[0].mxu0
        %2626 = vdwg.mxu0
        %v2627 = vld [vmem:[%s14] sm:$0x1]
        %v2629 = vlaneseq
        %v2630 = vshrl.u32 %v2629, 7
        %v2631 = vsub.s32 0, %v2630
        %v2632 = vrot.slane %v2627, %v2631
        %v2634 = vadd.f32 %v2624, %v2632
        %2635 = vst [vmem:[%s578] sm:$0xff] %v2634
        %s2636 = sand.u32 %s378, 1
        %s2637 = scalar_lea.sflag [#allocation4], %s2636
        %s2638 = sand.u32 %s378, 1
        %s2639 = smul.addr %s2638, 8
        %s2640 = scalar_lea.vmem [#allocation7], %s2639
        // Predicated region
        $region89: #{tpu_custom_call.1} parent=79 // pred_check
          %p2641 = pneg %p388
        $region90: #{tpu_custom_call.1} parent=79 // pred_check_branch
          %2643 = sbr.rel (%p2641) target = $region92
        $region91: #{tpu_custom_call.1} parent=79 // pred_region
          %s2645 = ssub.s32 128, 128
          %2646 = vsyncadd %s2637, %s2645
          %s2647 = smul.addr %s35, 128
          %s2648 = scalar_lea.hbm %s15, %s2647
          %s2650 = sshll.u32 %s2640, 4
          %s2651 = int_to_ptr.vmem [resolvable:$true] %s2650
          %2653 = dma.vmem_to_hbm [thread:$0]  %s2651, 128, %s2648, %s2637
        $region92: #{tpu_custom_call.1} parent=79 // pred_fallthru
          _
      $region80: #{tpu_custom_call.1} parent=5 // pred_fallthru
        _
      %p2654 = scmp.le.s32.totalorder 2, %s30
      // Predicated region
      $region93: #{tpu_custom_call.1} parent=5 // pred_check
        %p2655 = pneg %p2654
      $region94: #{tpu_custom_call.1} parent=5 // pred_check_branch
        %2657 = sbr.rel (%p2655) target = $region96
      $region95: #{tpu_custom_call.1} parent=5 // pred_region
        %s2658 = ssub.s32 %s30, 2
        // Predicated region
        $region97: #{tpu_custom_call.1} parent=95 // pred_check
          %p2659 = pneg %p394
        $region98: #{tpu_custom_call.1} parent=95 // pred_check_branch
          %2661 = sbr.rel (%p2659) target = $region100
        $region99: #{tpu_custom_call.1} parent=95 // pred_region
          %s2662 = sand.u32 %s379, 1
          %s2663 = scalar_lea.sflag [#allocation4], %s2662
          %s2664 = sand.u32 %s379, 1
          %s2665 = smul.addr %s2664, 8
          %s2666 = scalar_lea.vmem [#allocation7], %s2665
          %2667 = dma.done %s2663, 128
        $region100: #{tpu_custom_call.1} parent=95 // pred_fallthru
          _
      $region96: #{tpu_custom_call.1} parent=5 // pred_fallthru
        _
    $region6: #{tpu_custom_call.1} parent=1 // loop_footer
      %s34 = sadd.s32 1, %s30
    $region7: #{tpu_custom_call.1} parent=1 // loop_footer_branch
      %29 = sbr.rel target = $region3
    $region8: #{tpu_custom_call.1} parent=1 // loop_exit
      _
    %2668 = vsyncpa [#allocation3], 1
    %s2669 = scalar_lea.sflag [#allocation3], 1
    %2670 = vsyncpa %s2669, 1
    %2671 = vsyncpa [#allocation6], 1
    %s2672 = scalar_lea.sflag [#allocation6], 1
    %2673 = vsyncpa %s2672, 1
    %2674 = vsyncpa [#allocation4], 1
    %s2675 = scalar_lea.sflag [#allocation4], 1
    %2676 = vsyncpa %s2675, 1

// kernel: tpu_custom_call.1
$region0: #{tpu_custom_call.1}
  #allocation0 [shape = 'u32[]', space=smem, size = 0x4, offset = 0x4, fixed_abs, tag = 'smem constant byte address 0x4 - core index']
  #allocation1 [shape = 'u32[144,128]{1,0:T(1,128)}', space=vmem, size = 0x12000, scoped, tag = 'internal scratch']
  %s0 = inlined_call_operand.hbm [shape: f32[16,8,32], index: 0, kind: input, shape index: {}]
  %s1 = inlined_call_operand.hbm [shape: f32[16,8,16], index: 1, kind: input, shape index: {}]
  %s2 = inlined_call_operand.vmem [shape: f32[16,8], index: 2, kind: input, shape index: {}]
  %s3 = inlined_call_operand.vmem [shape: f32[16,8], index: 3, kind: input, shape index: {}]
  %s4 = inlined_call_operand.vmem [shape: f32[16,32], index: 4, kind: input, shape index: {}]
  %s5 = inlined_call_operand.vmem [shape: f32[32,32], index: 5, kind: input, shape index: {}]
  %s6 = inlined_call_operand.vmem [shape: f32[1,32], index: 6, kind: input, shape index: {}]
  %s7 = inlined_call_operand.vmem [shape: f32[1,32], index: 7, kind: input, shape index: {}]
  %s8 = inlined_call_operand.vmem [shape: f32[32,16], index: 8, kind: input, shape index: {}]
  %s9 = inlined_call_operand.vmem [shape: f32[16,16], index: 9, kind: input, shape index: {}]
  %s10 = inlined_call_operand.vmem [shape: f32[1,16], index: 10, kind: input, shape index: {}]
  %s11 = inlined_call_operand.vmem [shape: f32[1,16], index: 11, kind: input, shape index: {}]
  %s12 = inlined_call_operand.vmem [shape: f32[16,128], index: 12, kind: input, shape index: {}]
  %s13 = inlined_call_operand.vmem [shape: f32[32,128], index: 13, kind: input, shape index: {}]
  %s14 = inlined_call_operand.vmem [shape: f32[1,128], index: 14, kind: input, shape index: {}]
  %s15 = inlined_call_operand.hbm [shape: f32[16,128], index: 15, kind: output, shape index: {}]
  %s16 = sld [smem:[#allocation0]]
  $region101: #{tpu_custom_call.1} parent=0
    _
  %s18 = ssub.s32 1, %s16
  %s19 = scalar_select 0, %s18, %s16
  $region1: #{tpu_custom_call.1} parent=0
    #allocation2 [shape = 'u8[65536]{0}', space=vmem, size = 0x10000, scoped, tag = 'input window, operand 0']
    #allocation3 [shape = 's32[2]{0}', space=sflag, size = 0x8, scoped, tag = 'scoped memory for tpu_custom_call.1']
    #allocation4 [shape = 's32[2]{0}', space=sflag, size = 0x8, scoped, tag = 'scoped memory for tpu_custom_call.1']
    #allocation5 [shape = 'u8[65536]{0}', space=vmem, size = 0x10000, scoped, tag = 'input window, operand 1']
    #allocation6 [shape = 's32[2]{0}', space=sflag, size = 0x8, scoped, tag = 'scoped memory for tpu_custom_call.1']
    #allocation7 [shape = 'u8[8192]{0}', space=vmem, size = 0x2000, scoped, tag = 'output window, operand 0']
    %20 = vsyncpa [#allocation3], 0
    %s21 = scalar_lea.sflag [#allocation3], 1
    %22 = vsyncpa %s21, 0
    %23 = vsyncpa [#allocation6], 0
    %s24 = scalar_lea.sflag [#allocation6], 1
    %25 = vsyncpa %s24, 0
    %26 = vsyncpa [#allocation4], 0
    %s27 = scalar_lea.sflag [#allocation4], 1
    %28 = vsyncpa %s27, 0
    loop: start=0, step=1, limit=4
    $region2: #{tpu_custom_call.1} parent=1 // loop_pre_header
      _
    $region3: #{tpu_custom_call.1} parent=1 // loop_header
      %s30 = sphi 0, %s34
      %p31 = scmp.ge.s32.totalorder %s30, 4
      %s40 = sphi 0, %s42
      %s43 = sphi 0, %s40
      %s44 = sphi 0, %s43
      %s60 = sphi 0, %s44
      %s66 = sphi 0, %s68
      %s69 = sphi 0, %s66
      %s70 = sphi 0, %s69
      %s86 = sphi 0, %s70
      %s92 = sphi 0, %s94
      %s95 = sphi 0, %s92
      %s96 = sphi 0, %s95
      %s112 = sphi 0, %s96
      %s118 = sphi 0, %s120
      %s121 = sphi 0, %s118
      %s122 = sphi 0, %s121
      %s138 = sphi 0, %s122
      %s142 = sphi 0, %s142
      %s144 = sphi 0, %s142
      %s145 = sphi 0, %s144
      %s159 = sphi 0, %s145
      %s163 = sphi 0, %s163
      %s165 = sphi 0, %s163
      %s166 = sphi 0, %s165
      %s180 = sphi 0, %s166
      %s184 = sphi 0, %s184
      %s186 = sphi 0, %s184
      %s187 = sphi 0, %s186
      %s201 = sphi 0, %s187
      %s205 = sphi 0, %s205
      %s207 = sphi 0, %s205
      %s208 = sphi 0, %s207
      %s222 = sphi 0, %s208
      %s226 = sphi 0, %s226
      %s228 = sphi 0, %s226
      %s229 = sphi 0, %s228
      %s243 = sphi 0, %s229
      %s247 = sphi 0, %s247
      %s249 = sphi 0, %s247
      %s250 = sphi 0, %s249
      %s264 = sphi 0, %s250
      %s268 = sphi 0, %s268
      %s270 = sphi 0, %s268
      %s271 = sphi 0, %s270
      %s285 = sphi 0, %s271
      %s289 = sphi 0, %s289
      %s291 = sphi 0, %s289
      %s292 = sphi 0, %s291
      %s306 = sphi 0, %s292
      %s310 = sphi 0, %s310
      %s312 = sphi 0, %s310
      %s313 = sphi 0, %s312
      %s327 = sphi 0, %s313
      %s331 = sphi 0, %s331
      %s333 = sphi 0, %s331
      %s334 = sphi 0, %s333
      %s348 = sphi 0, %s334
      %s352 = sphi 0, %s352
      %s354 = sphi 0, %s352
      %s355 = sphi 0, %s354
      %s369 = sphi 0, %s355
      %s375 = sphi 0, %s377
      %s378 = sphi 0, %s375
      %s379 = sphi 0, %s378
      %s395 = sphi 0, %s379
    $region4: #{tpu_custom_call.1} parent=1 // loop_header_branch
      %33 = sbr.rel (%p31) target = $region8
    $region5: #{tpu_custom_call.1} parent=1 // loop_body
      %s35 = ssub.s32 %s30, 1
      %s36 = ssub.s32 %s30, 2
      %s37 = sadd.s32 %s30, 1
      %s38 = ssub.s32 %s30, %s37
      %p39 = scmp.eq.s32.totalorder %s38, 0
      %s41 = sadd.s32 %s40, 1
      %s42 = scalar_select %p39, %s40, %s41
      %p45 = pneg %p39
      %p46 = scmp.eq.s32.totalorder %s30, 1
      %p47 = por %p45, %p46
      %p48 = scmp.ne.s32.totalorder %s40, %s43
      %p49 = scmp.eq.s32.totalorder %s30, 0
      %p50 = por %p48, %p49
      %p51 = scmp.ne.s32.totalorder %s40, %s43
      %p52 = scmp.eq.s32.totalorder %s35, 1
      %p53 = por %p51, %p52
      %p54 = scmp.ne.s32.totalorder %s43, %s44
      %p55 = scmp.eq.s32.totalorder %s35, 0
      %p56 = por %p54, %p55
      %p57 = scmp.ne.s32.totalorder %s43, %s44
      %p58 = scmp.eq.s32.totalorder %s36, 1
      %p59 = por %p57, %p58
      %p61 = scmp.ne.s32.totalorder %s44, %s60
      %p62 = scmp.eq.s32.totalorder %s36, 0
      %p63 = por %p61, %p62
      %s64 = ssub.s32 %s30, %s37
      %p65 = scmp.eq.s32.totalorder %s64, 0
      %s67 = sadd.s32 %s66, 1
      %s68 = scalar_select %p65, %s66, %s67
      %p71 = pneg %p65
      %p72 = scmp.eq.s32.totalorder %s30, 1
      %p73 = por %p71, %p72
      %p74 = scmp.ne.s32.totalorder %s66, %s69
      %p75 = scmp.eq.s32.totalorder %s30, 0
      %p76 = por %p74, %p75
      %p77 = scmp.ne.s32.totalorder %s66, %s69
      %p78 = scmp.eq.s32.totalorder %s35, 1
      %p79 = por %p77, %p78
      %p80 = scmp.ne.s32.totalorder %s69, %s70
      %p81 = scmp.eq.s32.totalorder %s35, 0
      %p82 = por %p80, %p81
      %p83 = scmp.ne.s32.totalorder %s69, %s70
      %p84 = scmp.eq.s32.totalorder %s36, 1
      %p85 = por %p83, %p84
      %p87 = scmp.ne.s32.totalorder %s70, %s86
      %p88 = scmp.eq.s32.totalorder %s36, 0
      %p89 = por %p87, %p88
      %s90 = ssub.s32 %s30, %s37
      %p91 = scmp.eq.s32.totalorder %s90, 0
      %s93 = sadd.s32 %s92, 1
      %s94 = scalar_select %p91, %s92, %s93
      %p97 = pneg %p91
      %p98 = scmp.eq.s32.totalorder %s30, 1
      %p99 = por %p97, %p98
      %p100 = scmp.ne.s32.totalorder %s92, %s95
      %p101 = scmp.eq.s32.totalorder %s30, 0
      %p102 = por %p100, %p101
      %p103 = scmp.ne.s32.totalorder %s92, %s95
      %p104 = scmp.eq.s32.totalorder %s35, 1
      %p105 = por %p103, %p104
      %p106 = scmp.ne.s32.totalorder %s95, %s96
      %p107 = scmp.eq.s32.totalorder %s35, 0
      %p108 = por %p106, %p107
      %p109 = scmp.ne.s32.totalorder %s95, %s96
      %p110 = scmp.eq.s32.totalorder %s36, 1
      %p111 = por %p109, %p110
      %p113 = scmp.ne.s32.totalorder %s96, %s112
      %p114 = scmp.eq.s32.totalorder %s36, 0
      %p115 = por %p113, %p114
      %s116 = ssub.s32 %s30, %s37
      %p117 = scmp.eq.s32.totalorder %s116, 0
      %s119 = sadd.s32 %s118, 1
      %s120 = scalar_select %p117, %s118, %s119
      %p123 = pneg %p117
      %p124 = scmp.eq.s32.totalorder %s30, 1
      %p125 = por %p123, %p124
      %p126 = scmp.ne.s32.totalorder %s118, %s121
      %p127 = scmp.eq.s32.totalorder %s30, 0
      %p128 = por %p126, %p127
      %p129 = scmp.ne.s32.totalorder %s118, %s121
      %p130 = scmp.eq.s32.totalorder %s35, 1
      %p131 = por %p129, %p130
      %p132 = scmp.ne.s32.totalorder %s121, %s122
      %p133 = scmp.eq.s32.totalorder %s35, 0
      %p134 = por %p132, %p133
      %p135 = scmp.ne.s32.totalorder %s121, %s122
      %p136 = scmp.eq.s32.totalorder %s36, 1
      %p137 = por %p135, %p136
      %p139 = scmp.ne.s32.totalorder %s122, %s138
      %p140 = scmp.eq.s32.totalorder %s36, 0
      %p141 = por %p139, %p140
      %s143 = sadd.s32 %s142, 1
      %p146 = scmp.eq.s32.totalorder %s30, 1
      %p147 = scmp.ne.s32.totalorder %s142, %s144
      %p148 = scmp.eq.s32.totalorder %s30, 0
      %p149 = por %p147, %p148
      %p150 = scmp.ne.s32.totalorder %s142, %s144
      %p151 = scmp.eq.s32.totalorder %s35, 1
      %p152 = por %p150, %p151
      %p153 = scmp.ne.s32.totalorder %s144, %s145
      %p154 = scmp.eq.s32.totalorder %s35, 0
      %p155 = por %p153, %p154
      %p156 = scmp.ne.s32.totalorder %s144, %s145
      %p157 = scmp.eq.s32.totalorder %s36, 1
      %p158 = por %p156, %p157
      %p160 = scmp.ne.s32.totalorder %s145, %s159
      %p161 = scmp.eq.s32.totalorder %s36, 0
      %p162 = por %p160, %p161
      %s164 = sadd.s32 %s163, 1
      %p167 = scmp.eq.s32.totalorder %s30, 1
      %p168 = scmp.ne.s32.totalorder %s163, %s165
      %p169 = scmp.eq.s32.totalorder %s30, 0
      %p170 = por %p168, %p169
      %p171 = scmp.ne.s32.totalorder %s163, %s165
      %p172 = scmp.eq.s32.totalorder %s35, 1
      %p173 = por %p171, %p172
      %p174 = scmp.ne.s32.totalorder %s165, %s166
      %p175 = scmp.eq.s32.totalorder %s35, 0
      %p176 = por %p174, %p175
      %p177 = scmp.ne.s32.totalorder %s165, %s166
      %p178 = scmp.eq.s32.totalorder %s36, 1
      %p179 = por %p177, %p178
      %p181 = scmp.ne.s32.totalorder %s166, %s180
      %p182 = scmp.eq.s32.totalorder %s36, 0
      %p183 = por %p181, %p182
      %s185 = sadd.s32 %s184, 1
      %p188 = scmp.eq.s32.totalorder %s30, 1
      %p189 = scmp.ne.s32.totalorder %s184, %s186
      %p190 = scmp.eq.s32.totalorder %s30, 0
      %p191 = por %p189, %p190
      %p192 = scmp.ne.s32.totalorder %s184, %s186
      %p193 = scmp.eq.s32.totalorder %s35, 1
      %p194 = por %p192, %p193
      %p195 = scmp.ne.s32.totalorder %s186, %s187
      %p196 = scmp.eq.s32.totalorder %s35, 0
      %p197 = por %p195, %p196
      %p198 = scmp.ne.s32.totalorder %s186, %s187
      %p199 = scmp.eq.s32.totalorder %s36, 1
      %p200 = por %p198, %p199
      %p202 = scmp.ne.s32.totalorder %s187, %s201
      %p203 = scmp.eq.s32.totalorder %s36, 0
      %p204 = por %p202, %p203
      %s206 = sadd.s32 %s205, 1
      %p209 = scmp.eq.s32.totalorder %s30, 1
      %p210 = scmp.ne.s32.totalorder %s205, %s207
      %p211 = scmp.eq.s32.totalorder %s30, 0
      %p212 = por %p210, %p211
      %p213 = scmp.ne.s32.totalorder %s205, %s207
      %p214 = scmp.eq.s32.totalorder %s35, 1
      %p215 = por %p213, %p214
      %p216 = scmp.ne.s32.totalorder %s207, %s208
      %p217 = scmp.eq.s32.totalorder %s35, 0
      %p218 = por %p216, %p217
      %p219 = scmp.ne.s32.totalorder %s207, %s208
      %p220 = scmp.eq.s32.totalorder %s36, 1
      %p221 = por %p219, %p220
      %p223 = scmp.ne.s32.totalorder %s208, %s222
      %p224 = scmp.eq.s32.totalorder %s36, 0
      %p225 = por %p223, %p224
      %s227 = sadd.s32 %s226, 1
      %p230 = scmp.eq.s32.totalorder %s30, 1
      %p231 = scmp.ne.s32.totalorder %s226, %s228
      %p232 = scmp.eq.s32.totalorder %s30, 0
      %p233 = por %p231, %p232
      %p234 = scmp.ne.s32.totalorder %s226, %s228
      %p235 = scmp.eq.s32.totalorder %s35, 1
      %p236 = por %p234, %p235
      %p237 = scmp.ne.s32.totalorder %s228, %s229
      %p238 = scmp.eq.s32.totalorder %s35, 0
      %p239 = por %p237, %p238
      %p240 = scmp.ne.s32.totalorder %s228, %s229
      %p241 = scmp.eq.s32.totalorder %s36, 1
      %p242 = por %p240, %p241
      %p244 = scmp.ne.s32.totalorder %s229, %s243
      %p245 = scmp.eq.s32.totalorder %s36, 0
      %p246 = por %p244, %p245
      %s248 = sadd.s32 %s247, 1
      %p251 = scmp.eq.s32.totalorder %s30, 1
      %p252 = scmp.ne.s32.totalorder %s247, %s249
      %p253 = scmp.eq.s32.totalorder %s30, 0
      %p254 = por %p252, %p253
      %p255 = scmp.ne.s32.totalorder %s247, %s249
      %p256 = scmp.eq.s32.totalorder %s35, 1
      %p257 = por %p255, %p256
      %p258 = scmp.ne.s32.totalorder %s249, %s250
      %p259 = scmp.eq.s32.totalorder %s35, 0
      %p260 = por %p258, %p259
      %p261 = scmp.ne.s32.totalorder %s249, %s250
      %p262 = scmp.eq.s32.totalorder %s36, 1
      %p263 = por %p261, %p262
      %p265 = scmp.ne.s32.totalorder %s250, %s264
      %p266 = scmp.eq.s32.totalorder %s36, 0
      %p267 = por %p265, %p266
      %s269 = sadd.s32 %s268, 1
      %p272 = scmp.eq.s32.totalorder %s30, 1
      %p273 = scmp.ne.s32.totalorder %s268, %s270
      %p274 = scmp.eq.s32.totalorder %s30, 0
      %p275 = por %p273, %p274
      %p276 = scmp.ne.s32.totalorder %s268, %s270
      %p277 = scmp.eq.s32.totalorder %s35, 1
      %p278 = por %p276, %p277
      %p279 = scmp.ne.s32.totalorder %s270, %s271
      %p280 = scmp.eq.s32.totalorder %s35, 0
      %p281 = por %p279, %p280
      %p282 = scmp.ne.s32.totalorder %s270, %s271
      %p283 = scmp.eq.s32.totalorder %s36, 1
      %p284 = por %p282, %p283
      %p286 = scmp.ne.s32.totalorder %s271, %s285
      %p287 = scmp.eq.s32.totalorder %s36, 0
      %p288 = por %p286, %p287
      %s290 = sadd.s32 %s289, 1
      %p293 = scmp.eq.s32.totalorder %s30, 1
      %p294 = scmp.ne.s32.totalorder %s289, %s291
      %p295 = scmp.eq.s32.totalorder %s30, 0
      %p296 = por %p294, %p295
      %p297 = scmp.ne.s32.totalorder %s289, %s291
      %p298 = scmp.eq.s32.totalorder %s35, 1
      %p299 = por %p297, %p298
      %p300 = scmp.ne.s32.totalorder %s291, %s292
      %p301 = scmp.eq.s32.totalorder %s35, 0
      %p302 = por %p300, %p301
      %p303 = scmp.ne.s32.totalorder %s291, %s292
      %p304 = scmp.eq.s32.totalorder %s36, 1
      %p305 = por %p303, %p304
      %p307 = scmp.ne.s32.totalorder %s292, %s306
      %p308 = scmp.eq.s32.totalorder %s36, 0
      %p309 = por %p307, %p308
      %s311 = sadd.s32 %s310, 1
      %p314 = scmp.eq.s32.totalorder %s30, 1
      %p315 = scmp.ne.s32.totalorder %s310, %s312
      %p316 = scmp.eq.s32.totalorder %s30, 0
      %p317 = por %p315, %p316
      %p318 = scmp.ne.s32.totalorder %s310, %s312
      %p319 = scmp.eq.s32.totalorder %s35, 1
      %p320 = por %p318, %p319
      %p321 = scmp.ne.s32.totalorder %s312, %s313
      %p322 = scmp.eq.s32.totalorder %s35, 0
      %p323 = por %p321, %p322
      %p324 = scmp.ne.s32.totalorder %s312, %s313
      %p325 = scmp.eq.s32.totalorder %s36, 1
      %p326 = por %p324, %p325
      %p328 = scmp.ne.s32.totalorder %s313, %s327
      %p329 = scmp.eq.s32.totalorder %s36, 0
      %p330 = por %p328, %p329
      %s332 = sadd.s32 %s331, 1
      %p335 = scmp.eq.s32.totalorder %s30, 1
      %p336 = scmp.ne.s32.totalorder %s331, %s333
      %p337 = scmp.eq.s32.totalorder %s30, 0
      %p338 = por %p336, %p337
      %p339 = scmp.ne.s32.totalorder %s331, %s333
      %p340 = scmp.eq.s32.totalorder %s35, 1
      %p341 = por %p339, %p340
      %p342 = scmp.ne.s32.totalorder %s333, %s334
      %p343 = scmp.eq.s32.totalorder %s35, 0
      %p344 = por %p342, %p343
      %p345 = scmp.ne.s32.totalorder %s333, %s334
      %p346 = scmp.eq.s32.totalorder %s36, 1
      %p347 = por %p345, %p346
      %p349 = scmp.ne.s32.totalorder %s334, %s348
      %p350 = scmp.eq.s32.totalorder %s36, 0
      %p351 = por %p349, %p350
      %s353 = sadd.s32 %s352, 1
      %p356 = scmp.eq.s32.totalorder %s30, 1
      %p357 = scmp.ne.s32.totalorder %s352, %s354
      %p358 = scmp.eq.s32.totalorder %s30, 0
      %p359 = por %p357, %p358
      %p360 = scmp.ne.s32.totalorder %s352, %s354
      %p361 = scmp.eq.s32.totalorder %s35, 1
      %p362 = por %p360, %p361
      %p363 = scmp.ne.s32.totalorder %s354, %s355
      %p364 = scmp.eq.s32.totalorder %s35, 0
      %p365 = por %p363, %p364
      %p366 = scmp.ne.s32.totalorder %s354, %s355
      %p367 = scmp.eq.s32.totalorder %s36, 1
      %p368 = por %p366, %p367
      %p370 = scmp.ne.s32.totalorder %s355, %s369
      %p371 = scmp.eq.s32.totalorder %s36, 0
      %p372 = por %p370, %p371
      %s373 = ssub.s32 %s30, %s37
      %p374 = scmp.eq.s32.totalorder %s373, 0
      %s376 = sadd.s32 %s375, 1
      %s377 = scalar_select %p374, %s375, %s376
      %p380 = pneg %p374
      %p381 = scmp.eq.s32.totalorder %s30, 1
      %p382 = por %p380, %p381
      %p383 = scmp.ne.s32.totalorder %s375, %s378
      %p384 = scmp.eq.s32.totalorder %s30, 0
      %p385 = por %p383, %p384
      %p386 = scmp.ne.s32.totalorder %s375, %s378
      %p387 = scmp.eq.s32.totalorder %s35, 1
      %p388 = por %p386, %p387
      %p389 = scmp.ne.s32.totalorder %s378, %s379
      %p390 = scmp.eq.s32.totalorder %s35, 0
      %p391 = por %p389, %p390
      %p392 = scmp.ne.s32.totalorder %s378, %s379
      %p393 = scmp.eq.s32.totalorder %s36, 1
      %p394 = por %p392, %p393
      %p396 = scmp.ne.s32.totalorder %s379, %s395
      %p397 = scmp.eq.s32.totalorder %s36, 0
      %p398 = por %p396, %p397
      %p399 = scmp.le.s32.totalorder 1, %s30
      %p400 = scmp.lt.s32.totalorder %s30, 3
      %p401 = pnand %p399, %p400
      %p402 = pneg %p401
      // Predicated region
      $region9: #{tpu_custom_call.1} parent=5 // pred_check
        _
      $region10: #{tpu_custom_call.1} parent=5 // pred_check_branch
        %404 = sbr.rel (%p401) target = $region12
      $region11: #{tpu_custom_call.1} parent=5 // pred_region
        %s405 = ssub.s32 %s30, 1
        // Predicated region
        $region13: #{tpu_custom_call.1} parent=11 // pred_check
          %p406 = pneg %p155
        $region14: #{tpu_custom_call.1} parent=11 // pred_check_branch
          %408 = sbr.rel (%p406) target = $region16
        $region15: #{tpu_custom_call.1} parent=11 // pred_region
          _
        $region16: #{tpu_custom_call.1} parent=11 // pred_fallthru
          _
        // Predicated region
        $region17: #{tpu_custom_call.1} parent=11 // pred_check
          %p409 = pneg %p176
        $region18: #{tpu_custom_call.1} parent=11 // pred_check_branch
          %411 = sbr.rel (%p409) target = $region20
        $region19: #{tpu_custom_call.1} parent=11 // pred_region
          _
        $region20: #{tpu_custom_call.1} parent=11 // pred_fallthru
          _
        // Predicated region
        $region21: #{tpu_custom_call.1} parent=11 // pred_check
          %p412 = pneg %p197
        $region22: #{tpu_custom_call.1} parent=11 // pred_check_branch
          %414 = sbr.rel (%p412) target = $region24
        $region23: #{tpu_custom_call.1} parent=11 // pred_region
          _
        $region24: #{tpu_custom_call.1} parent=11 // pred_fallthru
          _
        // Predicated region
        $region25: #{tpu_custom_call.1} parent=11 // pred_check
          %p415 = pneg %p218
        $region26: #{tpu_custom_call.1} parent=11 // pred_check_branch
          %417 = sbr.rel (%p415) target = $region28
        $region27: #{tpu_custom_call.1} parent=11 // pred_region
          _
        $region28: #{tpu_custom_call.1} parent=11 // pred_fallthru
          _
        // Predicated region
        $region29: #{tpu_custom_call.1} parent=11 // pred_check
          %p418 = pneg %p239
        $region30: #{tpu_custom_call.1} parent=11 // pred_check_branch
          %420 = sbr.rel (%p418) target = $region32
        $region31: #{tpu_custom_call.1} parent=11 // pred_region
          _
        $region32: #{tpu_custom_call.1} parent=11 // pred_fallthru
          _
        // Predicated region
        $region33: #{tpu_custom_call.1} parent=11 // pred_check
          %p421 = pneg %p260
        $region34: #{tpu_custom_call.1} parent=11 // pred_check_branch
          %423 = sbr.rel (%p421) target = $region36
        $region35: #{tpu_custom_call.1} parent=11 // pred_region
          _
        $region36: #{tpu_custom_call.1} parent=11 // pred_fallthru
          _
        // Predicated region
        $region37: #{tpu_custom_call.1} parent=11 // pred_check
          %p424 = pneg %p281
        $region38: #{tpu_custom_call.1} parent=11 // pred_check_branch
          %426 = sbr.rel (%p424) target = $region40
        $region39: #{tpu_custom_call.1} parent=11 // pred_region
          _
        $region40: #{tpu_custom_call.1} parent=11 // pred_fallthru
          _
        // Predicated region
        $region41: #{tpu_custom_call.1} parent=11 // pred_check
          %p427 = pneg %p302
        $region42: #{tpu_custom_call.1} parent=11 // pred_check_branch
          %429 = sbr.rel (%p427) target = $region44
        $region43: #{tpu_custom_call.1} parent=11 // pred_region
          _
        $region44: #{tpu_custom_call.1} parent=11 // pred_fallthru
          _
        // Predicated region
        $region45: #{tpu_custom_call.1} parent=11 // pred_check
          %p430 = pneg %p323
        $region46: #{tpu_custom_call.1} parent=11 // pred_check_branch
          %432 = sbr.rel (%p430) target = $region48
        $region47: #{tpu_custom_call.1} parent=11 // pred_region
          _
        $region48: #{tpu_custom_call.1} parent=11 // pred_fallthru
          _
        // Predicated region
        $region49: #{tpu_custom_call.1} parent=11 // pred_check
          %p433 = pneg %p344
        $region50: #{tpu_custom_call.1} parent=11 // pred_check_branch
          %435 = sbr.rel (%p433) target = $region52
        $region51: #{tpu_custom_call.1} parent=11 // pred_region
          _
        $region52: #{tpu_custom_call.1} parent=11 // pred_fallthru
          _
        // Predicated region
        $region53: #{tpu_custom_call.1} parent=11 // pred_check
          %p436 = pneg %p365
        $region54: #{tpu_custom_call.1} parent=11 // pred_check_branch
          %438 = sbr.rel (%p436) target = $region56
        $region55: #{tpu_custom_call.1} parent=11 // pred_region
          _
        $region56: #{tpu_custom_call.1} parent=11 // pred_fallthru
          _
      $region12: #{tpu_custom_call.1} parent=5 // pred_fallthru
        _
      %p439 = scmp.lt.s32.totalorder %s30, 2
      // Predicated region
      $region57: #{tpu_custom_call.1} parent=5 // pred_check
        %p440 = pneg %p439
      $region58: #{tpu_custom_call.1} parent=5 // pred_check_branch
        %442 = sbr.rel (%p440) target = $region60
      $region59: #{tpu_custom_call.1} parent=5 // pred_region
        // Predicated region
        $region61: #{tpu_custom_call.1} parent=59 // pred_check
          %p443 = pneg %p50
        $region62: #{tpu_custom_call.1} parent=59 // pred_check_branch
          %445 = sbr.rel (%p443) target = $region64
        $region63: #{tpu_custom_call.1} parent=59 // pred_region
          %s446 = sand.u32 %s40, 1
          %s447 = scalar_lea.sflag [#allocation3], %s446
          %s448 = sand.u32 %s40, 1
          %s449 = smul.addr %s448, 64
          %s450 = scalar_lea.vmem [#allocation2], %s449
          %s451 = smul.u32 8, %s30
          %s453 = ssub.s32 1024, 1024
          %454 = vsyncadd %s447, %s453
          %s455 = smul.addr %s451, 128
          %s456 = scalar_lea.hbm %s0, %s455
          %s457 = sshll.u32 %s450, 4
          %s458 = int_to_ptr.vmem [resolvable:$true] %s457
          %463 = dma.hbm_to_vmem [thread:$0]  %s456, 1024, %s458, %s447, 128, 128, 8
        $region64: #{tpu_custom_call.1} parent=59 // pred_fallthru
          _
        // Predicated region
        $region65: #{tpu_custom_call.1} parent=59 // pred_check
          %p464 = pneg %p76
        $region66: #{tpu_custom_call.1} parent=59 // pred_check_branch
          %466 = sbr.rel (%p464) target = $region68
        $region67: #{tpu_custom_call.1} parent=59 // pred_region
          %s467 = sand.u32 %s66, 1
          %s468 = scalar_lea.sflag [#allocation6], %s467
          %s469 = sand.u32 %s66, 1
          %s470 = smul.addr %s469, 64
          %s471 = scalar_lea.vmem [#allocation5], %s470
          %s472 = smul.u32 8, %s30
          %s474 = ssub.s32 1024, 1024
          %475 = vsyncadd %s468, %s474
          %s476 = smul.addr %s472, 128
          %s477 = scalar_lea.hbm %s1, %s476
          %s478 = sshll.u32 %s471, 4
          %s479 = int_to_ptr.vmem [resolvable:$true] %s478
          %484 = dma.hbm_to_vmem [thread:$0]  %s477, 1024, %s479, %s468, 128, 128, 8
        $region68: #{tpu_custom_call.1} parent=59 // pred_fallthru
          _
        // Predicated region
        $region69: #{tpu_custom_call.1} parent=59 // pred_check
          %p485 = pneg %p102
        $region70: #{tpu_custom_call.1} parent=59 // pred_check_branch
          %487 = sbr.rel (%p485) target = $region72
        $region71: #{tpu_custom_call.1} parent=59 // pred_region
          %p488 = scmp.lt.s32.totalorder %s30, 1
          %s489 = scalar_select %p488, %s30, 1
          %s490 = smul.addr %s489, 8
          %s491 = scalar_lea.vmem %s2, %s490
        $region72: #{tpu_custom_call.1} parent=59 // pred_fallthru
          _
        // Predicated region
        $region73: #{tpu_custom_call.1} parent=59 // pred_check
          %p492 = pneg %p128
        $region74: #{tpu_custom_call.1} parent=59 // pred_check_branch
          %494 = sbr.rel (%p492) target = $region76
        $region75: #{tpu_custom_call.1} parent=59 // pred_region
          %p495 = scmp.lt.s32.totalorder %s30, 1
          %s496 = scalar_select %p495, %s30, 1
          %s497 = smul.addr %s496, 8
          %s498 = scalar_lea.vmem %s3, %s497
        $region76: #{tpu_custom_call.1} parent=59 // pred_fallthru
          _
      $region60: #{tpu_custom_call.1} parent=5 // pred_fallthru
        _
      %p499 = scmp.le.s32.totalorder 1, %s30
      %p500 = scmp.lt.s32.totalorder %s30, 3
      %p501 = pnand %p499, %p500
      %p502 = pneg %p501
      // Predicated region
      $region77: #{tpu_custom_call.1} parent=5 // pred_check
        _
      $region78: #{tpu_custom_call.1} parent=5 // pred_check_branch
        %504 = sbr.rel (%p501) target = $region80
      $region79: #{tpu_custom_call.1} parent=5 // pred_region
        %s505 = ssub.s32 %s30, 1
        %s506 = sand.u32 %s43, 1
        %s507 = scalar_lea.sflag [#allocation3], %s506
        %s508 = sand.u32 %s43, 1
        %s509 = smul.addr %s508, 64
        %s510 = scalar_lea.vmem [#allocation2], %s509
        // Predicated region
        $region81: #{tpu_custom_call.1} parent=79 // pred_check
          %p511 = pneg %p56
        $region82: #{tpu_custom_call.1} parent=79 // pred_check_branch
          %513 = sbr.rel (%p511) target = $region84
        $region83: #{tpu_custom_call.1} parent=79 // pred_region
          %514 = dma.done %s507, 1024
        $region84: #{tpu_custom_call.1} parent=79 // pred_fallthru
          _
        %s515 = sand.u32 %s69, 1
        %s516 = scalar_lea.sflag [#allocation6], %s515
        %s517 = sand.u32 %s69, 1
        %s518 = smul.addr %s517, 64
        %s519 = scalar_lea.vmem [#allocation5], %s518
        // Predicated region
        $region85: #{tpu_custom_call.1} parent=79 // pred_check
          %p520 = pneg %p82
        $region86: #{tpu_custom_call.1} parent=79 // pred_check_branch
          %522 = sbr.rel (%p520) target = $region88
        $region87: #{tpu_custom_call.1} parent=79 // pred_region
          %523 = dma.done %s516, 1024
        $region88: #{tpu_custom_call.1} parent=79 // pred_fallthru
          _
        %s524 = sand.u32 %s43, 1
        %s525 = scalar_lea.sflag [#allocation3], %s524
        %s526 = sand.u32 %s43, 1
        %s527 = smul.addr %s526, 64
        %s528 = scalar_lea.vmem [#allocation2], %s527
        %p529 = pneg %p56
        %p530 = pneg %p53
        %s531 = sand.u32 %s69, 1
        %s532 = scalar_lea.sflag [#allocation6], %s531
        %s533 = sand.u32 %s69, 1
        %s534 = smul.addr %s533, 64
        %s535 = scalar_lea.vmem [#allocation5], %s534
        %p536 = pneg %p82
        %p537 = pneg %p79
        %p538 = scmp.lt.s32.totalorder %s35, 1
        %s539 = scalar_select %p538, %s35, 1
        %s540 = smul.addr %s539, 8
        %s541 = scalar_lea.vmem %s2, %s540
        %p542 = pneg %p108
        %p543 = pneg %p105
        %p544 = scmp.lt.s32.totalorder %s35, 1
        %s545 = scalar_select %p544, %s35, 1
        %s546 = smul.addr %s545, 8
        %s547 = scalar_lea.vmem %s3, %s546
        %p548 = pneg %p134
        %p549 = pneg %p131
        %p550 = pneg %p155
        %p551 = pneg %p152
        %p552 = pneg %p176
        %p553 = pneg %p173
        %p554 = pneg %p197
        %p555 = pneg %p194
        %p556 = pneg %p218
        %p557 = pneg %p215
        %p558 = pneg %p239
        %p559 = pneg %p236
        %p560 = pneg %p260
        %p561 = pneg %p257
        %p562 = pneg %p281
        %p563 = pneg %p278
        %p564 = pneg %p302
        %p565 = pneg %p299
        %p566 = pneg %p323
        %p567 = pneg %p320
        %p568 = pneg %p344
        %p569 = pneg %p341
        %p570 = pneg %p365
        %p571 = pneg %p362
        %p572 = pneg %p391
        %p573 = pneg %p388
        %s574 = sand.u32 %s378, 1
        %s575 = scalar_lea.sflag [#allocation4], %s574
        %s576 = sand.u32 %s378, 1
        %s577 = smul.addr %s576, 8
        %s578 = scalar_lea.vmem [#allocation7], %s577
        %s579 = smul.u32 8, %s35
        %s580 = smul.u32 8, %s35
        %p581 = scmp.lt.s32.totalorder %s35, 1
        %s582 = scalar_select %p581, %s35, 1
        %s583 = smul.addr %s582, 8
        %s584 = scalar_lea.vmem %s2, %s583
        %p585 = scmp.lt.s32.totalorder %s35, 1
        %s586 = scalar_select %p585, %s35, 1
        %s587 = smul.addr %s586, 8
        %s588 = scalar_lea.vmem %s3, %s587
        %v589 = vld [vmem:[%s510] sm:$0xff]
        %v590 = vld [vmem:[%s510 + $0x8] sm:$0xff]
        %v591 = vld [vmem:[%s510 + $0x10] sm:$0xff]
        %v592 = vld [vmem:[%s510 + $0x18] sm:$0xff]
        %v593 = vld [vmem:[%s510 + $0x20] sm:$0xff]
        %v594 = vld [vmem:[%s510 + $0x28] sm:$0xff]
        %v595 = vld [vmem:[%s510 + $0x30] sm:$0xff]
        %v596 = vld [vmem:[%s510 + $0x38] sm:$0xff]
        %v597 = vld [vmem:[%s519] sm:$0xff]
        %v598 = vld [vmem:[%s519 + $0x8] sm:$0xff]
        %v599 = vld [vmem:[%s519 + $0x10] sm:$0xff]
        %v600 = vld [vmem:[%s519 + $0x18] sm:$0xff]
        %v601 = vld [vmem:[%s519 + $0x20] sm:$0xff]
        %v602 = vld [vmem:[%s519 + $0x28] sm:$0xff]
        %v603 = vld [vmem:[%s519 + $0x30] sm:$0xff]
        %v604 = vld [vmem:[%s519 + $0x38] sm:$0xff]
        %v605 = vld [vmem:[%s584] sm:$0xff]
        %v606 = vld [vmem:[%s588] sm:$0xff]
        %v607 = vsub.f32 %v605, 1.0
        %v608 = vmul.f32 %v607, 1e+30
        %v609 = vlaneseq
        %v610 = vshrl.u32 %v609, 7
        %v611 = vsub.s32 0, %v610
        %v612 = vrot.slane %v608, %v611
        %614 = vbcast.lane.b32.xlu0 %v612, 256
        %v615 = vpop.permute.xlu0 %614
        %v616 = vlaneseq
        %v617 = vshrl.u32 %v616, 7
        %v618 = vsub.s32 1, %v617
        %v619 = vrot.slane %v608, %v618
        %621 = vbcast.lane.b32.xlu0 %v619, 256
        %v622 = vpop.permute.xlu0 %621
        %v623 = vlaneseq
        %v624 = vshrl.u32 %v623, 7
        %v625 = vsub.s32 2, %v624
        %v626 = vrot.slane %v608, %v625
        %628 = vbcast.lane.b32.xlu0 %v626, 256
        %v629 = vpop.permute.xlu0 %628
        %v630 = vlaneseq
        %v631 = vshrl.u32 %v630, 7
        %v632 = vsub.s32 3, %v631
        %v633 = vrot.slane %v608, %v632
        %635 = vbcast.lane.b32.xlu0 %v633, 256
        %v636 = vpop.permute.xlu0 %635
        %v637 = vlaneseq
        %v638 = vshrl.u32 %v637, 7
        %v639 = vsub.s32 4, %v638
        %v640 = vrot.slane %v608, %v639
        %642 = vbcast.lane.b32.xlu0 %v640, 256
        %v643 = vpop.permute.xlu0 %642
        %v644 = vlaneseq
        %v645 = vshrl.u32 %v644, 7
        %v646 = vsub.s32 5, %v645
        %v647 = vrot.slane %v608, %v646
        %649 = vbcast.lane.b32.xlu0 %v647, 256
        %v650 = vpop.permute.xlu0 %649
        %v651 = vlaneseq
        %v652 = vshrl.u32 %v651, 7
        %v653 = vsub.s32 6, %v652
        %v654 = vrot.slane %v608, %v653
        %656 = vbcast.lane.b32.xlu0 %v654, 256
        %v657 = vpop.permute.xlu0 %656
        %v658 = vlaneseq
        %v659 = vshrl.u32 %v658, 7
        %v660 = vsub.s32 7, %v659
        %v661 = vrot.slane %v608, %v660
        %663 = vbcast.lane.b32.xlu0 %v661, 256
        %v664 = vpop.permute.xlu0 %663
        %v665 = vsub.f32 %v606, 1.0
        %v666 = vmul.f32 %v665, 1e+30
        %v667 = vlaneseq
        %v668 = vshrl.u32 %v667, 7
        %v669 = vsub.s32 0, %v668
        %v670 = vrot.slane %v666, %v669
        %672 = vbcast.lane.b32.xlu0 %v670, 256
        %v673 = vpop.permute.xlu0 %672
        %v674 = vlaneseq
        %v675 = vshrl.u32 %v674, 7
        %v676 = vsub.s32 1, %v675
        %v677 = vrot.slane %v666, %v676
        %679 = vbcast.lane.b32.xlu0 %v677, 256
        %v680 = vpop.permute.xlu0 %679
        %v681 = vlaneseq
        %v682 = vshrl.u32 %v681, 7
        %v683 = vsub.s32 2, %v682
        %v684 = vrot.slane %v666, %v683
        %686 = vbcast.lane.b32.xlu0 %v684, 256
        %v687 = vpop.permute.xlu0 %686
        %v688 = vlaneseq
        %v689 = vshrl.u32 %v688, 7
        %v690 = vsub.s32 3, %v689
        %v691 = vrot.slane %v666, %v690
        %693 = vbcast.lane.b32.xlu0 %v691, 256
        %v694 = vpop.permute.xlu0 %693
        %v695 = vlaneseq
        %v696 = vshrl.u32 %v695, 7
        %v697 = vsub.s32 4, %v696
        %v698 = vrot.slane %v666, %v697
        %700 = vbcast.lane.b32.xlu0 %v698, 256
        %v701 = vpop.permute.xlu0 %700
        %v702 = vlaneseq
        %v703 = vshrl.u32 %v702, 7
        %v704 = vsub.s32 5, %v703
        %v705 = vrot.slane %v666, %v704
        %707 = vbcast.lane.b32.xlu0 %v705, 256
        %v708 = vpop.permute.xlu0 %707
        %v709 = vlaneseq
        %v710 = vshrl.u32 %v709, 7
        %v711 = vsub.s32 6, %v710
        %v712 = vrot.slane %v666, %v711
        %714 = vbcast.lane.b32.xlu0 %v712, 256
        %v715 = vpop.permute.xlu0 %714
        %v716 = vlaneseq
        %v717 = vshrl.u32 %v716, 7
        %v718 = vsub.s32 7, %v717
        %v719 = vrot.slane %v666, %v718
        %721 = vbcast.lane.b32.xlu0 %v719, 256
        %v722 = vpop.permute.xlu0 %721
        %v723 = vadd.f32 %v589, %v615
        %v724 = vadd.f32 %v590, %v622
        %v725 = vadd.f32 %v591, %v629
        %v726 = vadd.f32 %v592, %v636
        %v727 = vadd.f32 %v593, %v643
        %v728 = vadd.f32 %v594, %v650
        %v729 = vadd.f32 %v595, %v657
        %v730 = vadd.f32 %v596, %v664
        %vm731 = vcmask 261120
        %v732 = vsel %vm731, %v723, -inf
        %v733 = vrot.slane %v732, 4
        %v734 = vmax.f32 %v732, %v733
        %v735 = vrot.slane %v734, 2
        %v736 = vmax.f32 %v734, %v735
        %v737 = vrot.slane %v736, 1
        %v738 = vmax.f32 %v736, %v737
        %v739 = vsel %vm731, %v724, -inf
        %v740 = vrot.slane %v739, 4
        %v741 = vmax.f32 %v739, %v740
        %v742 = vrot.slane %v741, 2
        %v743 = vmax.f32 %v741, %v742
        %v744 = vrot.slane %v743, 1
        %v745 = vmax.f32 %v743, %v744
        %v746 = vsel %vm731, %v725, -inf
        %v747 = vrot.slane %v746, 4
        %v748 = vmax.f32 %v746, %v747
        %v749 = vrot.slane %v748, 2
        %v750 = vmax.f32 %v748, %v749
        %v751 = vrot.slane %v750, 1
        %v752 = vmax.f32 %v750, %v751
        %v753 = vsel %vm731, %v726, -inf
        %v754 = vrot.slane %v753, 4
        %v755 = vmax.f32 %v753, %v754
        %v756 = vrot.slane %v755, 2
        %v757 = vmax.f32 %v755, %v756
        %v758 = vrot.slane %v757, 1
        %v759 = vmax.f32 %v757, %v758
        %v760 = vsel %vm731, %v727, -inf
        %v761 = vrot.slane %v760, 4
        %v762 = vmax.f32 %v760, %v761
        %v763 = vrot.slane %v762, 2
        %v764 = vmax.f32 %v762, %v763
        %v765 = vrot.slane %v764, 1
        %v766 = vmax.f32 %v764, %v765
        %v767 = vsel %vm731, %v728, -inf
        %v768 = vrot.slane %v767, 4
        %v769 = vmax.f32 %v767, %v768
        %v770 = vrot.slane %v769, 2
        %v771 = vmax.f32 %v769, %v770
        %v772 = vrot.slane %v771, 1
        %v773 = vmax.f32 %v771, %v772
        %v774 = vsel %vm731, %v729, -inf
        %v775 = vrot.slane %v774, 4
        %v776 = vmax.f32 %v774, %v775
        %v777 = vrot.slane %v776, 2
        %v778 = vmax.f32 %v776, %v777
        %v779 = vrot.slane %v778, 1
        %v780 = vmax.f32 %v778, %v779
        %v781 = vsel %vm731, %v730, -inf
        %v782 = vrot.slane %v781, 4
        %v783 = vmax.f32 %v781, %v782
        %v784 = vrot.slane %v783, 2
        %v785 = vmax.f32 %v783, %v784
        %v786 = vrot.slane %v785, 1
        %v787 = vmax.f32 %v785, %v786
        %v788 = vld [vmem:[%s4] sm:$0xff]
        %v789 = vld [vmem:[%s4 + $0x8] sm:$0xff]
        %vm790 = vcmask 130048
        %v792 = vsel %vm790, %v597, 0
        %v795 = vsel %vm790, %v598, 0
        %v798 = vsel %vm790, %v599, 0
        %v801 = vsel %vm790, %v600, 0
        %v804 = vsel %vm790, %v601, 0
        %v807 = vsel %vm790, %v602, 0
        %v810 = vsel %vm790, %v603, 0
        %v813 = vsel %vm790, %v604, 0
        %815 = vmatprep.subr.mxu0 0.0
        %816 = vmatpush1.msra.mxu0 %v788
        %817 = vmatprep.subr.mxu0 0.0
        %818 = vmatpush1.msra.mxu0 %v789
        %819 = vmatprep.subr.mxu0 0.0
        %820 = vmatpush1.msra.mxu0 0.0
        %821 = vmatprep.subr.mxu0 0.0
        %822 = vmatpush1.msra.mxu0 0.0
        %823 = vmatprep.subr.mxu0 0.0
        %824 = vmatpush1.msra.mxu0 0.0
        %825 = vmatprep.subr.mxu0 0.0
        %826 = vmatpush1.msra.mxu0 0.0
        %827 = vmatprep.subr.mxu0 0.0
        %828 = vmatpush1.msra.mxu0 0.0
        %829 = vmatprep.subr.mxu0 0.0
        %830 = vmatpush1.msra.mxu0 0.0
        %831 = vmatprep.subr.mxu0 0.0
        %832 = vmatpush1.msra.mxu0 0.0
        %833 = vmatprep.subr.mxu0 0.0
        %834 = vmatpush1.msra.mxu0 0.0
        %835 = vmatprep.subr.mxu0 0.0
        %836 = vmatpush1.msra.mxu0 0.0
        %837 = vmatprep.subr.mxu0 0.0
        %838 = vmatpush1.msra.mxu0 0.0
        %839 = vmatprep.subr.mxu0 0.0
        %840 = vmatpush1.msra.mxu0 0.0
        %841 = vmatprep.subr.mxu0 0.0
        %842 = vmatpush1.msra.mxu0 0.0
        %843 = vmatprep.subr.mxu0 0.0
        %844 = vmatpush1.msra.mxu0 0.0
        %845 = vmatprep.subr.mxu0 0.0
        %846 = vmatpush1.msra.mxu0 0.0
        %847 = vmatprep.subr.mxu0 0.0
        %848 = vmatpush1.msra.mxu0 0.0
        %849 = vmatprep.subr.mxu0 0.0
        %850 = vmatpush1.msra.mxu0 0.0
        %851 = vmatprep.subr.mxu0 0.0
        %852 = vmatpush1.msra.mxu0 0.0
        %853 = vmatprep.subr.mxu0 0.0
        %854 = vmatpush1.msra.mxu0 0.0
        %855 = vmatprep.subr.mxu0 0.0
        %856 = vmatpush1.msra.mxu0 0.0
        %857 = vmatprep.subr.mxu0 0.0
        %858 = vmatpush1.msra.mxu0 0.0
        %859 = vmatprep.subr.mxu0 0.0
        %860 = vmatpush1.msra.mxu0 0.0
        %861 = vmatprep.subr.mxu0 0.0
        %862 = vmatpush1.msra.mxu0 0.0
        %863 = vmatprep.subr.mxu0 0.0
        %864 = vmatpush1.msra.mxu0 0.0
        %865 = vmatprep.subr.mxu0 0.0
        %866 = vmatpush1.msra.mxu0 0.0
        %867 = vmatprep.subr.mxu0 0.0
        %868 = vmatpush1.msra.mxu0 0.0
        %869 = vmatprep.subr.mxu0 0.0
        %870 = vmatpush1.msra.mxu0 0.0
        %871 = vmatprep.subr.mxu0 0.0
        %872 = vmatpush1.msra.mxu0 0.0
        %873 = vmatprep.subr.mxu0 0.0
        %874 = vmatpush1.msra.mxu0 0.0
        %875 = vmatprep.subr.mxu0 0.0
        %876 = vmatpush1.msra.mxu0 0.0
        %877 = vmatprep.subr.mxu0 0.0
        %878 = vmatpush1.msra.mxu0 0.0
        %879 = vmatprep.mubr.f32.mxu0 0.0
        %880 = vmatmul.mubr.f32.gmra.mrb[0].mxu0 %v792
        %v881 = vpop.f32.mrb[0].mxu0
        %v882 = vadd.f32 0.0, %v881
        %v883 = vpop.f32.mrb[0].mxu0
        %884 = vmatprep.mubr.f32.mxu0 0.0
        %885 = vmatmul.mubr.f32.gmra.mrb[0].mxu0 %v795
        %v886 = vpop.f32.mrb[0].mxu0
        %v887 = vadd.f32 0.0, %v886
        %v888 = vpop.f32.mrb[0].mxu0
        %889 = vmatprep.mubr.f32.mxu0 0.0
        %890 = vmatmul.mubr.f32.gmra.mrb[0].mxu0 %v798
        %v891 = vpop.f32.mrb[0].mxu0
        %v892 = vadd.f32 0.0, %v891
        %v893 = vpop.f32.mrb[0].mxu0
        %894 = vmatprep.mubr.f32.mxu0 0.0
        %895 = vmatmul.mubr.f32.gmra.mrb[0].mxu0 %v801
        %v896 = vpop.f32.mrb[0].mxu0
        %v897 = vadd.f32 0.0, %v896
        %v898 = vpop.f32.mrb[0].mxu0
        %899 = vmatprep.mubr.f32.mxu0 0.0
        %900 = vmatmul.mubr.f32.gmra.mrb[0].mxu0 %v804
        %v901 = vpop.f32.mrb[0].mxu0
        %v902 = vadd.f32 0.0, %v901
        %v903 = vpop.f32.mrb[0].mxu0
        %904 = vmatprep.mubr.f32.mxu0 0.0
        %905 = vmatmul.mubr.f32.gmra.mrb[0].mxu0 %v807
        %v906 = vpop.f32.mrb[0].mxu0
        %v907 = vadd.f32 0.0, %v906
        %v908 = vpop.f32.mrb[0].mxu0
        %909 = vmatprep.mubr.f32.mxu0 0.0
        %910 = vmatmul.mubr.f32.gmra.mrb[0].mxu0 %v810
        %v911 = vpop.f32.mrb[0].mxu0
        %v912 = vadd.f32 0.0, %v911
        %v913 = vpop.f32.mrb[0].mxu0
        %914 = vmatprep.mubr.f32.mxu0 0.0
        %915 = vmatmul.mubr.f32.gmra.mrb[0].mxu0 %v813
        %v916 = vpop.f32.mrb[0].mxu0
        %v917 = vadd.f32 0.0, %v916
        %v918 = vpop.f32.mrb[0].mxu0
        %919 = vdwg.mxu0
        %v920 = vld [vmem:[%s5] sm:$0xff]
        %v921 = vld [vmem:[%s5 + $0x8] sm:$0xff]
        %v922 = vld [vmem:[%s5 + $0x10] sm:$0xff]
        %v923 = vld [vmem:[%s5 + $0x18] sm:$0xff]
        %v924 = vld [vmem:[%s6] sm:$0x1]
        %v926 = vlaneseq
        %v927 = vshrl.u32 %v926, 7
        %v928 = vsub.s32 0, %v927
        %v929 = vrot.slane %v924, %v928
        %vm939 = vcmask 1041409
        %v940 = vsel %vm939, %v745, %v738
        %vm941 = vcmask 1042434
        %v942 = vsel %vm941, %v752, %v940
        %vm943 = vcmask 1043459
        %v944 = vsel %vm943, %v759, %v942
        %vm945 = vcmask 1044484
        %v946 = vsel %vm945, %v766, %v944
        %vm947 = vcmask 1045509
        %v948 = vsel %vm947, %v773, %v946
        %vm949 = vcmask 1046534
        %v950 = vsel %vm949, %v780, %v948
        %vm951 = vcmask 1047559
        %v952 = vsel %vm951, %v787, %v950
        %v953 = vsel %vm731, %v952, 0
        %955 = vmatprep.subr.mxu0 0.0
        %956 = vmatpush1.msra.mxu0 %v920
        %957 = vmatprep.subr.mxu0 0.0
        %958 = vmatpush1.msra.mxu0 %v921
        %959 = vmatprep.subr.mxu0 0.0
        %960 = vmatpush1.msra.mxu0 %v922
        %961 = vmatprep.subr.mxu0 0.0
        %962 = vmatpush1.msra.mxu0 %v923
        %963 = vmatprep.subr.mxu0 0.0
        %964 = vmatpush1.msra.mxu0 0.0
        %965 = vmatprep.subr.mxu0 0.0
        %966 = vmatpush1.msra.mxu0 0.0
        %967 = vmatprep.subr.mxu0 0.0
        %968 = vmatpush1.msra.mxu0 0.0
        %969 = vmatprep.subr.mxu0 0.0
        %970 = vmatpush1.msra.mxu0 0.0
        %971 = vmatprep.subr.mxu0 0.0
        %972 = vmatpush1.msra.mxu0 0.0
        %973 = vmatprep.subr.mxu0 0.0
        %974 = vmatpush1.msra.mxu0 0.0
        %975 = vmatprep.subr.mxu0 0.0
        %976 = vmatpush1.msra.mxu0 0.0
        %977 = vmatprep.subr.mxu0 0.0
        %978 = vmatpush1.msra.mxu0 0.0
        %979 = vmatprep.subr.mxu0 0.0
        %980 = vmatpush1.msra.mxu0 0.0
        %981 = vmatprep.subr.mxu0 0.0
        %982 = vmatpush1.msra.mxu0 0.0
        %983 = vmatprep.subr.mxu0 0.0
        %984 = vmatpush1.msra.mxu0 0.0
        %985 = vmatprep.subr.mxu0 0.0
        %986 = vmatpush1.msra.mxu0 0.0
        %987 = vmatprep.subr.mxu0 0.0
        %988 = vmatpush1.msra.mxu0 0.0
        %989 = vmatprep.subr.mxu0 0.0
        %990 = vmatpush1.msra.mxu0 0.0
        %991 = vmatprep.subr.mxu0 0.0
        %992 = vmatpush1.msra.mxu0 0.0
        %993 = vmatprep.subr.mxu0 0.0
        %994 = vmatpush1.msra.mxu0 0.0
        %995 = vmatprep.subr.mxu0 0.0
        %996 = vmatpush1.msra.mxu0 0.0
        %997 = vmatprep.subr.mxu0 0.0
        %998 = vmatpush1.msra.mxu0 0.0
        %999 = vmatprep.subr.mxu0 0.0
        %1000 = vmatpush1.msra.mxu0 0.0
        %1001 = vmatprep.subr.mxu0 0.0
        %1002 = vmatpush1.msra.mxu0 0.0
        %1003 = vmatprep.subr.mxu0 0.0
        %1004 = vmatpush1.msra.mxu0 0.0
        %1005 = vmatprep.subr.mxu0 0.0
        %1006 = vmatpush1.msra.mxu0 0.0
        %1007 = vmatprep.subr.mxu0 0.0
        %1008 = vmatpush1.msra.mxu0 0.0
        %1009 = vmatprep.subr.mxu0 0.0
        %1010 = vmatpush1.msra.mxu0 0.0
        %1011 = vmatprep.subr.mxu0 0.0
        %1012 = vmatpush1.msra.mxu0 0.0
        %1013 = vmatprep.subr.mxu0 0.0
        %1014 = vmatpush1.msra.mxu0 0.0
        %1015 = vmatprep.subr.mxu0 0.0
        %1016 = vmatpush1.msra.mxu0 0.0
        %1017 = vmatprep.subr.mxu0 0.0
        %1018 = vmatpush1.msra.mxu0 0.0
        %1019 = vmatprep.mubr.f32.mxu0 0.0
        %1020 = vmatmul.mubr.f32.gmra.mrb[0].mxu0 %v953
        %v1021 = vpop.f32.mrb[0].mxu0
        %v1022 = vadd.f32 %v929, %v1021
        %v1023 = vpop.f32.mrb[0].mxu0
        %1024 = vdwg.mxu0
        %v1026 = vcombine.high %v1022, %v1022
        %v1028 = vunpack.c.l.s4 1966171168
        %v1029 = vunpack.c.0.s8 %v1028
        %v1030 = vlaneseq
        %v1031 = vshrl.u32 %v1030, 7
        %v1032 = vsub.s32 %v1029, %v1031
        %v1033 = vrot.slane %v1022, %v1032
        %v1035 = vunpack.c.l.s4 1966171168
        %v1036 = vunpack.c.0.s8 %v1035
        %v1037 = vlaneseq
        %v1038 = vshrl.u32 %v1037, 7
        %v1039 = vsub.s32 %v1036, %v1038
        %v1040 = vrot.slane %v1026, %v1039
        %v1041 = vcombine.high %v1033, %v1033
        %v1042 = vcombine.high %v1040, %v1040
        %v1044 = vunpack.c.l.s4 1966171168
        %v1045 = vunpack.c.0.s8 %v1044
        %v1046 = vlaneseq
        %v1047 = vshrl.u32 %v1046, 7
        %v1048 = vsub.s32 %v1045, %v1047
        %v1049 = vrot.slane %v1033, %v1048
        %v1051 = vunpack.c.l.s4 1966171168
        %v1052 = vunpack.c.0.s8 %v1051
        %v1053 = vlaneseq
        %v1054 = vshrl.u32 %v1053, 7
        %v1055 = vsub.s32 %v1052, %v1054
        %v1056 = vrot.slane %v1040, %v1055
        %v1058 = vunpack.c.l.s4 1966171168
        %v1059 = vunpack.c.0.s8 %v1058
        %v1060 = vlaneseq
        %v1061 = vshrl.u32 %v1060, 7
        %v1062 = vsub.s32 %v1059, %v1061
        %v1063 = vrot.slane %v1041, %v1062
        %v1065 = vunpack.c.l.s4 1966171168
        %v1066 = vunpack.c.0.s8 %v1065
        %v1067 = vlaneseq
        %v1068 = vshrl.u32 %v1067, 7
        %v1069 = vsub.s32 %v1066, %v1068
        %v1070 = vrot.slane %v1042, %v1069
        %v1071 = vcombine.high %v1049, %v1049
        %v1072 = vcombine.high %v1056, %v1056
        %v1073 = vcombine.high %v1063, %v1063
        %v1074 = vcombine.high %v1070, %v1070
        %v1075 = vlaneseq
        %v1076 = vshrl.u32 %v1075, 7
        %v1077 = vsub.s32 0, %v1076
        %v1078 = vrot.slane %v1049, %v1077
        %v1079 = vlaneseq
        %v1080 = vshrl.u32 %v1079, 7
        %v1081 = vsub.s32 0, %v1080
        %v1082 = vrot.slane %v1063, %v1081
        %v1083 = vlaneseq
        %v1084 = vshrl.u32 %v1083, 7
        %v1085 = vsub.s32 0, %v1084
        %v1086 = vrot.slane %v1071, %v1085
        %v1087 = vlaneseq
        %v1088 = vshrl.u32 %v1087, 7
        %v1089 = vsub.s32 0, %v1088
        %v1090 = vrot.slane %v1073, %v1089
        %v1091 = vlaneseq
        %v1092 = vshrl.u32 %v1091, 7
        %v1093 = vsub.s32 0, %v1092
        %v1094 = vrot.slane %v1056, %v1093
        %v1095 = vlaneseq
        %v1096 = vshrl.u32 %v1095, 7
        %v1097 = vsub.s32 0, %v1096
        %v1098 = vrot.slane %v1070, %v1097
        %v1099 = vlaneseq
        %v1100 = vshrl.u32 %v1099, 7
        %v1101 = vsub.s32 0, %v1100
        %v1102 = vrot.slane %v1072, %v1101
        %v1103 = vlaneseq
        %v1104 = vshrl.u32 %v1103, 7
        %v1105 = vsub.s32 0, %v1104
        %v1106 = vrot.slane %v1074, %v1105
        %v1115 = vadd.f32 %v882, %v1078
        %v1116 = vadd.f32 %v887, %v1082
        %v1117 = vadd.f32 %v892, %v1086
        %v1118 = vadd.f32 %v897, %v1090
        %v1119 = vadd.f32 %v902, %v1094
        %v1120 = vadd.f32 %v907, %v1098
        %v1121 = vadd.f32 %v912, %v1102
        %v1122 = vadd.f32 %v917, %v1106
        %v1123 = vtanh.pop %v1115
        %v1124 = vtanh.pop %v1116
        %v1125 = vtanh.pop %v1117
        %v1126 = vtanh.pop %v1118
        %v1127 = vtanh.pop %v1119
        %v1128 = vtanh.pop %v1120
        %v1129 = vtanh.pop %v1121
        %v1130 = vtanh.pop %v1122
        %v1131 = vld [vmem:[%s7] sm:$0x1]
        %v1133 = vlaneseq
        %v1134 = vshrl.u32 %v1133, 7
        %v1135 = vsub.s32 0, %v1134
        %v1136 = vrot.slane %v1131, %v1135
        %v1138 = vmul.f32 %v1123, %v1136
        %v1139 = vmul.f32 %v1124, %v1136
        %v1140 = vmul.f32 %v1125, %v1136
        %v1141 = vmul.f32 %v1126, %v1136
        %v1142 = vmul.f32 %v1127, %v1136
        %v1143 = vmul.f32 %v1128, %v1136
        %v1144 = vmul.f32 %v1129, %v1136
        %v1145 = vmul.f32 %v1130, %v1136
        %v1146 = vsel %vm731, %v1138, 0.0
        %1147 = vadd.xlane.f32.xlu0 %v1146
        %v1148 = vpop.xlane.xlu0 %1147
        %v1149 = vsel %vm731, %v1139, 0.0
        %1150 = vadd.xlane.f32.xlu0 %v1149
        %v1151 = vpop.xlane.xlu0 %1150
        %v1152 = vsel %vm731, %v1140, 0.0
        %1153 = vadd.xlane.f32.xlu0 %v1152
        %v1154 = vpop.xlane.xlu0 %1153
        %v1155 = vsel %vm731, %v1141, 0.0
        %1156 = vadd.xlane.f32.xlu0 %v1155
        %v1157 = vpop.xlane.xlu0 %1156
        %v1158 = vsel %vm731, %v1142, 0.0
        %1159 = vadd.xlane.f32.xlu0 %v1158
        %v1160 = vpop.xlane.xlu0 %1159
        %v1161 = vsel %vm731, %v1143, 0.0
        %1162 = vadd.xlane.f32.xlu0 %v1161
        %v1163 = vpop.xlane.xlu0 %1162
        %v1164 = vsel %vm731, %v1144, 0.0
        %1165 = vadd.xlane.f32.xlu0 %v1164
        %v1166 = vpop.xlane.xlu0 %1165
        %v1167 = vsel %vm731, %v1145, 0.0
        %1168 = vadd.xlane.f32.xlu0 %v1167
        %v1169 = vpop.xlane.xlu0 %1168
        %v1178 = vlaneseq
        %v1179 = vand.u32 %v1178, 127
        %v1180 = vlaneseq
        %v1181 = vshrl.u32 %v1180, 7
        %v1182 = vsub.s32 %v1179, %v1181
        %v1183 = vrot.slane %v1148, %v1182
        %v1184 = vlaneseq
        %v1185 = vshrl.u32 %v1184, 7
        %v1186 = vsub.s32 %v1179, %v1185
        %v1187 = vrot.slane %v1151, %v1186
        %v1188 = vlaneseq
        %v1189 = vshrl.u32 %v1188, 7
        %v1190 = vsub.s32 %v1179, %v1189
        %v1191 = vrot.slane %v1154, %v1190
        %v1192 = vlaneseq
        %v1193 = vshrl.u32 %v1192, 7
        %v1194 = vsub.s32 %v1179, %v1193
        %v1195 = vrot.slane %v1157, %v1194
        %v1196 = vlaneseq
        %v1197 = vshrl.u32 %v1196, 7
        %v1198 = vsub.s32 %v1179, %v1197
        %v1199 = vrot.slane %v1160, %v1198
        %v1200 = vlaneseq
        %v1201 = vshrl.u32 %v1200, 7
        %v1202 = vsub.s32 %v1179, %v1201
        %v1203 = vrot.slane %v1163, %v1202
        %v1204 = vlaneseq
        %v1205 = vshrl.u32 %v1204, 7
        %v1206 = vsub.s32 %v1179, %v1205
        %v1207 = vrot.slane %v1166, %v1206
        %v1208 = vlaneseq
        %v1209 = vshrl.u32 %v1208, 7
        %v1210 = vsub.s32 %v1179, %v1209
        %v1211 = vrot.slane %v1169, %v1210
        %v1212 = vsel %vm939, %v1187, %v1183
        %v1213 = vsel %vm941, %v1191, %v1212
        %v1214 = vsel %vm943, %v1195, %v1213
        %v1215 = vsel %vm945, %v1199, %v1214
        %v1216 = vsel %vm947, %v1203, %v1215
        %v1217 = vsel %vm949, %v1207, %v1216
        %v1218 = vsel %vm951, %v1211, %v1217
        %vm1220 = vcmask 64512
        %v1221 = vsel %vm1220, %v1218, -inf
        %1222 = vmax.xlane.f32.xlu0 %v1221
        %v1223 = vpop.xlane.xlu0 %1222
        %v1225 = vlaneseq
        %v1226 = vshrl.u32 %v1225, 7
        %v1227 = vsub.s32 0, %v1226
        %v1228 = vrot.slane %v1223, %v1227
        %v1229 = vlaneseq
        %v1230 = vshrl.u32 %v1229, 7
        %v1231 = vsub.s32 1, %v1230
        %v1232 = vrot.slane %v1223, %v1231
        %v1233 = vlaneseq
        %v1234 = vshrl.u32 %v1233, 7
        %v1235 = vsub.s32 2, %v1234
        %v1236 = vrot.slane %v1223, %v1235
        %v1237 = vlaneseq
        %v1238 = vshrl.u32 %v1237, 7
        %v1239 = vsub.s32 3, %v1238
        %v1240 = vrot.slane %v1223, %v1239
        %v1241 = vlaneseq
        %v1242 = vshrl.u32 %v1241, 7
        %v1243 = vsub.s32 4, %v1242
        %v1244 = vrot.slane %v1223, %v1243
        %v1245 = vlaneseq
        %v1246 = vshrl.u32 %v1245, 7
        %v1247 = vsub.s32 5, %v1246
        %v1248 = vrot.slane %v1223, %v1247
        %v1249 = vlaneseq
        %v1250 = vshrl.u32 %v1249, 7
        %v1251 = vsub.s32 6, %v1250
        %v1252 = vrot.slane %v1223, %v1251
        %v1253 = vlaneseq
        %v1254 = vshrl.u32 %v1253, 7
        %v1255 = vsub.s32 7, %v1254
        %v1256 = vrot.slane %v1223, %v1255
        %v1265 = vsub.f32 %v1148, %v1228
        %v1266 = vsub.f32 %v1151, %v1232
        %v1267 = vsub.f32 %v1154, %v1236
        %v1268 = vsub.f32 %v1157, %v1240
        %v1269 = vsub.f32 %v1160, %v1244
        %v1270 = vsub.f32 %v1163, %v1248
        %v1271 = vsub.f32 %v1166, %v1252
        %v1272 = vsub.f32 %v1169, %v1256
        %v1273 = vmul.f32 %v1265, 1.442695
        %v1274 = vpow.pop %v1273
        %v1275 = vmul.f32 %v1266, 1.442695
        %v1276 = vpow.pop %v1275
        %v1277 = vmul.f32 %v1267, 1.442695
        %v1278 = vpow.pop %v1277
        %v1279 = vmul.f32 %v1268, 1.442695
        %v1280 = vpow.pop %v1279
        %v1281 = vmul.f32 %v1269, 1.442695
        %v1282 = vpow.pop %v1281
        %v1283 = vmul.f32 %v1270, 1.442695
        %v1284 = vpow.pop %v1283
        %v1285 = vmul.f32 %v1271, 1.442695
        %v1286 = vpow.pop %v1285
        %v1287 = vmul.f32 %v1272, 1.442695
        %v1288 = vpow.pop %v1287
        %v1290 = vlaneseq
        %v1291 = vshrl.u32 %v1290, 7
        %v1292 = vsub.s32 0, %v1291
        %v1293 = vrot.slane %v606, %v1292
        %1295 = vbcast.lane.b32.xlu0 %v1293, 256
        %v1296 = vpop.permute.xlu0 %1295
        %v1297 = vlaneseq
        %v1298 = vshrl.u32 %v1297, 7
        %v1299 = vsub.s32 1, %v1298
        %v1300 = vrot.slane %v606, %v1299
        %1302 = vbcast.lane.b32.xlu0 %v1300, 256
        %v1303 = vpop.permute.xlu0 %1302
        %v1304 = vlaneseq
        %v1305 = vshrl.u32 %v1304, 7
        %v1306 = vsub.s32 2, %v1305
        %v1307 = vrot.slane %v606, %v1306
        %1309 = vbcast.lane.b32.xlu0 %v1307, 256
        %v1310 = vpop.permute.xlu0 %1309
        %v1311 = vlaneseq
        %v1312 = vshrl.u32 %v1311, 7
        %v1313 = vsub.s32 3, %v1312
        %v1314 = vrot.slane %v606, %v1313
        %1316 = vbcast.lane.b32.xlu0 %v1314, 256
        %v1317 = vpop.permute.xlu0 %1316
        %v1318 = vlaneseq
        %v1319 = vshrl.u32 %v1318, 7
        %v1320 = vsub.s32 4, %v1319
        %v1321 = vrot.slane %v606, %v1320
        %1323 = vbcast.lane.b32.xlu0 %v1321, 256
        %v1324 = vpop.permute.xlu0 %1323
        %v1325 = vlaneseq
        %v1326 = vshrl.u32 %v1325, 7
        %v1327 = vsub.s32 5, %v1326
        %v1328 = vrot.slane %v606, %v1327
        %1330 = vbcast.lane.b32.xlu0 %v1328, 256
        %v1331 = vpop.permute.xlu0 %1330
        %v1332 = vlaneseq
        %v1333 = vshrl.u32 %v1332, 7
        %v1334 = vsub.s32 6, %v1333
        %v1335 = vrot.slane %v606, %v1334
        %1337 = vbcast.lane.b32.xlu0 %v1335, 256
        %v1338 = vpop.permute.xlu0 %1337
        %v1339 = vlaneseq
        %v1340 = vshrl.u32 %v1339, 7
        %v1341 = vsub.s32 7, %v1340
        %v1342 = vrot.slane %v606, %v1341
        %1344 = vbcast.lane.b32.xlu0 %v1342, 256
        %v1345 = vpop.permute.xlu0 %1344
        %v1354 = vmul.f32 %v1274, %v1296
        %v1355 = vmul.f32 %v1276, %v1303
        %v1356 = vmul.f32 %v1278, %v1310
        %v1357 = vmul.f32 %v1280, %v1317
        %v1358 = vmul.f32 %v1282, %v1324
        %v1359 = vmul.f32 %v1284, %v1331
        %v1360 = vmul.f32 %v1286, %v1338
        %v1361 = vmul.f32 %v1288, %v1345
        %1370 = vset.pattern.permute.xlu0 0
        %1371 = vperm.xlu0 %1370, %v1354
        %v1372 = vpop.permute.xlu0 %1371
        %1373 = vset.pattern.permute.xlu0 0
        %1374 = vperm.xlu0 %1373, %v1355
        %v1375 = vpop.permute.xlu0 %1374
        %1376 = vset.pattern.permute.xlu0 0
        %1377 = vperm.xlu0 %1376, %v1356
        %v1378 = vpop.permute.xlu0 %1377
        %1379 = vset.pattern.permute.xlu0 0
        %1380 = vperm.xlu0 %1379, %v1357
        %v1381 = vpop.permute.xlu0 %1380
        %1382 = vset.pattern.permute.xlu0 0
        %1383 = vperm.xlu0 %1382, %v1358
        %v1384 = vpop.permute.xlu0 %1383
        %1385 = vset.pattern.permute.xlu0 0
        %1386 = vperm.xlu0 %1385, %v1359
        %v1387 = vpop.permute.xlu0 %1386
        %1388 = vset.pattern.permute.xlu0 0
        %1389 = vperm.xlu0 %1388, %v1360
        %v1390 = vpop.permute.xlu0 %1389
        %1391 = vset.pattern.permute.xlu0 0
        %1392 = vperm.xlu0 %1391, %v1361
        %v1393 = vpop.permute.xlu0 %1392
        %v1394 = vlaneseq
        %v1395 = vshrl.u32 %v1394, 7
        %v1396 = vsub.s32 %v1179, %v1395
        %v1397 = vrot.slane %v1372, %v1396
        %v1398 = vlaneseq
        %v1399 = vshrl.u32 %v1398, 7
        %v1400 = vsub.s32 %v1179, %v1399
        %v1401 = vrot.slane %v1375, %v1400
        %v1402 = vlaneseq
        %v1403 = vshrl.u32 %v1402, 7
        %v1404 = vsub.s32 %v1179, %v1403
        %v1405 = vrot.slane %v1378, %v1404
        %v1406 = vlaneseq
        %v1407 = vshrl.u32 %v1406, 7
        %v1408 = vsub.s32 %v1179, %v1407
        %v1409 = vrot.slane %v1381, %v1408
        %v1410 = vlaneseq
        %v1411 = vshrl.u32 %v1410, 7
        %v1412 = vsub.s32 %v1179, %v1411
        %v1413 = vrot.slane %v1384, %v1412
        %v1414 = vlaneseq
        %v1415 = vshrl.u32 %v1414, 7
        %v1416 = vsub.s32 %v1179, %v1415
        %v1417 = vrot.slane %v1387, %v1416
        %v1418 = vlaneseq
        %v1419 = vshrl.u32 %v1418, 7
        %v1420 = vsub.s32 %v1179, %v1419
        %v1421 = vrot.slane %v1390, %v1420
        %v1422 = vlaneseq
        %v1423 = vshrl.u32 %v1422, 7
        %v1424 = vsub.s32 %v1179, %v1423
        %v1425 = vrot.slane %v1393, %v1424
        %v1426 = vsel %vm939, %v1401, %v1397
        %v1427 = vsel %vm941, %v1405, %v1426
        %v1428 = vsel %vm943, %v1409, %v1427
        %v1429 = vsel %vm945, %v1413, %v1428
        %v1430 = vsel %vm947, %v1417, %v1429
        %v1431 = vsel %vm949, %v1421, %v1430
        %v1432 = vsel %vm951, %v1425, %v1431
        %v1434 = vsel %vm1220, %v1432, 0.0
        %1435 = vadd.xlane.f32.xlu0 %v1434
        %v1436 = vpop.xlane.xlu0 %1435
        %v1437 = vrcp.pop %v1436
        %v1439 = vlaneseq
        %v1440 = vshrl.u32 %v1439, 7
        %v1441 = vsub.s32 0, %v1440
        %v1442 = vrot.slane %v1437, %v1441
        %v1443 = vlaneseq
        %v1444 = vshrl.u32 %v1443, 7
        %v1445 = vsub.s32 1, %v1444
        %v1446 = vrot.slane %v1437, %v1445
        %v1447 = vlaneseq
        %v1448 = vshrl.u32 %v1447, 7
        %v1449 = vsub.s32 2, %v1448
        %v1450 = vrot.slane %v1437, %v1449
        %v1451 = vlaneseq
        %v1452 = vshrl.u32 %v1451, 7
        %v1453 = vsub.s32 3, %v1452
        %v1454 = vrot.slane %v1437, %v1453
        %v1455 = vlaneseq
        %v1456 = vshrl.u32 %v1455, 7
        %v1457 = vsub.s32 4, %v1456
        %v1458 = vrot.slane %v1437, %v1457
        %v1459 = vlaneseq
        %v1460 = vshrl.u32 %v1459, 7
        %v1461 = vsub.s32 5, %v1460
        %v1462 = vrot.slane %v1437, %v1461
        %v1463 = vlaneseq
        %v1464 = vshrl.u32 %v1463, 7
        %v1465 = vsub.s32 6, %v1464
        %v1466 = vrot.slane %v1437, %v1465
        %v1467 = vlaneseq
        %v1468 = vshrl.u32 %v1467, 7
        %v1469 = vsub.s32 7, %v1468
        %v1470 = vrot.slane %v1437, %v1469
        %v1479 = vmul.f32 %v1354, %v1442
        %v1480 = vmul.f32 %v1355, %v1446
        %v1481 = vmul.f32 %v1356, %v1450
        %v1482 = vmul.f32 %v1357, %v1454
        %v1483 = vmul.f32 %v1358, %v1458
        %v1484 = vmul.f32 %v1359, %v1462
        %v1485 = vmul.f32 %v1360, %v1466
        %v1486 = vmul.f32 %v1361, %v1470
        %1488 = vset.pattern.permute.xlu0 0
        %1489 = vperm.xlu0 %1488, %v1479
        %v1490 = vpop.permute.xlu0 %1489
        %1493 = vset.pattern.permute.xlu0 0
        %1494 = vperm.xlu0 %1493, %v1480
        %v1495 = vpop.permute.xlu0 %1494
        %1498 = vset.pattern.permute.xlu0 0
        %1499 = vperm.xlu0 %1498, %v1481
        %v1500 = vpop.permute.xlu0 %1499
        %1503 = vset.pattern.permute.xlu0 0
        %1504 = vperm.xlu0 %1503, %v1482
        %v1505 = vpop.permute.xlu0 %1504
        %1508 = vset.pattern.permute.xlu0 0
        %1509 = vperm.xlu0 %1508, %v1483
        %v1510 = vpop.permute.xlu0 %1509
        %1513 = vset.pattern.permute.xlu0 0
        %1514 = vperm.xlu0 %1513, %v1484
        %v1515 = vpop.permute.xlu0 %1514
        %1518 = vset.pattern.permute.xlu0 0
        %1519 = vperm.xlu0 %1518, %v1485
        %v1520 = vpop.permute.xlu0 %1519
        %1523 = vset.pattern.permute.xlu0 0
        %1524 = vperm.xlu0 %1523, %v1486
        %v1525 = vpop.permute.xlu0 %1524
        %v1527 = vmul.f32 %v1490, %v597
        %v1528 = vmul.f32 %v1495, %v598
        %v1529 = vmul.f32 %v1500, %v599
        %v1530 = vmul.f32 %v1505, %v600
        %v1531 = vmul.f32 %v1510, %v601
        %v1532 = vmul.f32 %v1515, %v602
        %v1533 = vmul.f32 %v1520, %v603
        %v1534 = vmul.f32 %v1525, %v604
        %v1535 = vsel %vm790, %v1527, 0.0
        %v1536 = vrot.slane %v1535, 4
        %v1537 = vadd.f32 %v1535, %v1536
        %v1538 = vrot.slane %v1537, 2
        %v1539 = vadd.f32 %v1537, %v1538
        %v1540 = vrot.slane %v1539, 1
        %v1541 = vadd.f32 %v1539, %v1540
        %v1542 = vsel %vm790, %v1528, 0.0
        %v1543 = vrot.slane %v1542, 4
        %v1544 = vadd.f32 %v1542, %v1543
        %v1545 = vrot.slane %v1544, 2
        %v1546 = vadd.f32 %v1544, %v1545
        %v1547 = vrot.slane %v1546, 1
        %v1548 = vadd.f32 %v1546, %v1547
        %v1549 = vsel %vm790, %v1529, 0.0
        %v1550 = vrot.slane %v1549, 4
        %v1551 = vadd.f32 %v1549, %v1550
        %v1552 = vrot.slane %v1551, 2
        %v1553 = vadd.f32 %v1551, %v1552
        %v1554 = vrot.slane %v1553, 1
        %v1555 = vadd.f32 %v1553, %v1554
        %v1556 = vsel %vm790, %v1530, 0.0
        %v1557 = vrot.slane %v1556, 4
        %v1558 = vadd.f32 %v1556, %v1557
        %v1559 = vrot.slane %v1558, 2
        %v1560 = vadd.f32 %v1558, %v1559
        %v1561 = vrot.slane %v1560, 1
        %v1562 = vadd.f32 %v1560, %v1561
        %v1563 = vsel %vm790, %v1531, 0.0
        %v1564 = vrot.slane %v1563, 4
        %v1565 = vadd.f32 %v1563, %v1564
        %v1566 = vrot.slane %v1565, 2
        %v1567 = vadd.f32 %v1565, %v1566
        %v1568 = vrot.slane %v1567, 1
        %v1569 = vadd.f32 %v1567, %v1568
        %v1570 = vsel %vm790, %v1532, 0.0
        %v1571 = vrot.slane %v1570, 4
        %v1572 = vadd.f32 %v1570, %v1571
        %v1573 = vrot.slane %v1572, 2
        %v1574 = vadd.f32 %v1572, %v1573
        %v1575 = vrot.slane %v1574, 1
        %v1576 = vadd.f32 %v1574, %v1575
        %v1577 = vsel %vm790, %v1533, 0.0
        %v1578 = vrot.slane %v1577, 4
        %v1579 = vadd.f32 %v1577, %v1578
        %v1580 = vrot.slane %v1579, 2
        %v1581 = vadd.f32 %v1579, %v1580
        %v1582 = vrot.slane %v1581, 1
        %v1583 = vadd.f32 %v1581, %v1582
        %v1584 = vsel %vm790, %v1534, 0.0
        %v1585 = vrot.slane %v1584, 4
        %v1586 = vadd.f32 %v1584, %v1585
        %v1587 = vrot.slane %v1586, 2
        %v1588 = vadd.f32 %v1586, %v1587
        %v1589 = vrot.slane %v1588, 1
        %v1590 = vadd.f32 %v1588, %v1589
        %v1591 = vadd.f32 %v597, %v673
        %v1592 = vadd.f32 %v598, %v680
        %v1593 = vadd.f32 %v599, %v687
        %v1594 = vadd.f32 %v600, %v694
        %v1595 = vadd.f32 %v601, %v701
        %v1596 = vadd.f32 %v602, %v708
        %v1597 = vadd.f32 %v603, %v715
        %v1598 = vadd.f32 %v604, %v722
        %v1599 = vsel %vm790, %v1591, -inf
        %v1600 = vrot.slane %v1599, 4
        %v1601 = vmax.f32 %v1599, %v1600
        %v1602 = vrot.slane %v1601, 2
        %v1603 = vmax.f32 %v1601, %v1602
        %v1604 = vrot.slane %v1603, 1
        %v1605 = vmax.f32 %v1603, %v1604
        %v1606 = vsel %vm790, %v1592, -inf
        %v1607 = vrot.slane %v1606, 4
        %v1608 = vmax.f32 %v1606, %v1607
        %v1609 = vrot.slane %v1608, 2
        %v1610 = vmax.f32 %v1608, %v1609
        %v1611 = vrot.slane %v1610, 1
        %v1612 = vmax.f32 %v1610, %v1611
        %v1613 = vsel %vm790, %v1593, -inf
        %v1614 = vrot.slane %v1613, 4
        %v1615 = vmax.f32 %v1613, %v1614
        %v1616 = vrot.slane %v1615, 2
        %v1617 = vmax.f32 %v1615, %v1616
        %v1618 = vrot.slane %v1617, 1
        %v1619 = vmax.f32 %v1617, %v1618
        %v1620 = vsel %vm790, %v1594, -inf
        %v1621 = vrot.slane %v1620, 4
        %v1622 = vmax.f32 %v1620, %v1621
        %v1623 = vrot.slane %v1622, 2
        %v1624 = vmax.f32 %v1622, %v1623
        %v1625 = vrot.slane %v1624, 1
        %v1626 = vmax.f32 %v1624, %v1625
        %v1627 = vsel %vm790, %v1595, -inf
        %v1628 = vrot.slane %v1627, 4
        %v1629 = vmax.f32 %v1627, %v1628
        %v1630 = vrot.slane %v1629, 2
        %v1631 = vmax.f32 %v1629, %v1630
        %v1632 = vrot.slane %v1631, 1
        %v1633 = vmax.f32 %v1631, %v1632
        %v1634 = vsel %vm790, %v1596, -inf
        %v1635 = vrot.slane %v1634, 4
        %v1636 = vmax.f32 %v1634, %v1635
        %v1637 = vrot.slane %v1636, 2
        %v1638 = vmax.f32 %v1636, %v1637
        %v1639 = vrot.slane %v1638, 1
        %v1640 = vmax.f32 %v1638, %v1639
        %v1641 = vsel %vm790, %v1597, -inf
        %v1642 = vrot.slane %v1641, 4
        %v1643 = vmax.f32 %v1641, %v1642
        %v1644 = vrot.slane %v1643, 2
        %v1645 = vmax.f32 %v1643, %v1644
        %v1646 = vrot.slane %v1645, 1
        %v1647 = vmax.f32 %v1645, %v1646
        %v1648 = vsel %vm790, %v1598, -inf
        %v1649 = vrot.slane %v1648, 4
        %v1650 = vmax.f32 %v1648, %v1649
        %v1651 = vrot.slane %v1650, 2
        %v1652 = vmax.f32 %v1650, %v1651
        %v1653 = vrot.slane %v1652, 1
        %v1654 = vmax.f32 %v1652, %v1653
        %v1655 = vld [vmem:[%s8] sm:$0xff]
        %v1656 = vld [vmem:[%s8 + $0x8] sm:$0xff]
        %v1657 = vld [vmem:[%s8 + $0x10] sm:$0xff]
        %v1658 = vld [vmem:[%s8 + $0x18] sm:$0xff]
        %v1660 = vsel %vm731, %v589, 0
        %v1663 = vsel %vm731, %v590, 0
        %v1666 = vsel %vm731, %v591, 0
        %v1669 = vsel %vm731, %v592, 0
        %v1672 = vsel %vm731, %v593, 0
        %v1675 = vsel %vm731, %v594, 0
        %v1678 = vsel %vm731, %v595, 0
        %v1681 = vsel %vm731, %v596, 0
        %1683 = vmatprep.subr.mxu0 0.0
        %1684 = vmatpush1.msra.mxu0 %v1655
        %1685 = vmatprep.subr.mxu0 0.0
        %1686 = vmatpush1.msra.mxu0 %v1656
        %1687 = vmatprep.subr.mxu0 0.0
        %1688 = vmatpush1.msra.mxu0 %v1657
        %1689 = vmatprep.subr.mxu0 0.0
        %1690 = vmatpush1.msra.mxu0 %v1658
        %1691 = vmatprep.subr.mxu0 0.0
        %1692 = vmatpush1.msra.mxu0 0.0
        %1693 = vmatprep.subr.mxu0 0.0
        %1694 = vmatpush1.msra.mxu0 0.0
        %1695 = vmatprep.subr.mxu0 0.0
        %1696 = vmatpush1.msra.mxu0 0.0
        %1697 = vmatprep.subr.mxu0 0.0
        %1698 = vmatpush1.msra.mxu0 0.0
        %1699 = vmatprep.subr.mxu0 0.0
        %1700 = vmatpush1.msra.mxu0 0.0
        %1701 = vmatprep.subr.mxu0 0.0
        %1702 = vmatpush1.msra.mxu0 0.0
        %1703 = vmatprep.subr.mxu0 0.0
        %1704 = vmatpush1.msra.mxu0 0.0
        %1705 = vmatprep.subr.mxu0 0.0
        %1706 = vmatpush1.msra.mxu0 0.0
        %1707 = vmatprep.subr.mxu0 0.0
        %1708 = vmatpush1.msra.mxu0 0.0
        %1709 = vmatprep.subr.mxu0 0.0
        %1710 = vmatpush1.msra.mxu0 0.0
        %1711 = vmatprep.subr.mxu0 0.0
        %1712 = vmatpush1.msra.mxu0 0.0
        %1713 = vmatprep.subr.mxu0 0.0
        %1714 = vmatpush1.msra.mxu0 0.0
        %1715 = vmatprep.subr.mxu0 0.0
        %1716 = vmatpush1.msra.mxu0 0.0
        %1717 = vmatprep.subr.mxu0 0.0
        %1718 = vmatpush1.msra.mxu0 0.0
        %1719 = vmatprep.subr.mxu0 0.0
        %1720 = vmatpush1.msra.mxu0 0.0
        %1721 = vmatprep.subr.mxu0 0.0
        %1722 = vmatpush1.msra.mxu0 0.0
        %1723 = vmatprep.subr.mxu0 0.0
        %1724 = vmatpush1.msra.mxu0 0.0
        %1725 = vmatprep.subr.mxu0 0.0
        %1726 = vmatpush1.msra.mxu0 0.0
        %1727 = vmatprep.subr.mxu0 0.0
        %1728 = vmatpush1.msra.mxu0 0.0
        %1729 = vmatprep.subr.mxu0 0.0
        %1730 = vmatpush1.msra.mxu0 0.0
        %1731 = vmatprep.subr.mxu0 0.0
        %1732 = vmatpush1.msra.mxu0 0.0
        %1733 = vmatprep.subr.mxu0 0.0
        %1734 = vmatpush1.msra.mxu0 0.0
        %1735 = vmatprep.subr.mxu0 0.0
        %1736 = vmatpush1.msra.mxu0 0.0
        %1737 = vmatprep.subr.mxu0 0.0
        %1738 = vmatpush1.msra.mxu0 0.0
        %1739 = vmatprep.subr.mxu0 0.0
        %1740 = vmatpush1.msra.mxu0 0.0
        %1741 = vmatprep.subr.mxu0 0.0
        %1742 = vmatpush1.msra.mxu0 0.0
        %1743 = vmatprep.subr.mxu0 0.0
        %1744 = vmatpush1.msra.mxu0 0.0
        %1745 = vmatprep.subr.mxu0 0.0
        %1746 = vmatpush1.msra.mxu0 0.0
        %1747 = vmatprep.mubr.f32.mxu0 0.0
        %1748 = vmatmul.mubr.f32.gmra.mrb[0].mxu0 %v1660
        %v1749 = vpop.f32.mrb[0].mxu0
        %v1750 = vadd.f32 0.0, %v1749
        %v1751 = vpop.f32.mrb[0].mxu0
        %1752 = vmatprep.mubr.f32.mxu0 0.0
        %1753 = vmatmul.mubr.f32.gmra.mrb[0].mxu0 %v1663
        %v1754 = vpop.f32.mrb[0].mxu0
        %v1755 = vadd.f32 0.0, %v1754
        %v1756 = vpop.f32.mrb[0].mxu0
        %1757 = vmatprep.mubr.f32.mxu0 0.0
        %1758 = vmatmul.mubr.f32.gmra.mrb[0].mxu0 %v1666
        %v1759 = vpop.f32.mrb[0].mxu0
        %v1760 = vadd.f32 0.0, %v1759
        %v1761 = vpop.f32.mrb[0].mxu0
        %1762 = vmatprep.mubr.f32.mxu0 0.0
        %1763 = vmatmul.mubr.f32.gmra.mrb[0].mxu0 %v1669
        %v1764 = vpop.f32.mrb[0].mxu0
        %v1765 = vadd.f32 0.0, %v1764
        %v1766 = vpop.f32.mrb[0].mxu0
        %1767 = vmatprep.mubr.f32.mxu0 0.0
        %1768 = vmatmul.mubr.f32.gmra.mrb[0].mxu0 %v1672
        %v1769 = vpop.f32.mrb[0].mxu0
        %v1770 = vadd.f32 0.0, %v1769
        %v1771 = vpop.f32.mrb[0].mxu0
        %1772 = vmatprep.mubr.f32.mxu0 0.0
        %1773 = vmatmul.mubr.f32.gmra.mrb[0].mxu0 %v1675
        %v1774 = vpop.f32.mrb[0].mxu0
        %v1775 = vadd.f32 0.0, %v1774
        %v1776 = vpop.f32.mrb[0].mxu0
        %1777 = vmatprep.mubr.f32.mxu0 0.0
        %1778 = vmatmul.mubr.f32.gmra.mrb[0].mxu0 %v1678
        %v1779 = vpop.f32.mrb[0].mxu0
        %v1780 = vadd.f32 0.0, %v1779
        %v1781 = vpop.f32.mrb[0].mxu0
        %1782 = vmatprep.mubr.f32.mxu0 0.0
        %1783 = vmatmul.mubr.f32.gmra.mrb[0].mxu0 %v1681
        %v1784 = vpop.f32.mrb[0].mxu0
        %v1785 = vadd.f32 0.0, %v1784
        %v1786 = vpop.f32.mrb[0].mxu0
        %1787 = vdwg.mxu0
        %v1788 = vld [vmem:[%s9] sm:$0xff]
        %v1789 = vld [vmem:[%s9 + $0x8] sm:$0xff]
        %v1790 = vld [vmem:[%s10] sm:$0x1]
        %v1792 = vlaneseq
        %v1793 = vshrl.u32 %v1792, 7
        %v1794 = vsub.s32 0, %v1793
        %v1795 = vrot.slane %v1790, %v1794
        %v1805 = vsel %vm939, %v1612, %v1605
        %v1806 = vsel %vm941, %v1619, %v1805
        %v1807 = vsel %vm943, %v1626, %v1806
        %v1808 = vsel %vm945, %v1633, %v1807
        %v1809 = vsel %vm947, %v1640, %v1808
        %v1810 = vsel %vm949, %v1647, %v1809
        %v1811 = vsel %vm951, %v1654, %v1810
        %v1812 = vsel %vm790, %v1811, 0
        %1814 = vmatprep.subr.mxu0 0.0
        %1815 = vmatpush1.msra.mxu0 %v1788
        %1816 = vmatprep.subr.mxu0 0.0
        %1817 = vmatpush1.msra.mxu0 %v1789
        %1818 = vmatprep.subr.mxu0 0.0
        %1819 = vmatpush1.msra.mxu0 0.0
        %1820 = vmatprep.subr.mxu0 0.0
        %1821 = vmatpush1.msra.mxu0 0.0
        %1822 = vmatprep.subr.mxu0 0.0
        %1823 = vmatpush1.msra.mxu0 0.0
        %1824 = vmatprep.subr.mxu0 0.0
        %1825 = vmatpush1.msra.mxu0 0.0
        %1826 = vmatprep.subr.mxu0 0.0
        %1827 = vmatpush1.msra.mxu0 0.0
        %1828 = vmatprep.subr.mxu0 0.0
        %1829 = vmatpush1.msra.mxu0 0.0
        %1830 = vmatprep.subr.mxu0 0.0
        %1831 = vmatpush1.msra.mxu0 0.0
        %1832 = vmatprep.subr.mxu0 0.0
        %1833 = vmatpush1.msra.mxu0 0.0
        %1834 = vmatprep.subr.mxu0 0.0
        %1835 = vmatpush1.msra.mxu0 0.0
        %1836 = vmatprep.subr.mxu0 0.0
        %1837 = vmatpush1.msra.mxu0 0.0
        %1838 = vmatprep.subr.mxu0 0.0
        %1839 = vmatpush1.msra.mxu0 0.0
        %1840 = vmatprep.subr.mxu0 0.0
        %1841 = vmatpush1.msra.mxu0 0.0
        %1842 = vmatprep.subr.mxu0 0.0
        %1843 = vmatpush1.msra.mxu0 0.0
        %1844 = vmatprep.subr.mxu0 0.0
        %1845 = vmatpush1.msra.mxu0 0.0
        %1846 = vmatprep.subr.mxu0 0.0
        %1847 = vmatpush1.msra.mxu0 0.0
        %1848 = vmatprep.subr.mxu0 0.0
        %1849 = vmatpush1.msra.mxu0 0.0
        %1850 = vmatprep.subr.mxu0 0.0
        %1851 = vmatpush1.msra.mxu0 0.0
        %1852 = vmatprep.subr.mxu0 0.0
        %1853 = vmatpush1.msra.mxu0 0.0
        %1854 = vmatprep.subr.mxu0 0.0
        %1855 = vmatpush1.msra.mxu0 0.0
        %1856 = vmatprep.subr.mxu0 0.0
        %1857 = vmatpush1.msra.mxu0 0.0
        %1858 = vmatprep.subr.mxu0 0.0
        %1859 = vmatpush1.msra.mxu0 0.0
        %1860 = vmatprep.subr.mxu0 0.0
        %1861 = vmatpush1.msra.mxu0 0.0
        %1862 = vmatprep.subr.mxu0 0.0
        %1863 = vmatpush1.msra.mxu0 0.0
        %1864 = vmatprep.subr.mxu0 0.0
        %1865 = vmatpush1.msra.mxu0 0.0
        %1866 = vmatprep.subr.mxu0 0.0
        %1867 = vmatpush1.msra.mxu0 0.0
        %1868 = vmatprep.subr.mxu0 0.0
        %1869 = vmatpush1.msra.mxu0 0.0
        %1870 = vmatprep.subr.mxu0 0.0
        %1871 = vmatpush1.msra.mxu0 0.0
        %1872 = vmatprep.subr.mxu0 0.0
        %1873 = vmatpush1.msra.mxu0 0.0
        %1874 = vmatprep.subr.mxu0 0.0
        %1875 = vmatpush1.msra.mxu0 0.0
        %1876 = vmatprep.subr.mxu0 0.0
        %1877 = vmatpush1.msra.mxu0 0.0
        %1878 = vmatprep.mubr.f32.mxu0 0.0
        %1879 = vmatmul.mubr.f32.gmra.mrb[0].mxu0 %v1812
        %v1880 = vpop.f32.mrb[0].mxu0
        %v1881 = vadd.f32 %v1795, %v1880
        %v1882 = vpop.f32.mrb[0].mxu0
        %1883 = vdwg.mxu0
        %v1885 = vcombine.high %v1881, %v1881
        %v1887 = vunpack.c.l.s4 1966171168
        %v1888 = vunpack.c.0.s8 %v1887
        %v1889 = vlaneseq
        %v1890 = vshrl.u32 %v1889, 7
        %v1891 = vsub.s32 %v1888, %v1890
        %v1892 = vrot.slane %v1881, %v1891
        %v1894 = vunpack.c.l.s4 1966171168
        %v1895 = vunpack.c.0.s8 %v1894
        %v1896 = vlaneseq
        %v1897 = vshrl.u32 %v1896, 7
        %v1898 = vsub.s32 %v1895, %v1897
        %v1899 = vrot.slane %v1885, %v1898
        %v1900 = vcombine.high %v1892, %v1892
        %v1901 = vcombine.high %v1899, %v1899
        %v1903 = vunpack.c.l.s4 1966171168
        %v1904 = vunpack.c.0.s8 %v1903
        %v1905 = vlaneseq
        %v1906 = vshrl.u32 %v1905, 7
        %v1907 = vsub.s32 %v1904, %v1906
        %v1908 = vrot.slane %v1892, %v1907
        %v1910 = vunpack.c.l.s4 1966171168
        %v1911 = vunpack.c.0.s8 %v1910
        %v1912 = vlaneseq
        %v1913 = vshrl.u32 %v1912, 7
        %v1914 = vsub.s32 %v1911, %v1913
        %v1915 = vrot.slane %v1899, %v1914
        %v1917 = vunpack.c.l.s4 1966171168
        %v1918 = vunpack.c.0.s8 %v1917
        %v1919 = vlaneseq
        %v1920 = vshrl.u32 %v1919, 7
        %v1921 = vsub.s32 %v1918, %v1920
        %v1922 = vrot.slane %v1900, %v1921
        %v1924 = vunpack.c.l.s4 1966171168
        %v1925 = vunpack.c.0.s8 %v1924
        %v1926 = vlaneseq
        %v1927 = vshrl.u32 %v1926, 7
        %v1928 = vsub.s32 %v1925, %v1927
        %v1929 = vrot.slane %v1901, %v1928
        %v1930 = vcombine.high %v1908, %v1908
        %v1931 = vcombine.high %v1915, %v1915
        %v1932 = vcombine.high %v1922, %v1922
        %v1933 = vcombine.high %v1929, %v1929
        %v1934 = vlaneseq
        %v1935 = vshrl.u32 %v1934, 7
        %v1936 = vsub.s32 0, %v1935
        %v1937 = vrot.slane %v1908, %v1936
        %v1938 = vlaneseq
        %v1939 = vshrl.u32 %v1938, 7
        %v1940 = vsub.s32 0, %v1939
        %v1941 = vrot.slane %v1922, %v1940
        %v1942 = vlaneseq
        %v1943 = vshrl.u32 %v1942, 7
        %v1944 = vsub.s32 0, %v1943
        %v1945 = vrot.slane %v1930, %v1944
        %v1946 = vlaneseq
        %v1947 = vshrl.u32 %v1946, 7
        %v1948 = vsub.s32 0, %v1947
        %v1949 = vrot.slane %v1932, %v1948
        %v1950 = vlaneseq
        %v1951 = vshrl.u32 %v1950, 7
        %v1952 = vsub.s32 0, %v1951
        %v1953 = vrot.slane %v1915, %v1952
        %v1954 = vlaneseq
        %v1955 = vshrl.u32 %v1954, 7
        %v1956 = vsub.s32 0, %v1955
        %v1957 = vrot.slane %v1929, %v1956
        %v1958 = vlaneseq
        %v1959 = vshrl.u32 %v1958, 7
        %v1960 = vsub.s32 0, %v1959
        %v1961 = vrot.slane %v1931, %v1960
        %v1962 = vlaneseq
        %v1963 = vshrl.u32 %v1962, 7
        %v1964 = vsub.s32 0, %v1963
        %v1965 = vrot.slane %v1933, %v1964
        %v1974 = vadd.f32 %v1750, %v1937
        %v1975 = vadd.f32 %v1755, %v1941
        %v1976 = vadd.f32 %v1760, %v1945
        %v1977 = vadd.f32 %v1765, %v1949
        %v1978 = vadd.f32 %v1770, %v1953
        %v1979 = vadd.f32 %v1775, %v1957
        %v1980 = vadd.f32 %v1780, %v1961
        %v1981 = vadd.f32 %v1785, %v1965
        %v1982 = vtanh.pop %v1974
        %v1983 = vtanh.pop %v1975
        %v1984 = vtanh.pop %v1976
        %v1985 = vtanh.pop %v1977
        %v1986 = vtanh.pop %v1978
        %v1987 = vtanh.pop %v1979
        %v1988 = vtanh.pop %v1980
        %v1989 = vtanh.pop %v1981
        %v1990 = vld [vmem:[%s11] sm:$0x1]
        %v1992 = vlaneseq
        %v1993 = vshrl.u32 %v1992, 7
        %v1994 = vsub.s32 0, %v1993
        %v1995 = vrot.slane %v1990, %v1994
        %v1997 = vmul.f32 %v1982, %v1995
        %v1998 = vmul.f32 %v1983, %v1995
        %v1999 = vmul.f32 %v1984, %v1995
        %v2000 = vmul.f32 %v1985, %v1995
        %v2001 = vmul.f32 %v1986, %v1995
        %v2002 = vmul.f32 %v1987, %v1995
        %v2003 = vmul.f32 %v1988, %v1995
        %v2004 = vmul.f32 %v1989, %v1995
        %v2005 = vsel %vm790, %v1997, 0.0
        %2006 = vadd.xlane.f32.xlu0 %v2005
        %v2007 = vpop.xlane.xlu0 %2006
        %v2008 = vsel %vm790, %v1998, 0.0
        %2009 = vadd.xlane.f32.xlu0 %v2008
        %v2010 = vpop.xlane.xlu0 %2009
        %v2011 = vsel %vm790, %v1999, 0.0
        %2012 = vadd.xlane.f32.xlu0 %v2011
        %v2013 = vpop.xlane.xlu0 %2012
        %v2014 = vsel %vm790, %v2000, 0.0
        %2015 = vadd.xlane.f32.xlu0 %v2014
        %v2016 = vpop.xlane.xlu0 %2015
        %v2017 = vsel %vm790, %v2001, 0.0
        %2018 = vadd.xlane.f32.xlu0 %v2017
        %v2019 = vpop.xlane.xlu0 %2018
        %v2020 = vsel %vm790, %v2002, 0.0
        %2021 = vadd.xlane.f32.xlu0 %v2020
        %v2022 = vpop.xlane.xlu0 %2021
        %v2023 = vsel %vm790, %v2003, 0.0
        %2024 = vadd.xlane.f32.xlu0 %v2023
        %v2025 = vpop.xlane.xlu0 %2024
        %v2026 = vsel %vm790, %v2004, 0.0
        %2027 = vadd.xlane.f32.xlu0 %v2026
        %v2028 = vpop.xlane.xlu0 %2027
        %v2037 = vlaneseq
        %v2038 = vshrl.u32 %v2037, 7
        %v2039 = vsub.s32 %v1179, %v2038
        %v2040 = vrot.slane %v2007, %v2039
        %v2041 = vlaneseq
        %v2042 = vshrl.u32 %v2041, 7
        %v2043 = vsub.s32 %v1179, %v2042
        %v2044 = vrot.slane %v2010, %v2043
        %v2045 = vlaneseq
        %v2046 = vshrl.u32 %v2045, 7
        %v2047 = vsub.s32 %v1179, %v2046
        %v2048 = vrot.slane %v2013, %v2047
        %v2049 = vlaneseq
        %v2050 = vshrl.u32 %v2049, 7
        %v2051 = vsub.s32 %v1179, %v2050
        %v2052 = vrot.slane %v2016, %v2051
        %v2053 = vlaneseq
        %v2054 = vshrl.u32 %v2053, 7
        %v2055 = vsub.s32 %v1179, %v2054
        %v2056 = vrot.slane %v2019, %v2055
        %v2057 = vlaneseq
        %v2058 = vshrl.u32 %v2057, 7
        %v2059 = vsub.s32 %v1179, %v2058
        %v2060 = vrot.slane %v2022, %v2059
        %v2061 = vlaneseq
        %v2062 = vshrl.u32 %v2061, 7
        %v2063 = vsub.s32 %v1179, %v2062
        %v2064 = vrot.slane %v2025, %v2063
        %v2065 = vlaneseq
        %v2066 = vshrl.u32 %v2065, 7
        %v2067 = vsub.s32 %v1179, %v2066
        %v2068 = vrot.slane %v2028, %v2067
        %v2069 = vsel %vm939, %v2044, %v2040
        %v2070 = vsel %vm941, %v2048, %v2069
        %v2071 = vsel %vm943, %v2052, %v2070
        %v2072 = vsel %vm945, %v2056, %v2071
        %v2073 = vsel %vm947, %v2060, %v2072
        %v2074 = vsel %vm949, %v2064, %v2073
        %v2075 = vsel %vm951, %v2068, %v2074
        %v2077 = vsel %vm1220, %v2075, -inf
        %2078 = vmax.xlane.f32.xlu0 %v2077
        %v2079 = vpop.xlane.xlu0 %2078
        %v2081 = vlaneseq
        %v2082 = vshrl.u32 %v2081, 7
        %v2083 = vsub.s32 0, %v2082
        %v2084 = vrot.slane %v2079, %v2083
        %v2085 = vlaneseq
        %v2086 = vshrl.u32 %v2085, 7
        %v2087 = vsub.s32 1, %v2086
        %v2088 = vrot.slane %v2079, %v2087
        %v2089 = vlaneseq
        %v2090 = vshrl.u32 %v2089, 7
        %v2091 = vsub.s32 2, %v2090
        %v2092 = vrot.slane %v2079, %v2091
        %v2093 = vlaneseq
        %v2094 = vshrl.u32 %v2093, 7
        %v2095 = vsub.s32 3, %v2094
        %v2096 = vrot.slane %v2079, %v2095
        %v2097 = vlaneseq
        %v2098 = vshrl.u32 %v2097, 7
        %v2099 = vsub.s32 4, %v2098
        %v2100 = vrot.slane %v2079, %v2099
        %v2101 = vlaneseq
        %v2102 = vshrl.u32 %v2101, 7
        %v2103 = vsub.s32 5, %v2102
        %v2104 = vrot.slane %v2079, %v2103
        %v2105 = vlaneseq
        %v2106 = vshrl.u32 %v2105, 7
        %v2107 = vsub.s32 6, %v2106
        %v2108 = vrot.slane %v2079, %v2107
        %v2109 = vlaneseq
        %v2110 = vshrl.u32 %v2109, 7
        %v2111 = vsub.s32 7, %v2110
        %v2112 = vrot.slane %v2079, %v2111
        %v2121 = vsub.f32 %v2007, %v2084
        %v2122 = vsub.f32 %v2010, %v2088
        %v2123 = vsub.f32 %v2013, %v2092
        %v2124 = vsub.f32 %v2016, %v2096
        %v2125 = vsub.f32 %v2019, %v2100
        %v2126 = vsub.f32 %v2022, %v2104
        %v2127 = vsub.f32 %v2025, %v2108
        %v2128 = vsub.f32 %v2028, %v2112
        %v2129 = vmul.f32 %v2121, 1.442695
        %v2130 = vpow.pop %v2129
        %v2131 = vmul.f32 %v2122, 1.442695
        %v2132 = vpow.pop %v2131
        %v2133 = vmul.f32 %v2123, 1.442695
        %v2134 = vpow.pop %v2133
        %v2135 = vmul.f32 %v2124, 1.442695
        %v2136 = vpow.pop %v2135
        %v2137 = vmul.f32 %v2125, 1.442695
        %v2138 = vpow.pop %v2137
        %v2139 = vmul.f32 %v2126, 1.442695
        %v2140 = vpow.pop %v2139
        %v2141 = vmul.f32 %v2127, 1.442695
        %v2142 = vpow.pop %v2141
        %v2143 = vmul.f32 %v2128, 1.442695
        %v2144 = vpow.pop %v2143
        %v2146 = vlaneseq
        %v2147 = vshrl.u32 %v2146, 7
        %v2148 = vsub.s32 0, %v2147
        %v2149 = vrot.slane %v605, %v2148
        %2151 = vbcast.lane.b32.xlu0 %v2149, 256
        %v2152 = vpop.permute.xlu0 %2151
        %v2153 = vlaneseq
        %v2154 = vshrl.u32 %v2153, 7
        %v2155 = vsub.s32 1, %v2154
        %v2156 = vrot.slane %v605, %v2155
        %2158 = vbcast.lane.b32.xlu0 %v2156, 256
        %v2159 = vpop.permute.xlu0 %2158
        %v2160 = vlaneseq
        %v2161 = vshrl.u32 %v2160, 7
        %v2162 = vsub.s32 2, %v2161
        %v2163 = vrot.slane %v605, %v2162
        %2165 = vbcast.lane.b32.xlu0 %v2163, 256
        %v2166 = vpop.permute.xlu0 %2165
        %v2167 = vlaneseq
        %v2168 = vshrl.u32 %v2167, 7
        %v2169 = vsub.s32 3, %v2168
        %v2170 = vrot.slane %v605, %v2169
        %2172 = vbcast.lane.b32.xlu0 %v2170, 256
        %v2173 = vpop.permute.xlu0 %2172
        %v2174 = vlaneseq
        %v2175 = vshrl.u32 %v2174, 7
        %v2176 = vsub.s32 4, %v2175
        %v2177 = vrot.slane %v605, %v2176
        %2179 = vbcast.lane.b32.xlu0 %v2177, 256
        %v2180 = vpop.permute.xlu0 %2179
        %v2181 = vlaneseq
        %v2182 = vshrl.u32 %v2181, 7
        %v2183 = vsub.s32 5, %v2182
        %v2184 = vrot.slane %v605, %v2183
        %2186 = vbcast.lane.b32.xlu0 %v2184, 256
        %v2187 = vpop.permute.xlu0 %2186
        %v2188 = vlaneseq
        %v2189 = vshrl.u32 %v2188, 7
        %v2190 = vsub.s32 6, %v2189
        %v2191 = vrot.slane %v605, %v2190
        %2193 = vbcast.lane.b32.xlu0 %v2191, 256
        %v2194 = vpop.permute.xlu0 %2193
        %v2195 = vlaneseq
        %v2196 = vshrl.u32 %v2195, 7
        %v2197 = vsub.s32 7, %v2196
        %v2198 = vrot.slane %v605, %v2197
        %2200 = vbcast.lane.b32.xlu0 %v2198, 256
        %v2201 = vpop.permute.xlu0 %2200
        %v2210 = vmul.f32 %v2130, %v2152
        %v2211 = vmul.f32 %v2132, %v2159
        %v2212 = vmul.f32 %v2134, %v2166
        %v2213 = vmul.f32 %v2136, %v2173
        %v2214 = vmul.f32 %v2138, %v2180
        %v2215 = vmul.f32 %v2140, %v2187
        %v2216 = vmul.f32 %v2142, %v2194
        %v2217 = vmul.f32 %v2144, %v2201
        %2226 = vset.pattern.permute.xlu0 0
        %2227 = vperm.xlu0 %2226, %v2210
        %v2228 = vpop.permute.xlu0 %2227
        %2229 = vset.pattern.permute.xlu0 0
        %2230 = vperm.xlu0 %2229, %v2211
        %v2231 = vpop.permute.xlu0 %2230
        %2232 = vset.pattern.permute.xlu0 0
        %2233 = vperm.xlu0 %2232, %v2212
        %v2234 = vpop.permute.xlu0 %2233
        %2235 = vset.pattern.permute.xlu0 0
        %2236 = vperm.xlu0 %2235, %v2213
        %v2237 = vpop.permute.xlu0 %2236
        %2238 = vset.pattern.permute.xlu0 0
        %2239 = vperm.xlu0 %2238, %v2214
        %v2240 = vpop.permute.xlu0 %2239
        %2241 = vset.pattern.permute.xlu0 0
        %2242 = vperm.xlu0 %2241, %v2215
        %v2243 = vpop.permute.xlu0 %2242
        %2244 = vset.pattern.permute.xlu0 0
        %2245 = vperm.xlu0 %2244, %v2216
        %v2246 = vpop.permute.xlu0 %2245
        %2247 = vset.pattern.permute.xlu0 0
        %2248 = vperm.xlu0 %2247, %v2217
        %v2249 = vpop.permute.xlu0 %2248
        %v2250 = vlaneseq
        %v2251 = vshrl.u32 %v2250, 7
        %v2252 = vsub.s32 %v1179, %v2251
        %v2253 = vrot.slane %v2228, %v2252
        %v2254 = vlaneseq
        %v2255 = vshrl.u32 %v2254, 7
        %v2256 = vsub.s32 %v1179, %v2255
        %v2257 = vrot.slane %v2231, %v2256
        %v2258 = vlaneseq
        %v2259 = vshrl.u32 %v2258, 7
        %v2260 = vsub.s32 %v1179, %v2259
        %v2261 = vrot.slane %v2234, %v2260
        %v2262 = vlaneseq
        %v2263 = vshrl.u32 %v2262, 7
        %v2264 = vsub.s32 %v1179, %v2263
        %v2265 = vrot.slane %v2237, %v2264
        %v2266 = vlaneseq
        %v2267 = vshrl.u32 %v2266, 7
        %v2268 = vsub.s32 %v1179, %v2267
        %v2269 = vrot.slane %v2240, %v2268
        %v2270 = vlaneseq
        %v2271 = vshrl.u32 %v2270, 7
        %v2272 = vsub.s32 %v1179, %v2271
        %v2273 = vrot.slane %v2243, %v2272
        %v2274 = vlaneseq
        %v2275 = vshrl.u32 %v2274, 7
        %v2276 = vsub.s32 %v1179, %v2275
        %v2277 = vrot.slane %v2246, %v2276
        %v2278 = vlaneseq
        %v2279 = vshrl.u32 %v2278, 7
        %v2280 = vsub.s32 %v1179, %v2279
        %v2281 = vrot.slane %v2249, %v2280
        %v2282 = vsel %vm939, %v2257, %v2253
        %v2283 = vsel %vm941, %v2261, %v2282
        %v2284 = vsel %vm943, %v2265, %v2283
        %v2285 = vsel %vm945, %v2269, %v2284
        %v2286 = vsel %vm947, %v2273, %v2285
        %v2287 = vsel %vm949, %v2277, %v2286
        %v2288 = vsel %vm951, %v2281, %v2287
        %v2290 = vsel %vm1220, %v2288, 0.0
        %2291 = vadd.xlane.f32.xlu0 %v2290
        %v2292 = vpop.xlane.xlu0 %2291
        %v2293 = vrcp.pop %v2292
        %v2295 = vlaneseq
        %v2296 = vshrl.u32 %v2295, 7
        %v2297 = vsub.s32 0, %v2296
        %v2298 = vrot.slane %v2293, %v2297
        %v2299 = vlaneseq
        %v2300 = vshrl.u32 %v2299, 7
        %v2301 = vsub.s32 1, %v2300
        %v2302 = vrot.slane %v2293, %v2301
        %v2303 = vlaneseq
        %v2304 = vshrl.u32 %v2303, 7
        %v2305 = vsub.s32 2, %v2304
        %v2306 = vrot.slane %v2293, %v2305
        %v2307 = vlaneseq
        %v2308 = vshrl.u32 %v2307, 7
        %v2309 = vsub.s32 3, %v2308
        %v2310 = vrot.slane %v2293, %v2309
        %v2311 = vlaneseq
        %v2312 = vshrl.u32 %v2311, 7
        %v2313 = vsub.s32 4, %v2312
        %v2314 = vrot.slane %v2293, %v2313
        %v2315 = vlaneseq
        %v2316 = vshrl.u32 %v2315, 7
        %v2317 = vsub.s32 5, %v2316
        %v2318 = vrot.slane %v2293, %v2317
        %v2319 = vlaneseq
        %v2320 = vshrl.u32 %v2319, 7
        %v2321 = vsub.s32 6, %v2320
        %v2322 = vrot.slane %v2293, %v2321
        %v2323 = vlaneseq
        %v2324 = vshrl.u32 %v2323, 7
        %v2325 = vsub.s32 7, %v2324
        %v2326 = vrot.slane %v2293, %v2325
        %v2335 = vmul.f32 %v2210, %v2298
        %v2336 = vmul.f32 %v2211, %v2302
        %v2337 = vmul.f32 %v2212, %v2306
        %v2338 = vmul.f32 %v2213, %v2310
        %v2339 = vmul.f32 %v2214, %v2314
        %v2340 = vmul.f32 %v2215, %v2318
        %v2341 = vmul.f32 %v2216, %v2322
        %v2342 = vmul.f32 %v2217, %v2326
        %2344 = vset.pattern.permute.xlu0 0
        %2345 = vperm.xlu0 %2344, %v2335
        %v2346 = vpop.permute.xlu0 %2345
        %2349 = vset.pattern.permute.xlu0 0
        %2350 = vperm.xlu0 %2349, %v2336
        %v2351 = vpop.permute.xlu0 %2350
        %2354 = vset.pattern.permute.xlu0 0
        %2355 = vperm.xlu0 %2354, %v2337
        %v2356 = vpop.permute.xlu0 %2355
        %2359 = vset.pattern.permute.xlu0 0
        %2360 = vperm.xlu0 %2359, %v2338
        %v2361 = vpop.permute.xlu0 %2360
        %2364 = vset.pattern.permute.xlu0 0
        %2365 = vperm.xlu0 %2364, %v2339
        %v2366 = vpop.permute.xlu0 %2365
        %2369 = vset.pattern.permute.xlu0 0
        %2370 = vperm.xlu0 %2369, %v2340
        %v2371 = vpop.permute.xlu0 %2370
        %2374 = vset.pattern.permute.xlu0 0
        %2375 = vperm.xlu0 %2374, %v2341
        %v2376 = vpop.permute.xlu0 %2375
        %2379 = vset.pattern.permute.xlu0 0
        %2380 = vperm.xlu0 %2379, %v2342
        %v2381 = vpop.permute.xlu0 %2380
        %v2383 = vmul.f32 %v2346, %v589
        %v2384 = vmul.f32 %v2351, %v590
        %v2385 = vmul.f32 %v2356, %v591
        %v2386 = vmul.f32 %v2361, %v592
        %v2387 = vmul.f32 %v2366, %v593
        %v2388 = vmul.f32 %v2371, %v594
        %v2389 = vmul.f32 %v2376, %v595
        %v2390 = vmul.f32 %v2381, %v596
        %v2391 = vsel %vm731, %v2383, 0.0
        %v2392 = vrot.slane %v2391, 4
        %v2393 = vadd.f32 %v2391, %v2392
        %v2394 = vrot.slane %v2393, 2
        %v2395 = vadd.f32 %v2393, %v2394
        %v2396 = vrot.slane %v2395, 1
        %v2397 = vadd.f32 %v2395, %v2396
        %v2398 = vsel %vm731, %v2384, 0.0
        %v2399 = vrot.slane %v2398, 4
        %v2400 = vadd.f32 %v2398, %v2399
        %v2401 = vrot.slane %v2400, 2
        %v2402 = vadd.f32 %v2400, %v2401
        %v2403 = vrot.slane %v2402, 1
        %v2404 = vadd.f32 %v2402, %v2403
        %v2405 = vsel %vm731, %v2385, 0.0
        %v2406 = vrot.slane %v2405, 4
        %v2407 = vadd.f32 %v2405, %v2406
        %v2408 = vrot.slane %v2407, 2
        %v2409 = vadd.f32 %v2407, %v2408
        %v2410 = vrot.slane %v2409, 1
        %v2411 = vadd.f32 %v2409, %v2410
        %v2412 = vsel %vm731, %v2386, 0.0
        %v2413 = vrot.slane %v2412, 4
        %v2414 = vadd.f32 %v2412, %v2413
        %v2415 = vrot.slane %v2414, 2
        %v2416 = vadd.f32 %v2414, %v2415
        %v2417 = vrot.slane %v2416, 1
        %v2418 = vadd.f32 %v2416, %v2417
        %v2419 = vsel %vm731, %v2387, 0.0
        %v2420 = vrot.slane %v2419, 4
        %v2421 = vadd.f32 %v2419, %v2420
        %v2422 = vrot.slane %v2421, 2
        %v2423 = vadd.f32 %v2421, %v2422
        %v2424 = vrot.slane %v2423, 1
        %v2425 = vadd.f32 %v2423, %v2424
        %v2426 = vsel %vm731, %v2388, 0.0
        %v2427 = vrot.slane %v2426, 4
        %v2428 = vadd.f32 %v2426, %v2427
        %v2429 = vrot.slane %v2428, 2
        %v2430 = vadd.f32 %v2428, %v2429
        %v2431 = vrot.slane %v2430, 1
        %v2432 = vadd.f32 %v2430, %v2431
        %v2433 = vsel %vm731, %v2389, 0.0
        %v2434 = vrot.slane %v2433, 4
        %v2435 = vadd.f32 %v2433, %v2434
        %v2436 = vrot.slane %v2435, 2
        %v2437 = vadd.f32 %v2435, %v2436
        %v2438 = vrot.slane %v2437, 1
        %v2439 = vadd.f32 %v2437, %v2438
        %v2440 = vsel %vm731, %v2390, 0.0
        %v2441 = vrot.slane %v2440, 4
        %v2442 = vadd.f32 %v2440, %v2441
        %v2443 = vrot.slane %v2442, 2
        %v2444 = vadd.f32 %v2442, %v2443
        %v2445 = vrot.slane %v2444, 1
        %v2446 = vadd.f32 %v2444, %v2445
        %v2447 = vld [vmem:[%s12] sm:$0xff]
        %v2448 = vld [vmem:[%s12 + $0x8] sm:$0xff]
        %v2449 = vld [vmem:[%s13] sm:$0xff]
        %v2450 = vld [vmem:[%s13 + $0x8] sm:$0xff]
        %v2451 = vld [vmem:[%s13 + $0x10] sm:$0xff]
        %v2452 = vld [vmem:[%s13 + $0x18] sm:$0xff]
        %v2461 = vsel %vm939, %v2404, %v2397
        %v2462 = vsel %vm941, %v2411, %v2461
        %v2463 = vsel %vm943, %v2418, %v2462
        %v2464 = vsel %vm945, %v2425, %v2463
        %v2465 = vsel %vm947, %v2432, %v2464
        %v2466 = vsel %vm949, %v2439, %v2465
        %v2467 = vsel %vm951, %v2446, %v2466
        %v2468 = vsel %vm731, %v2467, 0
        %2470 = vmatprep.subr.mxu0 0.0
        %2471 = vmatpush1.msra.mxu0 %v2449
        %2472 = vmatprep.subr.mxu0 0.0
        %2473 = vmatpush1.msra.mxu0 %v2450
        %2474 = vmatprep.subr.mxu0 0.0
        %2475 = vmatpush1.msra.mxu0 %v2451
        %2476 = vmatprep.subr.mxu0 0.0
        %2477 = vmatpush1.msra.mxu0 %v2452
        %2478 = vmatprep.subr.mxu0 0.0
        %2479 = vmatpush1.msra.mxu0 0.0
        %2480 = vmatprep.subr.mxu0 0.0
        %2481 = vmatpush1.msra.mxu0 0.0
        %2482 = vmatprep.subr.mxu0 0.0
        %2483 = vmatpush1.msra.mxu0 0.0
        %2484 = vmatprep.subr.mxu0 0.0
        %2485 = vmatpush1.msra.mxu0 0.0
        %2486 = vmatprep.subr.mxu0 0.0
        %2487 = vmatpush1.msra.mxu0 0.0
        %2488 = vmatprep.subr.mxu0 0.0
        %2489 = vmatpush1.msra.mxu0 0.0
        %2490 = vmatprep.subr.mxu0 0.0
        %2491 = vmatpush1.msra.mxu0 0.0
        %2492 = vmatprep.subr.mxu0 0.0
        %2493 = vmatpush1.msra.mxu0 0.0
        %2494 = vmatprep.subr.mxu0 0.0
        %2495 = vmatpush1.msra.mxu0 0.0
        %2496 = vmatprep.subr.mxu0 0.0
        %2497 = vmatpush1.msra.mxu0 0.0
        %2498 = vmatprep.subr.mxu0 0.0
        %2499 = vmatpush1.msra.mxu0 0.0
        %2500 = vmatprep.subr.mxu0 0.0
        %2501 = vmatpush1.msra.mxu0 0.0
        %2502 = vmatprep.subr.mxu0 0.0
        %2503 = vmatpush1.msra.mxu0 0.0
        %2504 = vmatprep.subr.mxu0 0.0
        %2505 = vmatpush1.msra.mxu0 0.0
        %2506 = vmatprep.subr.mxu0 0.0
        %2507 = vmatpush1.msra.mxu0 0.0
        %2508 = vmatprep.subr.mxu0 0.0
        %2509 = vmatpush1.msra.mxu0 0.0
        %2510 = vmatprep.subr.mxu0 0.0
        %2511 = vmatpush1.msra.mxu0 0.0
        %2512 = vmatprep.subr.mxu0 0.0
        %2513 = vmatpush1.msra.mxu0 0.0
        %2514 = vmatprep.subr.mxu0 0.0
        %2515 = vmatpush1.msra.mxu0 0.0
        %2516 = vmatprep.subr.mxu0 0.0
        %2517 = vmatpush1.msra.mxu0 0.0
        %2518 = vmatprep.subr.mxu0 0.0
        %2519 = vmatpush1.msra.mxu0 0.0
        %2520 = vmatprep.subr.mxu0 0.0
        %2521 = vmatpush1.msra.mxu0 0.0
        %2522 = vmatprep.subr.mxu0 0.0
        %2523 = vmatpush1.msra.mxu0 0.0
        %2524 = vmatprep.subr.mxu0 0.0
        %2525 = vmatpush1.msra.mxu0 0.0
        %2526 = vmatprep.subr.mxu0 0.0
        %2527 = vmatpush1.msra.mxu0 0.0
        %2528 = vmatprep.subr.mxu0 0.0
        %2529 = vmatpush1.msra.mxu0 0.0
        %2530 = vmatprep.subr.mxu0 0.0
        %2531 = vmatpush1.msra.mxu0 0.0
        %2532 = vmatprep.subr.mxu0 0.0
        %2533 = vmatpush1.msra.mxu0 0.0
        %2534 = vmatprep.mubr.f32.mxu0 0.0
        %2535 = vmatmul.mubr.f32.gmra.mrb[0].mxu0 %v2468
        %v2536 = vpop.f32.mrb[0].mxu0
        %v2537 = vadd.f32 0.0, %v2536
        %v2538 = vpop.f32.mrb[0].mxu0
        %2539 = vdwg.mxu0
        %v2548 = vsel %vm939, %v1548, %v1541
        %v2549 = vsel %vm941, %v1555, %v2548
        %v2550 = vsel %vm943, %v1562, %v2549
        %v2551 = vsel %vm945, %v1569, %v2550
        %v2552 = vsel %vm947, %v1576, %v2551
        %v2553 = vsel %vm949, %v1583, %v2552
        %v2554 = vsel %vm951, %v1590, %v2553
        %v2555 = vsel %vm790, %v2554, 0
        %2557 = vmatprep.subr.mxu0 0.0
        %2558 = vmatpush1.msra.mxu0 %v2447
        %2559 = vmatprep.subr.mxu0 0.0
        %2560 = vmatpush1.msra.mxu0 %v2448
        %2561 = vmatprep.subr.mxu0 0.0
        %2562 = vmatpush1.msra.mxu0 0.0
        %2563 = vmatprep.subr.mxu0 0.0
        %2564 = vmatpush1.msra.mxu0 0.0
        %2565 = vmatprep.subr.mxu0 0.0
        %2566 = vmatpush1.msra.mxu0 0.0
        %2567 = vmatprep.subr.mxu0 0.0
        %2568 = vmatpush1.msra.mxu0 0.0
        %2569 = vmatprep.subr.mxu0 0.0
        %2570 = vmatpush1.msra.mxu0 0.0
        %2571 = vmatprep.subr.mxu0 0.0
        %2572 = vmatpush1.msra.mxu0 0.0
        %2573 = vmatprep.subr.mxu0 0.0
        %2574 = vmatpush1.msra.mxu0 0.0
        %2575 = vmatprep.subr.mxu0 0.0
        %2576 = vmatpush1.msra.mxu0 0.0
        %2577 = vmatprep.subr.mxu0 0.0
        %2578 = vmatpush1.msra.mxu0 0.0
        %2579 = vmatprep.subr.mxu0 0.0
        %2580 = vmatpush1.msra.mxu0 0.0
        %2581 = vmatprep.subr.mxu0 0.0
        %2582 = vmatpush1.msra.mxu0 0.0
        %2583 = vmatprep.subr.mxu0 0.0
        %2584 = vmatpush1.msra.mxu0 0.0
        %2585 = vmatprep.subr.mxu0 0.0
        %2586 = vmatpush1.msra.mxu0 0.0
        %2587 = vmatprep.subr.mxu0 0.0
        %2588 = vmatpush1.msra.mxu0 0.0
        %2589 = vmatprep.subr.mxu0 0.0
        %2590 = vmatpush1.msra.mxu0 0.0
        %2591 = vmatprep.subr.mxu0 0.0
        %2592 = vmatpush1.msra.mxu0 0.0
        %2593 = vmatprep.subr.mxu0 0.0
        %2594 = vmatpush1.msra.mxu0 0.0
        %2595 = vmatprep.subr.mxu0 0.0
        %2596 = vmatpush1.msra.mxu0 0.0
        %2597 = vmatprep.subr.mxu0 0.0
        %2598 = vmatpush1.msra.mxu0 0.0
        %2599 = vmatprep.subr.mxu0 0.0
        %2600 = vmatpush1.msra.mxu0 0.0
        %2601 = vmatprep.subr.mxu0 0.0
        %2602 = vmatpush1.msra.mxu0 0.0
        %2603 = vmatprep.subr.mxu0 0.0
        %2604 = vmatpush1.msra.mxu0 0.0
        %2605 = vmatprep.subr.mxu0 0.0
        %2606 = vmatpush1.msra.mxu0 0.0
        %2607 = vmatprep.subr.mxu0 0.0
        %2608 = vmatpush1.msra.mxu0 0.0
        %2609 = vmatprep.subr.mxu0 0.0
        %2610 = vmatpush1.msra.mxu0 0.0
        %2611 = vmatprep.subr.mxu0 0.0
        %2612 = vmatpush1.msra.mxu0 0.0
        %2613 = vmatprep.subr.mxu0 0.0
        %2614 = vmatpush1.msra.mxu0 0.0
        %2615 = vmatprep.subr.mxu0 0.0
        %2616 = vmatpush1.msra.mxu0 0.0
        %2617 = vmatprep.subr.mxu0 0.0
        %2618 = vmatpush1.msra.mxu0 0.0
        %2619 = vmatprep.subr.mxu0 0.0
        %2620 = vmatpush1.msra.mxu0 0.0
        %2621 = vmatprep.mubr.f32.mxu0 0.0
        %2622 = vmatmul.mubr.f32.gmra.mrb[0].mxu0 %v2555
        %v2623 = vpop.f32.mrb[0].mxu0
        %v2624 = vadd.f32 %v2537, %v2623
        %v2625 = vpop.f32.mrb[0].mxu0
        %2626 = vdwg.mxu0
        %v2627 = vld [vmem:[%s14] sm:$0x1]
        %v2629 = vlaneseq
        %v2630 = vshrl.u32 %v2629, 7
        %v2631 = vsub.s32 0, %v2630
        %v2632 = vrot.slane %v2627, %v2631
        %v2634 = vadd.f32 %v2624, %v2632
        %2635 = vst [vmem:[%s578] sm:$0xff] %v2634
        %s2636 = sand.u32 %s378, 1
        %s2637 = scalar_lea.sflag [#allocation4], %s2636
        %s2638 = sand.u32 %s378, 1
        %s2639 = smul.addr %s2638, 8
        %s2640 = scalar_lea.vmem [#allocation7], %s2639
        // Predicated region
        $region89: #{tpu_custom_call.1} parent=79 // pred_check
          %p2641 = pneg %p388
        $region90: #{tpu_custom_call.1} parent=79 // pred_check_branch
          %2643 = sbr.rel (%p2641) target = $region92
        $region91: #{tpu_custom_call.1} parent=79 // pred_region
          %s2645 = ssub.s32 128, 128
          %2646 = vsyncadd %s2637, %s2645
          %s2647 = smul.addr %s35, 128
          %s2648 = scalar_lea.hbm %s15, %s2647
          %s2650 = sshll.u32 %s2640, 4
          %s2651 = int_to_ptr.vmem [resolvable:$true] %s2650
          %2653 = dma.vmem_to_hbm [thread:$0]  %s2651, 128, %s2648, %s2637
        $region92: #{tpu_custom_call.1} parent=79 // pred_fallthru
          _
      $region80: #{tpu_custom_call.1} parent=5 // pred_fallthru
        _
      %p2654 = scmp.le.s32.totalorder 2, %s30
      // Predicated region
      $region93: #{tpu_custom_call.1} parent=5 // pred_check
        %p2655 = pneg %p2654
      $region94: #{tpu_custom_call.1} parent=5 // pred_check_branch
        %2657 = sbr.rel (%p2655) target = $region96
      $region95: #{tpu_custom_call.1} parent=5 // pred_region
        %s2658 = ssub.s32 %s30, 2
        // Predicated region
        $region97: #{tpu_custom_call.1} parent=95 // pred_check
          %p2659 = pneg %p394
        $region98: #{tpu_custom_call.1} parent=95 // pred_check_branch
          %2661 = sbr.rel (%p2659) target = $region100
        $region99: #{tpu_custom_call.1} parent=95 // pred_region
          %s2662 = sand.u32 %s379, 1
          %s2663 = scalar_lea.sflag [#allocation4], %s2662
          %s2664 = sand.u32 %s379, 1
          %s2665 = smul.addr %s2664, 8
          %s2666 = scalar_lea.vmem [#allocation7], %s2665
          %2667 = dma.done %s2663, 128
        $region100: #{tpu_custom_call.1} parent=95 // pred_fallthru
          _
      $region96: #{tpu_custom_call.1} parent=5 // pred_fallthru
        _
    $region6: #{tpu_custom_call.1} parent=1 // loop_footer
      %s34 = sadd.s32 1, %s30
    $region7: #{tpu_custom_call.1} parent=1 // loop_footer_branch
      %29 = sbr.rel target = $region3
    $region8: #{tpu_custom_call.1} parent=1 // loop_exit
      _
    %2668 = vsyncpa [#allocation3], 1
    %s2669 = scalar_lea.sflag [#allocation3], 1
    %2670 = vsyncpa %s2669, 1
    %2671 = vsyncpa [#allocation6], 1
    %s2672 = scalar_lea.sflag [#allocation6], 1
    %2673 = vsyncpa %s2672, 1
    %2674 = vsyncpa [#allocation4], 1
    %s2675 = scalar_lea.sflag [#allocation4], 1
    %2676 = vsyncpa %s2675, 1

</llo_original>
